<compile_context>
chip_gen: v6e
topology: v6e:2x2x1
jax: 0.10.0
libtpu: 0.0.40
codegen_flags: <defaults>
</compile_context>

<pallas_src>
import math
from functools import partial

import jax
import jax.numpy as jnp
from jax import lax
from jax.experimental import pallas as pl
from jax.experimental.pallas import tpu as pltpu


def _layernorm(x, w, b, eps=1e-5):
    mean = jnp.mean(x, axis=-1, keepdims=True)
    var = jnp.mean((x - mean) ** 2, axis=-1, keepdims=True)  # biased var, like torch LN
    return (x - mean) * lax.rsqrt(var + eps) * w + b


def selfattention_kernel(x_ref, vec_ref, wqkv_ref, wo_ref, w1_ref, w2_ref, o_ref,
                         *, num_heads):
    # x_ref block: (bt, C, N) channels-first, straight from the NCHW tensor.
    bt, C, N = x_ref.shape
    hd = C // num_heads
    scale = 1.0 / math.sqrt(hd)

    # Packed per-channel vectors (single DMA):
    # rows = [ln_w, ln_b, bq, bk, bv, bo, ln2_w, ln2_b, b1, b2]
    vecs = vec_ref[...].astype(jnp.float32)                  # (10, C)
    ln_w, ln_b = vecs[0:1, :], vecs[1:2, :]
    bq, bk, bv = vecs[2:3, :], vecs[3:4, :], vecs[4:5, :]
    bo = vecs[5:6, :]
    ln2_w, ln2_b = vecs[6:7, :], vecs[7:8, :]
    b1, b2 = vecs[8:9, :], vecs[9:10, :]

    # Batched (C, N) -> (N, C) transpose on the XLU, then flatten to (bt*N, C).
    x_tok = jnp.transpose(x_ref[...].astype(jnp.float32), (0, 2, 1))   # (bt, N, C)
    x2 = x_tok.reshape(bt * N, C)

    # Pre-attention LayerNorm + fused QKV projection (bf16 operands, f32 accumulate).
    x_ln = _layernorm(x2, ln_w, ln_b)
    qkv = jnp.dot(x_ln.astype(jnp.bfloat16), wqkv_ref[...],
                  preferred_element_type=jnp.float32)        # (bt*N, 3C)
    q = (qkv[:, 0:C] + bq).reshape(bt, N, C)
    k = (qkv[:, C:2 * C] + bk).reshape(bt, N, C)
    v = (qkv[:, 2 * C:3 * C] + bv).reshape(bt, N, C)

    # Multi-head attention: small static head loop of bt-batched einsums; the per-head
    # outputs are lane-concatenated into one (bt*N, C) slab so the output projection is
    # a single (bt*N, C) @ (C, C) MXU matmul (no per-head K=8 matmuls / VPU accumulates).
    head_outs = []
    for h in range(num_heads):
        c0 = h * hd
        qh = q[:, :, c0:c0 + hd].astype(jnp.bfloat16)        # (bt, N, hd)
        kh = k[:, :, c0:c0 + hd].astype(jnp.bfloat16)
        vh = v[:, :, c0:c0 + hd].astype(jnp.bfloat16)
        s = jnp.einsum('bnd,bmd->bnm', qh, kh,
                       preferred_element_type=jnp.float32) * scale     # (bt, N, N)
        s = s - jnp.max(s, axis=-1, keepdims=True)
        p = jnp.exp(s)
        denom = jnp.sum(p, axis=-1, keepdims=True)                     # (bt, N, 1)
        oh = jnp.einsum('bnm,bmd->bnd', p.astype(jnp.bfloat16), vh,
                        preferred_element_type=jnp.float32)            # (bt, N, hd)
        # Deferred softmax normalization on the (N, hd) result; exact reciprocal (EUP).
        head_outs.append(oh * pl.reciprocal(denom, approx=False))
    o_heads = jnp.concatenate(head_outs, axis=-1).reshape(bt * N, C)   # (bt*N, C)

    attn = jnp.dot(o_heads.astype(jnp.bfloat16), wo_ref[...],
                   preferred_element_type=jnp.float32) + bo

    # Residual 1.
    h1 = attn + x2

    # Feed-forward: LN -> Linear -> exact GELU (erf) -> Linear, + residual 2.
    h_ln = _layernorm(h1, ln2_w, ln2_b)
    f = jnp.dot(h_ln.astype(jnp.bfloat16), w1_ref[...],
                preferred_element_type=jnp.float32) + b1
    f = 0.5 * f * (1.0 + lax.erf(f * (1.0 / math.sqrt(2.0))))
    f = jnp.dot(f.astype(jnp.bfloat16), w2_ref[...],
                preferred_element_type=jnp.float32) + b2
    h2 = (f + h1).reshape(bt, N, C)

    # One batched (N, C) -> (C, N) transpose and a single coalesced block store.
    o_ref[...] = jnp.transpose(h2, (0, 2, 1)).astype(o_ref.dtype)


def _tensorcores_per_chip():
    """Best-effort TensorCore count per chip (v7x has 2; v5e/v6e have 1)."""
    try:
        info = pltpu.get_tpu_info()
        for attr in ("num_cores", "core_count", "num_tensorcores", "tensorcore_count"):
            n = getattr(info, attr, None)
            if isinstance(n, int) and n > 0:
                return n
    except Exception:
        pass
    try:
        kind = jax.devices()[0].device_kind.lower()
        if "v7" in kind:
            return 2
    except Exception:
        pass
    return 1


def _pick_batch_tile(B, num_cores):
    # Largest divisor of B that still leaves at least one grid step per TensorCore.
    # Single-TC chips (v5e/v6e): bt = B (one fat step, no per-step overhead).
    # v7x: exactly num_cores steps, each as fat as possible.
    for d in range(B, 0, -1):
        if B % d == 0 and B // d >= num_cores:
            return d
    return 1


def selfattention_forward(x_nchw, params, num_heads=4):
    B, C, S, _ = x_nchw.shape
    N = S * S
    assert C % num_heads == 0
    hd = C // num_heads
    bt = _pick_batch_tile(B, _tensorcores_per_chip())

    x = x_nchw.reshape(B, C, N)   # free reshape; (C,N)->(N,C) transpose is done in-kernel

    vecs = jnp.stack([
        params["ln_w"], params["ln_b"],
        params["bq"], params["bk"], params["bv"],
        params["bo"],
        params["ln2_w"], params["ln2_b"],
        params["b1"], params["b2"],
    ]).astype(jnp.float32)                                                   # (10, C)
    w_qkv = jnp.concatenate([params["wq"], params["wk"], params["wv"]],
                            axis=1).astype(jnp.bfloat16)                     # (C, 3C)
    wo = params["wo"].astype(jnp.bfloat16)                                   # (C, C)
    w1 = params["w1"].astype(jnp.bfloat16)
    w2 = params["w2"].astype(jnp.bfloat16)

    in_specs = [
        pl.BlockSpec((bt, C, N), lambda b: (b, 0, 0)),   # x block (channels-first)
        pl.BlockSpec((10, C), lambda b: (0, 0)),         # packed LN/bias vectors
        pl.BlockSpec((C, 3 * C), lambda b: (0, 0)),      # fused QKV weight
        pl.BlockSpec((C, C), lambda b: (0, 0)),          # wo (full, fused output proj)
        pl.BlockSpec((C, C), lambda b: (0, 0)),          # w1
        pl.BlockSpec((C, C), lambda b: (0, 0)),          # w2
    ]
    out_spec = pl.BlockSpec((bt, C, N), lambda b: (b, 0, 0))

    # Advisory cost estimate so XLA can overlap this small, latency-bound custom call.
    flops = (2 * B * N * C * (3 * C)                 # QKV projection
             + 2 * 2 * B * num_heads * N * N * hd    # QK^T and PV
             + 2 * B * N * C * C                     # output projection
             + 2 * 2 * B * N * C * C)                # FFN (two C x C linears)
    transcendentals = B * num_heads * N * N + B * N * C   # softmax exp + GELU erf
    bytes_accessed = (2 * B * C * N * x.dtype.itemsize
                      + vecs.size * 4
                      + (w_qkv.size + wo.size + w1.size + w2.size) * 2)

    out = pl.pallas_call(
        partial(selfattention_kernel, num_heads=num_heads),
        out_shape=jax.ShapeDtypeStruct((B, C, N), x_nchw.dtype),
        grid_spec=pltpu.PrefetchScalarGridSpec(
            num_scalar_prefetch=0,
            grid=(B // bt,),
            in_specs=in_specs,
            out_specs=out_spec,
        ),
        compiler_params=pltpu.CompilerParams(
            dimension_semantics=("parallel",),
            vmem_limit_bytes=32 * 1024 * 1024,
        ),
        cost_estimate=pl.CostEstimate(flops=flops,
                                      transcendentals=transcendentals,
                                      bytes_accessed=bytes_accessed),
    )(x, vecs, w_qkv, wo, w1, w2)

    return out.reshape(B, C, S, S)


def reference_forward(x_nchw, params, num_heads=4):
    # Plain-JAX f32 reference (same math as the PyTorch module) for a sanity check.
    B, C, S, _ = x_nchw.shape
    N = S * S
    hd = C // num_heads
    x = x_nchw.reshape(B, C, N).transpose(0, 2, 1)

    x_ln = _layernorm(x, params["ln_w"], params["ln_b"])
    q = x_ln @ params["wq"] + params["bq"]
    k = x_ln @ params["wk"] + params["bk"]
    v = x_ln @ params["wv"] + params["bv"]
    q = q.reshape(B, N, num_heads, hd).transpose(0, 2, 1, 3)
    k = k.reshape(B, N, num_heads, hd).transpose(0, 2, 1, 3)
    v = v.reshape(B, N, num_heads, hd).transpose(0, 2, 1, 3)
    s = jnp.einsum("bhnd,bhmd->bhnm", q, k) / math.sqrt(hd)
    p = jax.nn.softmax(s, axis=-1)
    attn = jnp.einsum("bhnm,bhmd->bhnd", p, v).transpose(0, 2, 1, 3).reshape(B, N, C)
    attn = attn @ params["wo"] + params["bo"]
    h1 = attn + x
    h_ln = _layernorm(h1, params["ln2_w"], params["ln2_b"])
    f = h_ln @ params["w1"] + params["b1"]
    f = 0.5 * f * (1.0 + lax.erf(f / math.sqrt(2.0)))
    f = f @ params["w2"] + params["b2"]
    out = f + h1
    return out.transpose(0, 2, 1).reshape(B, C, S, S)


def init_params(key, C):
    # Deterministic synthetic init (shapes from nn.LayerNorm / nn.MultiheadAttention /
    # nn.Linear in the module's __init__). Projection weights are stored pre-transposed
    # so that `x @ W` matches torch's `x @ W_t.T`.
    ks = jax.random.split(key, 12)
    mat = lambda k: jax.random.normal(k, (C, C), jnp.float32) * (1.0 / math.sqrt(C))
    vec = lambda k: jax.random.normal(k, (C,), jnp.float32) * 0.02
    return dict(
        ln_w=jnp.ones((C,), jnp.float32), ln_b=jnp.zeros((C,), jnp.float32),
        wq=mat(ks[0]), wk=mat(ks[1]), wv=mat(ks[2]),
        bq=vec(ks[3]), bk=vec(ks[4]), bv=vec(ks[5]),
        wo=mat(ks[6]), bo=vec(ks[7]),
        ln2_w=jnp.ones((C,), jnp.float32), ln2_b=jnp.zeros((C,), jnp.float32),
        w1=mat(ks[8]), b1=vec(ks[9]),
        w2=mat(ks[10]), b2=vec(ks[11]),
    )


if __name__ == "__main__":
    B, C, S = 2, 32, 8          # channel=32 (4 heads of dim 8), size=8 -> 64 tokens
    key = jax.random.PRNGKey(0)
    kx, kp = jax.random.split(key)
    x = jax.random.normal(kx, (B, C, S, S), jnp.float32)
    params = init_params(kp, C)

    out = jax.block_until_ready(selfattention_forward(x, params))
    ref = reference_forward(x, params)

    assert out.shape == (B, C, S, S)
    # Loose tolerance: kernel runs matmuls with bf16 operands (f32 accumulate) per the
    # TPU MXU recommendation; elementwise/LN/softmax statistics stay in f32.
    max_err = float(jnp.max(jnp.abs(out - ref)))
    assert jnp.allclose(out, ref, atol=5e-2, rtol=5e-2), max_err

    print("KERNEL_OK")
</pallas_src>

<mosaic_0001>
module attributes {stable_mosaic.version = 11 : i64} {
  func.func @selfattention_kernel(%arg0: i32, %arg1: memref<2x32x64xf32, #tpu.memory_space<vmem>>, %arg2: memref<10x32xf32, #tpu.memory_space<vmem>>, %arg3: memref<32x96xbf16, #tpu.memory_space<vmem>>, %arg4: memref<32x32xbf16, #tpu.memory_space<vmem>>, %arg5: memref<32x32xbf16, #tpu.memory_space<vmem>>, %arg6: memref<32x32xbf16, #tpu.memory_space<vmem>>, %arg7: memref<2x32x64xf32, #tpu.memory_space<vmem>>) attributes {dimension_semantics = [#tpu.dimension_semantics<parallel>], iteration_bounds = array<i64: 1>, scalar_prefetch = 0 : i64, scratch_operands = 0 : i64, tpu.core_type = #tpu.core_type<tc>, window_params = [{transform_indices = @transform_0, window_bounds = array<i64: 2, 32, 64>}, {pipeline_mode = #tpu.pipeline_mode<synchronous>, transform_indices = @transform_1, window_bounds = array<i64: 10, 32>}, {pipeline_mode = #tpu.pipeline_mode<synchronous>, transform_indices = @transform_2, window_bounds = array<i64: 32, 96>}, {pipeline_mode = #tpu.pipeline_mode<synchronous>, transform_indices = @transform_3, window_bounds = array<i64: 32, 32>}, {pipeline_mode = #tpu.pipeline_mode<synchronous>, transform_indices = @transform_4, window_bounds = array<i64: 32, 32>}, {pipeline_mode = #tpu.pipeline_mode<synchronous>, transform_indices = @transform_5, window_bounds = array<i64: 32, 32>}, {transform_indices = @transform_6, window_bounds = array<i64: 2, 32, 64>}]} {
    %c0 = arith.constant 0 : index
    %c0_0 = arith.constant 0 : index
    %0 = vector.load %arg2[%c0, %c0_0] : memref<10x32xf32, #tpu.memory_space<vmem>>, vector<10x32xf32>
    %1 = vector.extract_strided_slice %0 {offsets = [0, 0], sizes = [1, 32], strides = [1, 1]} : vector<10x32xf32> to vector<1x32xf32>
    %2 = vector.extract_strided_slice %0 {offsets = [1, 0], sizes = [1, 32], strides = [1, 1]} : vector<10x32xf32> to vector<1x32xf32>
    %3 = vector.extract_strided_slice %0 {offsets = [2, 0], sizes = [1, 32], strides = [1, 1]} : vector<10x32xf32> to vector<1x32xf32>
    %4 = vector.extract_strided_slice %0 {offsets = [3, 0], sizes = [1, 32], strides = [1, 1]} : vector<10x32xf32> to vector<1x32xf32>
    %5 = vector.extract_strided_slice %0 {offsets = [4, 0], sizes = [1, 32], strides = [1, 1]} : vector<10x32xf32> to vector<1x32xf32>
    %6 = vector.extract_strided_slice %0 {offsets = [5, 0], sizes = [1, 32], strides = [1, 1]} : vector<10x32xf32> to vector<1x32xf32>
    %7 = vector.extract_strided_slice %0 {offsets = [6, 0], sizes = [1, 32], strides = [1, 1]} : vector<10x32xf32> to vector<1x32xf32>
    %8 = vector.extract_strided_slice %0 {offsets = [7, 0], sizes = [1, 32], strides = [1, 1]} : vector<10x32xf32> to vector<1x32xf32>
    %9 = vector.extract_strided_slice %0 {offsets = [8, 0], sizes = [1, 32], strides = [1, 1]} : vector<10x32xf32> to vector<1x32xf32>
    %10 = vector.extract_strided_slice %0 {offsets = [9, 0], sizes = [1, 32], strides = [1, 1]} : vector<10x32xf32> to vector<1x32xf32>
    %c0_1 = arith.constant 0 : index
    %c0_2 = arith.constant 0 : index
    %c0_3 = arith.constant 0 : index
    %11 = vector.load %arg1[%c0_1, %c0_2, %c0_3] : memref<2x32x64xf32, #tpu.memory_space<vmem>>, vector<2x32x64xf32>
    %12 = tpu.transpose %11, [0, 2, 1] : vector<2x32x64xf32> -> vector<2x64x32xf32>
    %13 = vector.shape_cast %12 : vector<2x64x32xf32> to vector<128x32xf32>
    %cst = arith.constant dense<0.000000e+00> : vector<128xf32>
    %14 = vector.multi_reduction <add>, %13, %cst [1] : vector<128x32xf32> to vector<128xf32>
    %15 = vector.shape_cast %14 : vector<128xf32> to vector<128x1xf32>
    %cst_4 = arith.constant 3.200000e+01 : f32
    %16 = vector.broadcast %cst_4 : f32 to vector<128x1xf32>
    %17 = arith.divf %15, %16 : vector<128x1xf32>
    %18 = vector.broadcast %17 : vector<128x1xf32> to vector<128x32xf32>
    %19 = arith.subf %13, %18 : vector<128x32xf32>
    %20 = arith.mulf %19, %19 : vector<128x32xf32>
    %cst_5 = arith.constant dense<0.000000e+00> : vector<128xf32>
    %21 = vector.multi_reduction <add>, %20, %cst_5 [1] : vector<128x32xf32> to vector<128xf32>
    %22 = vector.shape_cast %21 : vector<128xf32> to vector<128x1xf32>
    %cst_6 = arith.constant 3.200000e+01 : f32
    %23 = vector.broadcast %cst_6 : f32 to vector<128x1xf32>
    %24 = arith.divf %22, %23 : vector<128x1xf32>
    %25 = vector.broadcast %17 : vector<128x1xf32> to vector<128x32xf32>
    %26 = arith.subf %13, %25 : vector<128x32xf32>
    %cst_7 = arith.constant 9.99999974E-6 : f32
    %27 = vector.broadcast %cst_7 : f32 to vector<128x1xf32>
    %28 = arith.addf %24, %27 : vector<128x1xf32>
    %29 = math.rsqrt %28 : vector<128x1xf32>
    %30 = vector.broadcast %29 : vector<128x1xf32> to vector<128x32xf32>
    %31 = arith.mulf %26, %30 : vector<128x32xf32>
    %32 = vector.broadcast %1 : vector<1x32xf32> to vector<128x32xf32>
    %33 = arith.mulf %31, %32 : vector<128x32xf32>
    %34 = vector.broadcast %2 : vector<1x32xf32> to vector<128x32xf32>
    %35 = arith.addf %33, %34 : vector<128x32xf32>
    %36 = arith.truncf %35 : vector<128x32xf32> to vector<128x32xbf16>
    %c0_8 = arith.constant 0 : index
    %c0_9 = arith.constant 0 : index
    %37 = vector.load %arg3[%c0_8, %c0_9] : memref<32x96xbf16, #tpu.memory_space<vmem>>, vector<32x96xbf16>
    %cst_10 = arith.constant dense<0.000000e+00> : vector<128x96xf32>
    %38 = tpu.matmul %36, %37, %cst_10 {dimension_numbers = #tpu.dot_dimension_numbers<[1], [0], [0], [1], [0, 0, 1, 1], [], []>} : vector<128x32xbf16>, vector<32x96xbf16>, vector<128x96xf32> -> vector<128x96xf32>
    %39 = vector.extract_strided_slice %38 {offsets = [0, 0], sizes = [128, 32], strides = [1, 1]} : vector<128x96xf32> to vector<128x32xf32>
    %40 = vector.broadcast %3 : vector<1x32xf32> to vector<128x32xf32>
    %41 = arith.addf %39, %40 : vector<128x32xf32>
    %42 = vector.shape_cast %41 : vector<128x32xf32> to vector<2x64x32xf32>
    %43 = vector.extract_strided_slice %38 {offsets = [0, 32], sizes = [128, 32], strides = [1, 1]} : vector<128x96xf32> to vector<128x32xf32>
    %44 = vector.broadcast %4 : vector<1x32xf32> to vector<128x32xf32>
    %45 = arith.addf %43, %44 : vector<128x32xf32>
    %46 = vector.shape_cast %45 : vector<128x32xf32> to vector<2x64x32xf32>
    %47 = vector.extract_strided_slice %38 {offsets = [0, 64], sizes = [128, 32], strides = [1, 1]} : vector<128x96xf32> to vector<128x32xf32>
    %48 = vector.broadcast %5 : vector<1x32xf32> to vector<128x32xf32>
    %49 = arith.addf %47, %48 : vector<128x32xf32>
    %50 = vector.shape_cast %49 : vector<128x32xf32> to vector<2x64x32xf32>
    %51 = vector.extract_strided_slice %42 {offsets = [0, 0, 0], sizes = [2, 64, 8], strides = [1, 1, 1]} : vector<2x64x32xf32> to vector<2x64x8xf32>
    %52 = arith.truncf %51 : vector<2x64x8xf32> to vector<2x64x8xbf16>
    %53 = vector.extract_strided_slice %46 {offsets = [0, 0, 0], sizes = [2, 64, 8], strides = [1, 1, 1]} : vector<2x64x32xf32> to vector<2x64x8xf32>
    %54 = arith.truncf %53 : vector<2x64x8xf32> to vector<2x64x8xbf16>
    %55 = vector.extract_strided_slice %50 {offsets = [0, 0, 0], sizes = [2, 64, 8], strides = [1, 1, 1]} : vector<2x64x32xf32> to vector<2x64x8xf32>
    %56 = arith.truncf %55 : vector<2x64x8xf32> to vector<2x64x8xbf16>
    "tpu.trace_start"() <{level = 10 : i32, message = "bnd,bmd->bnm"}> : () -> ()
    %cst_11 = arith.constant dense<0.000000e+00> : vector<2x64x64xf32>
    %57 = tpu.matmul %52, %54, %cst_11 {dimension_numbers = #tpu.dot_dimension_numbers<[2], [2], [1], [1], [0, 0, 0, 1, 1, 1], [0], [0]>} : vector<2x64x8xbf16>, vector<2x64x8xbf16>, vector<2x64x64xf32> -> vector<2x64x64xf32>
    "tpu.trace_stop"() : () -> ()
    %cst_12 = arith.constant 0.353553385 : f32
    %58 = vector.broadcast %cst_12 : f32 to vector<2x64x64xf32>
    %59 = arith.mulf %57, %58 : vector<2x64x64xf32>
    %cst_13 = arith.constant dense<0xFF800000> : vector<2x64xf32>
    %60 = vector.multi_reduction <maximumf>, %59, %cst_13 [2] : vector<2x64x64xf32> to vector<2x64xf32>
    %61 = vector.shape_cast %60 : vector<2x64xf32> to vector<2x64x1xf32>
    %62 = vector.broadcast %61 : vector<2x64x1xf32> to vector<2x64x64xf32>
    %63 = arith.subf %59, %62 : vector<2x64x64xf32>
    %64 = math.exp %63 : vector<2x64x64xf32>
    %cst_14 = arith.constant dense<0.000000e+00> : vector<2x64xf32>
    %65 = vector.multi_reduction <add>, %64, %cst_14 [2] : vector<2x64x64xf32> to vector<2x64xf32>
    %66 = vector.shape_cast %65 : vector<2x64xf32> to vector<2x64x1xf32>
    %67 = arith.truncf %64 : vector<2x64x64xf32> to vector<2x64x64xbf16>
    "tpu.trace_start"() <{level = 10 : i32, message = "bnm,bmd->bnd"}> : () -> ()
    %cst_15 = arith.constant dense<0.000000e+00> : vector<2x64x8xf32>
    %68 = tpu.matmul %67, %56, %cst_15 {dimension_numbers = #tpu.dot_dimension_numbers<[2], [1], [1], [2], [0, 0, 0, 1, 1, 2], [0], [0]>} : vector<2x64x64xbf16>, vector<2x64x8xbf16>, vector<2x64x8xf32> -> vector<2x64x8xf32>
    "tpu.trace_stop"() : () -> ()
    %69 = tpu.reciprocal %66 : vector<2x64x1xf32> -> vector<2x64x1xf32>
    %70 = vector.broadcast %69 : vector<2x64x1xf32> to vector<2x64x8xf32>
    %71 = arith.mulf %68, %70 : vector<2x64x8xf32>
    %72 = vector.extract_strided_slice %42 {offsets = [0, 0, 8], sizes = [2, 64, 8], strides = [1, 1, 1]} : vector<2x64x32xf32> to vector<2x64x8xf32>
    %73 = arith.truncf %72 : vector<2x64x8xf32> to vector<2x64x8xbf16>
    %74 = vector.extract_strided_slice %46 {offsets = [0, 0, 8], sizes = [2, 64, 8], strides = [1, 1, 1]} : vector<2x64x32xf32> to vector<2x64x8xf32>
    %75 = arith.truncf %74 : vector<2x64x8xf32> to vector<2x64x8xbf16>
    %76 = vector.extract_strided_slice %50 {offsets = [0, 0, 8], sizes = [2, 64, 8], strides = [1, 1, 1]} : vector<2x64x32xf32> to vector<2x64x8xf32>
    %77 = arith.truncf %76 : vector<2x64x8xf32> to vector<2x64x8xbf16>
    "tpu.trace_start"() <{level = 10 : i32, message = "bnd,bmd->bnm"}> : () -> ()
    %cst_16 = arith.constant dense<0.000000e+00> : vector<2x64x64xf32>
    %78 = tpu.matmul %73, %75, %cst_16 {dimension_numbers = #tpu.dot_dimension_numbers<[2], [2], [1], [1], [0, 0, 0, 1, 1, 1], [0], [0]>} : vector<2x64x8xbf16>, vector<2x64x8xbf16>, vector<2x64x64xf32> -> vector<2x64x64xf32>
    "tpu.trace_stop"() : () -> ()
    %cst_17 = arith.constant 0.353553385 : f32
    %79 = vector.broadcast %cst_17 : f32 to vector<2x64x64xf32>
    %80 = arith.mulf %78, %79 : vector<2x64x64xf32>
    %cst_18 = arith.constant dense<0xFF800000> : vector<2x64xf32>
    %81 = vector.multi_reduction <maximumf>, %80, %cst_18 [2] : vector<2x64x64xf32> to vector<2x64xf32>
    %82 = vector.shape_cast %81 : vector<2x64xf32> to vector<2x64x1xf32>
    %83 = vector.broadcast %82 : vector<2x64x1xf32> to vector<2x64x64xf32>
    %84 = arith.subf %80, %83 : vector<2x64x64xf32>
    %85 = math.exp %84 : vector<2x64x64xf32>
    %cst_19 = arith.constant dense<0.000000e+00> : vector<2x64xf32>
    %86 = vector.multi_reduction <add>, %85, %cst_19 [2] : vector<2x64x64xf32> to vector<2x64xf32>
    %87 = vector.shape_cast %86 : vector<2x64xf32> to vector<2x64x1xf32>
    %88 = arith.truncf %85 : vector<2x64x64xf32> to vector<2x64x64xbf16>
    "tpu.trace_start"() <{level = 10 : i32, message = "bnm,bmd->bnd"}> : () -> ()
    %cst_20 = arith.constant dense<0.000000e+00> : vector<2x64x8xf32>
    %89 = tpu.matmul %88, %77, %cst_20 {dimension_numbers = #tpu.dot_dimension_numbers<[2], [1], [1], [2], [0, 0, 0, 1, 1, 2], [0], [0]>} : vector<2x64x64xbf16>, vector<2x64x8xbf16>, vector<2x64x8xf32> -> vector<2x64x8xf32>
    "tpu.trace_stop"() : () -> ()
    %90 = tpu.reciprocal %87 : vector<2x64x1xf32> -> vector<2x64x1xf32>
    %91 = vector.broadcast %90 : vector<2x64x1xf32> to vector<2x64x8xf32>
    %92 = arith.mulf %89, %91 : vector<2x64x8xf32>
    %93 = vector.extract_strided_slice %42 {offsets = [0, 0, 16], sizes = [2, 64, 8], strides = [1, 1, 1]} : vector<2x64x32xf32> to vector<2x64x8xf32>
    %94 = arith.truncf %93 : vector<2x64x8xf32> to vector<2x64x8xbf16>
    %95 = vector.extract_strided_slice %46 {offsets = [0, 0, 16], sizes = [2, 64, 8], strides = [1, 1, 1]} : vector<2x64x32xf32> to vector<2x64x8xf32>
    %96 = arith.truncf %95 : vector<2x64x8xf32> to vector<2x64x8xbf16>
    %97 = vector.extract_strided_slice %50 {offsets = [0, 0, 16], sizes = [2, 64, 8], strides = [1, 1, 1]} : vector<2x64x32xf32> to vector<2x64x8xf32>
    %98 = arith.truncf %97 : vector<2x64x8xf32> to vector<2x64x8xbf16>
    "tpu.trace_start"() <{level = 10 : i32, message = "bnd,bmd->bnm"}> : () -> ()
    %cst_21 = arith.constant dense<0.000000e+00> : vector<2x64x64xf32>
    %99 = tpu.matmul %94, %96, %cst_21 {dimension_numbers = #tpu.dot_dimension_numbers<[2], [2], [1], [1], [0, 0, 0, 1, 1, 1], [0], [0]>} : vector<2x64x8xbf16>, vector<2x64x8xbf16>, vector<2x64x64xf32> -> vector<2x64x64xf32>
    "tpu.trace_stop"() : () -> ()
    %cst_22 = arith.constant 0.353553385 : f32
    %100 = vector.broadcast %cst_22 : f32 to vector<2x64x64xf32>
    %101 = arith.mulf %99, %100 : vector<2x64x64xf32>
    %cst_23 = arith.constant dense<0xFF800000> : vector<2x64xf32>
    %102 = vector.multi_reduction <maximumf>, %101, %cst_23 [2] : vector<2x64x64xf32> to vector<2x64xf32>
    %103 = vector.shape_cast %102 : vector<2x64xf32> to vector<2x64x1xf32>
    %104 = vector.broadcast %103 : vector<2x64x1xf32> to vector<2x64x64xf32>
    %105 = arith.subf %101, %104 : vector<2x64x64xf32>
    %106 = math.exp %105 : vector<2x64x64xf32>
    %cst_24 = arith.constant dense<0.000000e+00> : vector<2x64xf32>
    %107 = vector.multi_reduction <add>, %106, %cst_24 [2] : vector<2x64x64xf32> to vector<2x64xf32>
    %108 = vector.shape_cast %107 : vector<2x64xf32> to vector<2x64x1xf32>
    %109 = arith.truncf %106 : vector<2x64x64xf32> to vector<2x64x64xbf16>
    "tpu.trace_start"() <{level = 10 : i32, message = "bnm,bmd->bnd"}> : () -> ()
    %cst_25 = arith.constant dense<0.000000e+00> : vector<2x64x8xf32>
    %110 = tpu.matmul %109, %98, %cst_25 {dimension_numbers = #tpu.dot_dimension_numbers<[2], [1], [1], [2], [0, 0, 0, 1, 1, 2], [0], [0]>} : vector<2x64x64xbf16>, vector<2x64x8xbf16>, vector<2x64x8xf32> -> vector<2x64x8xf32>
    "tpu.trace_stop"() : () -> ()
    %111 = tpu.reciprocal %108 : vector<2x64x1xf32> -> vector<2x64x1xf32>
    %112 = vector.broadcast %111 : vector<2x64x1xf32> to vector<2x64x8xf32>
    %113 = arith.mulf %110, %112 : vector<2x64x8xf32>
    %114 = vector.extract_strided_slice %42 {offsets = [0, 0, 24], sizes = [2, 64, 8], strides = [1, 1, 1]} : vector<2x64x32xf32> to vector<2x64x8xf32>
    %115 = arith.truncf %114 : vector<2x64x8xf32> to vector<2x64x8xbf16>
    %116 = vector.extract_strided_slice %46 {offsets = [0, 0, 24], sizes = [2, 64, 8], strides = [1, 1, 1]} : vector<2x64x32xf32> to vector<2x64x8xf32>
    %117 = arith.truncf %116 : vector<2x64x8xf32> to vector<2x64x8xbf16>
    %118 = vector.extract_strided_slice %50 {offsets = [0, 0, 24], sizes = [2, 64, 8], strides = [1, 1, 1]} : vector<2x64x32xf32> to vector<2x64x8xf32>
    %119 = arith.truncf %118 : vector<2x64x8xf32> to vector<2x64x8xbf16>
    "tpu.trace_start"() <{level = 10 : i32, message = "bnd,bmd->bnm"}> : () -> ()
    %cst_26 = arith.constant dense<0.000000e+00> : vector<2x64x64xf32>
    %120 = tpu.matmul %115, %117, %cst_26 {dimension_numbers = #tpu.dot_dimension_numbers<[2], [2], [1], [1], [0, 0, 0, 1, 1, 1], [0], [0]>} : vector<2x64x8xbf16>, vector<2x64x8xbf16>, vector<2x64x64xf32> -> vector<2x64x64xf32>
    "tpu.trace_stop"() : () -> ()
    %cst_27 = arith.constant 0.353553385 : f32
    %121 = vector.broadcast %cst_27 : f32 to vector<2x64x64xf32>
    %122 = arith.mulf %120, %121 : vector<2x64x64xf32>
    %cst_28 = arith.constant dense<0xFF800000> : vector<2x64xf32>
    %123 = vector.multi_reduction <maximumf>, %122, %cst_28 [2] : vector<2x64x64xf32> to vector<2x64xf32>
    %124 = vector.shape_cast %123 : vector<2x64xf32> to vector<2x64x1xf32>
    %125 = vector.broadcast %124 : vector<2x64x1xf32> to vector<2x64x64xf32>
    %126 = arith.subf %122, %125 : vector<2x64x64xf32>
    %127 = math.exp %126 : vector<2x64x64xf32>
    %cst_29 = arith.constant dense<0.000000e+00> : vector<2x64xf32>
    %128 = vector.multi_reduction <add>, %127, %cst_29 [2] : vector<2x64x64xf32> to vector<2x64xf32>
    %129 = vector.shape_cast %128 : vector<2x64xf32> to vector<2x64x1xf32>
    %130 = arith.truncf %127 : vector<2x64x64xf32> to vector<2x64x64xbf16>
    "tpu.trace_start"() <{level = 10 : i32, message = "bnm,bmd->bnd"}> : () -> ()
    %cst_30 = arith.constant dense<0.000000e+00> : vector<2x64x8xf32>
    %131 = tpu.matmul %130, %119, %cst_30 {dimension_numbers = #tpu.dot_dimension_numbers<[2], [1], [1], [2], [0, 0, 0, 1, 1, 2], [0], [0]>} : vector<2x64x64xbf16>, vector<2x64x8xbf16>, vector<2x64x8xf32> -> vector<2x64x8xf32>
    "tpu.trace_stop"() : () -> ()
    %132 = tpu.reciprocal %129 : vector<2x64x1xf32> -> vector<2x64x1xf32>
    %133 = vector.broadcast %132 : vector<2x64x1xf32> to vector<2x64x8xf32>
    %134 = arith.mulf %131, %133 : vector<2x64x8xf32>
    %135 = tpu.concatenate %71, %92, %113, %134 in 2 : vector<2x64x8xf32>, vector<2x64x8xf32>, vector<2x64x8xf32>, vector<2x64x8xf32> -> vector<2x64x32xf32>
    %136 = vector.shape_cast %135 : vector<2x64x32xf32> to vector<128x32xf32>
    %137 = arith.truncf %136 : vector<128x32xf32> to vector<128x32xbf16>
    %c0_31 = arith.constant 0 : index
    %c0_32 = arith.constant 0 : index
    %138 = vector.load %arg4[%c0_31, %c0_32] : memref<32x32xbf16, #tpu.memory_space<vmem>>, vector<32x32xbf16>
    %cst_33 = arith.constant dense<0.000000e+00> : vector<128x32xf32>
    %139 = tpu.matmul %137, %138, %cst_33 {dimension_numbers = #tpu.dot_dimension_numbers<[1], [0], [0], [1], [0, 0, 1, 1], [], []>} : vector<128x32xbf16>, vector<32x32xbf16>, vector<128x32xf32> -> vector<128x32xf32>
    %140 = vector.broadcast %6 : vector<1x32xf32> to vector<128x32xf32>
    %141 = arith.addf %139, %140 : vector<128x32xf32>
    %142 = arith.addf %141, %13 : vector<128x32xf32>
    %cst_34 = arith.constant dense<0.000000e+00> : vector<128xf32>
    %143 = vector.multi_reduction <add>, %142, %cst_34 [1] : vector<128x32xf32> to vector<128xf32>
    %144 = vector.shape_cast %143 : vector<128xf32> to vector<128x1xf32>
    %cst_35 = arith.constant 3.200000e+01 : f32
    %145 = vector.broadcast %cst_35 : f32 to vector<128x1xf32>
    %146 = arith.divf %144, %145 : vector<128x1xf32>
    %147 = vector.broadcast %146 : vector<128x1xf32> to vector<128x32xf32>
    %148 = arith.subf %142, %147 : vector<128x32xf32>
    %149 = arith.mulf %148, %148 : vector<128x32xf32>
    %cst_36 = arith.constant dense<0.000000e+00> : vector<128xf32>
    %150 = vector.multi_reduction <add>, %149, %cst_36 [1] : vector<128x32xf32> to vector<128xf32>
    %151 = vector.shape_cast %150 : vector<128xf32> to vector<128x1xf32>
    %cst_37 = arith.constant 3.200000e+01 : f32
    %152 = vector.broadcast %cst_37 : f32 to vector<128x1xf32>
    %153 = arith.divf %151, %152 : vector<128x1xf32>
    %154 = vector.broadcast %146 : vector<128x1xf32> to vector<128x32xf32>
    %155 = arith.subf %142, %154 : vector<128x32xf32>
    %cst_38 = arith.constant 9.99999974E-6 : f32
    %156 = vector.broadcast %cst_38 : f32 to vector<128x1xf32>
    %157 = arith.addf %153, %156 : vector<128x1xf32>
    %158 = math.rsqrt %157 : vector<128x1xf32>
    %159 = vector.broadcast %158 : vector<128x1xf32> to vector<128x32xf32>
    %160 = arith.mulf %155, %159 : vector<128x32xf32>
    %161 = vector.broadcast %7 : vector<1x32xf32> to vector<128x32xf32>
    %162 = arith.mulf %160, %161 : vector<128x32xf32>
    %163 = vector.broadcast %8 : vector<1x32xf32> to vector<128x32xf32>
    %164 = arith.addf %162, %163 : vector<128x32xf32>
    %165 = arith.truncf %164 : vector<128x32xf32> to vector<128x32xbf16>
    %c0_39 = arith.constant 0 : index
    %c0_40 = arith.constant 0 : index
    %166 = vector.load %arg5[%c0_39, %c0_40] : memref<32x32xbf16, #tpu.memory_space<vmem>>, vector<32x32xbf16>
    %cst_41 = arith.constant dense<0.000000e+00> : vector<128x32xf32>
    %167 = tpu.matmul %165, %166, %cst_41 {dimension_numbers = #tpu.dot_dimension_numbers<[1], [0], [0], [1], [0, 0, 1, 1], [], []>} : vector<128x32xbf16>, vector<32x32xbf16>, vector<128x32xf32> -> vector<128x32xf32>
    %168 = vector.broadcast %9 : vector<1x32xf32> to vector<128x32xf32>
    %169 = arith.addf %167, %168 : vector<128x32xf32>
    %cst_42 = arith.constant 5.000000e-01 : f32
    %170 = vector.broadcast %cst_42 : f32 to vector<128x32xf32>
    %171 = arith.mulf %170, %169 : vector<128x32xf32>
    %cst_43 = arith.constant 0.707106769 : f32
    %172 = vector.broadcast %cst_43 : f32 to vector<128x32xf32>
    %173 = arith.mulf %169, %172 : vector<128x32xf32>
    %174 = math.erf %173 : vector<128x32xf32>
    %cst_44 = arith.constant 1.000000e+00 : f32
    %175 = vector.broadcast %cst_44 : f32 to vector<128x32xf32>
    %176 = arith.addf %175, %174 : vector<128x32xf32>
    %177 = arith.mulf %171, %176 : vector<128x32xf32>
    %178 = arith.truncf %177 : vector<128x32xf32> to vector<128x32xbf16>
    %c0_45 = arith.constant 0 : index
    %c0_46 = arith.constant 0 : index
    %179 = vector.load %arg6[%c0_45, %c0_46] : memref<32x32xbf16, #tpu.memory_space<vmem>>, vector<32x32xbf16>
    %cst_47 = arith.constant dense<0.000000e+00> : vector<128x32xf32>
    %180 = tpu.matmul %178, %179, %cst_47 {dimension_numbers = #tpu.dot_dimension_numbers<[1], [0], [0], [1], [0, 0, 1, 1], [], []>} : vector<128x32xbf16>, vector<32x32xbf16>, vector<128x32xf32> -> vector<128x32xf32>
    %181 = vector.broadcast %10 : vector<1x32xf32> to vector<128x32xf32>
    %182 = arith.addf %180, %181 : vector<128x32xf32>
    %183 = arith.addf %182, %142 : vector<128x32xf32>
    %184 = vector.shape_cast %183 : vector<128x32xf32> to vector<2x64x32xf32>
    %185 = tpu.transpose %184, [0, 2, 1] : vector<2x64x32xf32> -> vector<2x32x64xf32>
    %c0_48 = arith.constant 0 : index
    %c0_49 = arith.constant 0 : index
    %c0_50 = arith.constant 0 : index
    %186 = vector.load %arg7[%c0_48, %c0_49, %c0_50] : memref<2x32x64xf32, #tpu.memory_space<vmem>>, vector<2x32x64xf32>
    tpu.vector_store %arg7[%c0_48, %c0_49, %c0_50], %185 {strides = array<i32>} : memref<2x32x64xf32, #tpu.memory_space<vmem>>, vector<2x32x64xf32>,
    return
  }
  func.func @transform_0(%arg0: i32) -> (i32, i32, i32) {
    %c0_i32 = arith.constant 0 : i32
    %c0_i32_0 = arith.constant 0 : i32
    %c0_i32_1 = arith.constant 0 : i32
    return %arg0, %c0_i32, %c0_i32_0 : i32, i32, i32
  }
  func.func @transform_1(%arg0: i32) -> (i32, i32) {
    %c0_i32 = arith.constant 0 : i32
    %c0_i32_0 = arith.constant 0 : i32
    %c0_i32_1 = arith.constant 0 : i32
    return %c0_i32, %c0_i32_0 : i32, i32
  }
  func.func @transform_2(%arg0: i32) -> (i32, i32) {
    %c0_i32 = arith.constant 0 : i32
    %c0_i32_0 = arith.constant 0 : i32
    %c0_i32_1 = arith.constant 0 : i32
    return %c0_i32, %c0_i32_0 : i32, i32
  }
  func.func @transform_3(%arg0: i32) -> (i32, i32) {
    %c0_i32 = arith.constant 0 : i32
    %c0_i32_0 = arith.constant 0 : i32
    %c0_i32_1 = arith.constant 0 : i32
    return %c0_i32, %c0_i32_0 : i32, i32
  }
  func.func @transform_4(%arg0: i32) -> (i32, i32) {
    %c0_i32 = arith.constant 0 : i32
    %c0_i32_0 = arith.constant 0 : i32
    %c0_i32_1 = arith.constant 0 : i32
    return %c0_i32, %c0_i32_0 : i32, i32
  }
  func.func @transform_5(%arg0: i32) -> (i32, i32) {
    %c0_i32 = arith.constant 0 : i32
    %c0_i32_0 = arith.constant 0 : i32
    %c0_i32_1 = arith.constant 0 : i32
    return %c0_i32, %c0_i32_0 : i32, i32
  }
  func.func @transform_6(%arg0: i32) -> (i32, i32, i32) {
    %c0_i32 = arith.constant 0 : i32
    %c0_i32_0 = arith.constant 0 : i32
    %c0_i32_1 = arith.constant 0 : i32
    return %arg0, %c0_i32, %c0_i32_0 : i32, i32, i32
  }
}

</mosaic_0001>

<llo_original>
// kernel: tpu_custom_call.1
$region0: #{tpu_custom_call.1}
  #allocation0 [shape = 'u32[]', space=smem, size = 0x4, offset = 0x4, fixed_abs, tag = 'smem constant byte address 0x4 - core index']
  #allocation1 [shape = 'u32[144,128]{1,0:T(1,128)}', space=vmem, size = 0x12000, scoped, tag = 'internal scratch']
  %s0 = inlined_call_operand.hbm [shape: f32[2,32,64], index: 0, kind: input, shape index: {}]
  %s1 = inlined_call_operand.hbm [shape: f32[10,32], index: 1, kind: input, shape index: {}]
  %s2 = inlined_call_operand.hbm [shape: bf16[32,96], index: 2, kind: input, shape index: {}]
  %s3 = inlined_call_operand.hbm [shape: bf16[32,32], index: 3, kind: input, shape index: {}]
  %s4 = inlined_call_operand.hbm [shape: bf16[32,32], index: 4, kind: input, shape index: {}]
  %s5 = inlined_call_operand.hbm [shape: bf16[32,32], index: 5, kind: input, shape index: {}]
  %s6 = inlined_call_operand.hbm [shape: f32[2,32,64], index: 6, kind: output, shape index: {}]
  %s7 = sld [smem:[#allocation0]]
  $region58: #{tpu_custom_call.1} parent=0
    _
  %s9 = ssub.s32 1, %s7
  %s10 = scalar_select 0, %s9, %s7
  $region1: #{tpu_custom_call.1} parent=0
    #allocation2 [shape = 'u8[32768]{0}', space=vmem, size = 0x8000, scoped, tag = 'input window, operand 0, single buffered']
    #allocation3 [shape = 's32[1]{0}', space=sflag, size = 0x4, scoped, tag = 'scoped memory for tpu_custom_call.1']
    #allocation4 [shape = 's32[1]{0}', space=sflag, size = 0x4, scoped, tag = 'scoped memory for tpu_custom_call.1']
    #allocation5 [shape = 'u8[8192]{0}', space=vmem, size = 0x2000, scoped, tag = 'input window, operand 1, single buffered']
    #allocation6 [shape = 's32[1]{0}', space=sflag, size = 0x4, scoped, tag = 'scoped memory for tpu_custom_call.1']
    #allocation7 [shape = 'u8[8192]{0}', space=vmem, size = 0x2000, scoped, tag = 'input window, operand 2, single buffered']
    #allocation8 [shape = 'u8[8192]{0}', space=vmem, size = 0x2000, scoped, tag = 'input window, operand 3, single buffered']
    #allocation9 [shape = 's32[1]{0}', space=sflag, size = 0x4, scoped, tag = 'scoped memory for tpu_custom_call.1']
    #allocation10 [shape = 'u8[8192]{0}', space=vmem, size = 0x2000, scoped, tag = 'input window, operand 4, single buffered']
    #allocation11 [shape = 'u8[8192]{0}', space=vmem, size = 0x2000, scoped, tag = 'input window, operand 5, single buffered']
    #allocation12 [shape = 's32[1]{0}', space=sflag, size = 0x4, scoped, tag = 'scoped memory for tpu_custom_call.1']
    #allocation13 [shape = 'u8[32768]{0}', space=vmem, size = 0x8000, scoped, tag = 'output window, operand 0, single buffered']
    %11 = vsyncpa [#allocation3], 0
    %12 = vsyncpa [#allocation6], 0
    %13 = vsyncpa [#allocation9], 0
    %14 = vsyncpa [#allocation12], 0
    %15 = vsyncpa [#allocation4], 0
    // Predicated region
    $region2: #{tpu_custom_call.1} parent=1 // pred_check
      _
    $region3: #{tpu_custom_call.1} parent=1 // pred_check_branch
      %17 = sbr.rel (0) target = $region5
    $region4: #{tpu_custom_call.1} parent=1 // pred_region
      %s19 = ssub.s32 1024, 1024
      %20 = vsyncadd [#allocation3], %s19
      %s21 = sshll.u32 [#allocation2], 4
      %s22 = int_to_ptr.vmem [resolvable:$true] %s21
      %27 = dma.hbm_to_vmem [thread:$0]  %s0, 1024, %s22, [#allocation3], 128, 128, 8
    $region5: #{tpu_custom_call.1} parent=1 // pred_fallthru
      _
    // Predicated region
    $region6: #{tpu_custom_call.1} parent=1 // pred_check
      _
    $region7: #{tpu_custom_call.1} parent=1 // pred_check_branch
      %29 = sbr.rel (0) target = $region9
    $region8: #{tpu_custom_call.1} parent=1 // pred_region
      %s31 = ssub.s32 256, 256
      %32 = vsyncadd [#allocation6], %s31
      %s33 = sshll.u32 [#allocation5], 4
      %s34 = int_to_ptr.vmem [resolvable:$true] %s33
      %39 = dma.hbm_to_vmem [thread:$0]  %s1, 256, %s34, [#allocation6], 128, 128, 8
    $region9: #{tpu_custom_call.1} parent=1 // pred_fallthru
      _
    // Predicated region
    $region10: #{tpu_custom_call.1} parent=1 // pred_check
      _
    $region11: #{tpu_custom_call.1} parent=1 // pred_check_branch
      %41 = sbr.rel (0) target = $region13
    $region12: #{tpu_custom_call.1} parent=1 // pred_region
      %s43 = ssub.s32 256, 256
      %44 = vsyncadd [#allocation6], %s43
      %s45 = sshll.u32 [#allocation7], 4
      %s46 = int_to_ptr.vmem [resolvable:$true] %s45
      %51 = dma.hbm_to_vmem [thread:$0]  %s2, 256, %s46, [#allocation6], 64, 64, 4
    $region13: #{tpu_custom_call.1} parent=1 // pred_fallthru
      _
    // Predicated region
    $region14: #{tpu_custom_call.1} parent=1 // pred_check
      _
    $region15: #{tpu_custom_call.1} parent=1 // pred_check_branch
      %53 = sbr.rel (0) target = $region17
    $region16: #{tpu_custom_call.1} parent=1 // pred_region
      %s55 = ssub.s32 256, 256
      %56 = vsyncadd [#allocation9], %s55
      %s57 = sshll.u32 [#allocation8], 4
      %s58 = int_to_ptr.vmem [resolvable:$true] %s57
      %63 = dma.hbm_to_vmem [thread:$0]  %s3, 256, %s58, [#allocation9], 64, 64, 4
    $region17: #{tpu_custom_call.1} parent=1 // pred_fallthru
      _
    // Predicated region
    $region18: #{tpu_custom_call.1} parent=1 // pred_check
      _
    $region19: #{tpu_custom_call.1} parent=1 // pred_check_branch
      %65 = sbr.rel (0) target = $region21
    $region20: #{tpu_custom_call.1} parent=1 // pred_region
      %s67 = ssub.s32 256, 256
      %68 = vsyncadd [#allocation9], %s67
      %s69 = sshll.u32 [#allocation10], 4
      %s70 = int_to_ptr.vmem [resolvable:$true] %s69
      %75 = dma.hbm_to_vmem [thread:$0]  %s4, 256, %s70, [#allocation9], 64, 64, 4
    $region21: #{tpu_custom_call.1} parent=1 // pred_fallthru
      _
    // Predicated region
    $region22: #{tpu_custom_call.1} parent=1 // pred_check
      _
    $region23: #{tpu_custom_call.1} parent=1 // pred_check_branch
      %77 = sbr.rel (0) target = $region25
    $region24: #{tpu_custom_call.1} parent=1 // pred_region
      %s79 = ssub.s32 256, 256
      %80 = vsyncadd [#allocation12], %s79
      %s81 = sshll.u32 [#allocation11], 4
      %s82 = int_to_ptr.vmem [resolvable:$true] %s81
      %87 = dma.hbm_to_vmem [thread:$0]  %s5, 256, %s82, [#allocation12], 64, 64, 4
    $region25: #{tpu_custom_call.1} parent=1 // pred_fallthru
      _
    // Predicated region
    $region26: #{tpu_custom_call.1} parent=1 // pred_check
      _
    $region27: #{tpu_custom_call.1} parent=1 // pred_check_branch
      %89 = sbr.rel (0) target = $region29
    $region28: #{tpu_custom_call.1} parent=1 // pred_region
      %90 = dma.done [#allocation3], 1024
    $region29: #{tpu_custom_call.1} parent=1 // pred_fallthru
      _
    // Predicated region
    $region30: #{tpu_custom_call.1} parent=1 // pred_check
      _
    $region31: #{tpu_custom_call.1} parent=1 // pred_check_branch
      %92 = sbr.rel (0) target = $region33
    $region32: #{tpu_custom_call.1} parent=1 // pred_region
      %93 = dma.done [#allocation6], 256
    $region33: #{tpu_custom_call.1} parent=1 // pred_fallthru
      _
    // Predicated region
    $region34: #{tpu_custom_call.1} parent=1 // pred_check
      _
    $region35: #{tpu_custom_call.1} parent=1 // pred_check_branch
      %95 = sbr.rel (0) target = $region37
    $region36: #{tpu_custom_call.1} parent=1 // pred_region
      %96 = dma.done [#allocation6], 256
    $region37: #{tpu_custom_call.1} parent=1 // pred_fallthru
      _
    // Predicated region
    $region38: #{tpu_custom_call.1} parent=1 // pred_check
      _
    $region39: #{tpu_custom_call.1} parent=1 // pred_check_branch
      %98 = sbr.rel (0) target = $region41
    $region40: #{tpu_custom_call.1} parent=1 // pred_region
      %99 = dma.done [#allocation9], 256
    $region41: #{tpu_custom_call.1} parent=1 // pred_fallthru
      _
    // Predicated region
    $region42: #{tpu_custom_call.1} parent=1 // pred_check
      _
    $region43: #{tpu_custom_call.1} parent=1 // pred_check_branch
      %101 = sbr.rel (0) target = $region45
    $region44: #{tpu_custom_call.1} parent=1 // pred_region
      %102 = dma.done [#allocation9], 256
    $region45: #{tpu_custom_call.1} parent=1 // pred_fallthru
      _
    // Predicated region
    $region46: #{tpu_custom_call.1} parent=1 // pred_check
      _
    $region47: #{tpu_custom_call.1} parent=1 // pred_check_branch
      %104 = sbr.rel (0) target = $region49
    $region48: #{tpu_custom_call.1} parent=1 // pred_region
      %105 = dma.done [#allocation12], 256
    $region49: #{tpu_custom_call.1} parent=1 // pred_fallthru
      _
    %v107 = vld [vmem:[#allocation5] sm:$0xff]
    %v108 = vld [vmem:[#allocation5 + $0x8] sm:$0x3]
    %v109 = vld [vmem:[#allocation2] sm:$0xff]
    %v110 = vld [vmem:[#allocation2 + $0x8] sm:$0xff]
    %v111 = vld [vmem:[#allocation2 + $0x10] sm:$0xff]
    %v112 = vld [vmem:[#allocation2 + $0x18] sm:$0xff]
    %v113 = vld [vmem:[#allocation2 + $0x20] sm:$0xff]
    %v114 = vld [vmem:[#allocation2 + $0x28] sm:$0xff]
    %v115 = vld [vmem:[#allocation2 + $0x30] sm:$0xff]
    %v116 = vld [vmem:[#allocation2 + $0x38] sm:$0xff]
    %117 = vxpose.xlu0.b32.start [1/16] %v109, 128
    %118 = vxpose.xlu0.b32.cont [2/16] %v110, 128
    %119 = vxpose.xlu0.b32.cont [3/16] %v111, 128
    %120 = vxpose.xlu0.b32.cont [4/16] %v112, 128
    %121 = vxpose.xlu0.b32.cont [5/16] 0.0, 128
    %122 = vxpose.xlu0.b32.cont [6/16] 0.0, 128
    %123 = vxpose.xlu0.b32.cont [7/16] 0.0, 128
    %124 = vxpose.xlu0.b32.cont [8/16] 0.0, 128
    %125 = vxpose.xlu0.b32.cont [9/16] 0.0, 128
    %126 = vxpose.xlu0.b32.cont [10/16] 0.0, 128
    %127 = vxpose.xlu0.b32.cont [11/16] 0.0, 128
    %128 = vxpose.xlu0.b32.cont [12/16] 0.0, 128
    %129 = vxpose.xlu0.b32.cont [13/16] 0.0, 128
    %130 = vxpose.xlu0.b32.cont [14/16] 0.0, 128
    %131 = vxpose.xlu0.b32.cont [15/16] 0.0, 128
    %132 = vxpose.xlu0.b32.end [16/16] 0.0, 128
    %v133 = vpop.trf.xlu0
    %v134 = vpop.trf.xlu0
    %v135 = vpop.trf.xlu0
    %v136 = vpop.trf.xlu0
    %v137 = vpop.trf.xlu0
    %v138 = vpop.trf.xlu0
    %v139 = vpop.trf.xlu0
    %v140 = vpop.trf.xlu0
    %v141 = vpop.trf.xlu0
    %v142 = vpop.trf.xlu0
    %v143 = vpop.trf.xlu0
    %v144 = vpop.trf.xlu0
    %v145 = vpop.trf.xlu0
    %v146 = vpop.trf.xlu0
    %v147 = vpop.trf.xlu0
    %v148 = vpop.trf.xlu0
    %149 = vxpose.xlu0.b32.start [1/16] %v113, 128
    %150 = vxpose.xlu0.b32.cont [2/16] %v114, 128
    %151 = vxpose.xlu0.b32.cont [3/16] %v115, 128
    %152 = vxpose.xlu0.b32.cont [4/16] %v116, 128
    %153 = vxpose.xlu0.b32.cont [5/16] 0.0, 128
    %154 = vxpose.xlu0.b32.cont [6/16] 0.0, 128
    %155 = vxpose.xlu0.b32.cont [7/16] 0.0, 128
    %156 = vxpose.xlu0.b32.cont [8/16] 0.0, 128
    %157 = vxpose.xlu0.b32.cont [9/16] 0.0, 128
    %158 = vxpose.xlu0.b32.cont [10/16] 0.0, 128
    %159 = vxpose.xlu0.b32.cont [11/16] 0.0, 128
    %160 = vxpose.xlu0.b32.cont [12/16] 0.0, 128
    %161 = vxpose.xlu0.b32.cont [13/16] 0.0, 128
    %162 = vxpose.xlu0.b32.cont [14/16] 0.0, 128
    %163 = vxpose.xlu0.b32.cont [15/16] 0.0, 128
    %164 = vxpose.xlu0.b32.end [16/16] 0.0, 128
    %v165 = vpop.trf.xlu0
    %v166 = vpop.trf.xlu0
    %v167 = vpop.trf.xlu0
    %v168 = vpop.trf.xlu0
    %v169 = vpop.trf.xlu0
    %v170 = vpop.trf.xlu0
    %v171 = vpop.trf.xlu0
    %v172 = vpop.trf.xlu0
    %v173 = vpop.trf.xlu0
    %v174 = vpop.trf.xlu0
    %v175 = vpop.trf.xlu0
    %v176 = vpop.trf.xlu0
    %v177 = vpop.trf.xlu0
    %v178 = vpop.trf.xlu0
    %v179 = vpop.trf.xlu0
    %v180 = vpop.trf.xlu0
    %vm181 = vcmask 261120
    %v182 = vsel %vm181, %v133, 0.0
    %183 = vadd.xlane.f32.xlu0 %v182
    %v184 = vpop.xlane.xlu0 %183
    %v185 = vsel %vm181, %v134, 0.0
    %186 = vadd.xlane.f32.xlu0 %v185
    %v187 = vpop.xlane.xlu0 %186
    %v188 = vsel %vm181, %v135, 0.0
    %189 = vadd.xlane.f32.xlu0 %v188
    %v190 = vpop.xlane.xlu0 %189
    %v191 = vsel %vm181, %v136, 0.0
    %192 = vadd.xlane.f32.xlu0 %v191
    %v193 = vpop.xlane.xlu0 %192
    %v194 = vsel %vm181, %v137, 0.0
    %195 = vadd.xlane.f32.xlu0 %v194
    %v196 = vpop.xlane.xlu0 %195
    %v197 = vsel %vm181, %v138, 0.0
    %198 = vadd.xlane.f32.xlu0 %v197
    %v199 = vpop.xlane.xlu0 %198
    %v200 = vsel %vm181, %v139, 0.0
    %201 = vadd.xlane.f32.xlu0 %v200
    %v202 = vpop.xlane.xlu0 %201
    %v203 = vsel %vm181, %v140, 0.0
    %204 = vadd.xlane.f32.xlu0 %v203
    %v205 = vpop.xlane.xlu0 %204
    %v206 = vsel %vm181, %v165, 0.0
    %207 = vadd.xlane.f32.xlu0 %v206
    %v208 = vpop.xlane.xlu0 %207
    %v209 = vsel %vm181, %v166, 0.0
    %210 = vadd.xlane.f32.xlu0 %v209
    %v211 = vpop.xlane.xlu0 %210
    %v212 = vsel %vm181, %v167, 0.0
    %213 = vadd.xlane.f32.xlu0 %v212
    %v214 = vpop.xlane.xlu0 %213
    %v215 = vsel %vm181, %v168, 0.0
    %216 = vadd.xlane.f32.xlu0 %v215
    %v217 = vpop.xlane.xlu0 %216
    %v218 = vsel %vm181, %v169, 0.0
    %219 = vadd.xlane.f32.xlu0 %v218
    %v220 = vpop.xlane.xlu0 %219
    %v221 = vsel %vm181, %v170, 0.0
    %222 = vadd.xlane.f32.xlu0 %v221
    %v223 = vpop.xlane.xlu0 %222
    %v224 = vsel %vm181, %v171, 0.0
    %225 = vadd.xlane.f32.xlu0 %v224
    %v226 = vpop.xlane.xlu0 %225
    %v227 = vsel %vm181, %v172, 0.0
    %228 = vadd.xlane.f32.xlu0 %v227
    %v229 = vpop.xlane.xlu0 %228
    %v230 = vrcp.pop 32.0
    %v231 = vmul.f32 %v184, %v230
    %v232 = vmul.f32 %v187, %v230
    %v233 = vmul.f32 %v190, %v230
    %v234 = vmul.f32 %v193, %v230
    %v235 = vmul.f32 %v196, %v230
    %v236 = vmul.f32 %v199, %v230
    %v237 = vmul.f32 %v202, %v230
    %v238 = vmul.f32 %v205, %v230
    %v239 = vmul.f32 %v208, %v230
    %v240 = vmul.f32 %v211, %v230
    %v241 = vmul.f32 %v214, %v230
    %v242 = vmul.f32 %v217, %v230
    %v243 = vmul.f32 %v220, %v230
    %v244 = vmul.f32 %v223, %v230
    %v245 = vmul.f32 %v226, %v230
    %v246 = vmul.f32 %v229, %v230
    %v247 = vsub.f32 %v133, %v231
    %v248 = vsub.f32 %v134, %v232
    %v249 = vsub.f32 %v135, %v233
    %v250 = vsub.f32 %v136, %v234
    %v251 = vsub.f32 %v137, %v235
    %v252 = vsub.f32 %v138, %v236
    %v253 = vsub.f32 %v139, %v237
    %v254 = vsub.f32 %v140, %v238
    %v255 = vsub.f32 %v165, %v239
    %v256 = vsub.f32 %v166, %v240
    %v257 = vsub.f32 %v167, %v241
    %v258 = vsub.f32 %v168, %v242
    %v259 = vsub.f32 %v169, %v243
    %v260 = vsub.f32 %v170, %v244
    %v261 = vsub.f32 %v171, %v245
    %v262 = vsub.f32 %v172, %v246
    %v263 = vmul.f32 %v247, %v247
    %v264 = vmul.f32 %v248, %v248
    %v265 = vmul.f32 %v249, %v249
    %v266 = vmul.f32 %v250, %v250
    %v267 = vmul.f32 %v251, %v251
    %v268 = vmul.f32 %v252, %v252
    %v269 = vmul.f32 %v253, %v253
    %v270 = vmul.f32 %v254, %v254
    %v271 = vmul.f32 %v255, %v255
    %v272 = vmul.f32 %v256, %v256
    %v273 = vmul.f32 %v257, %v257
    %v274 = vmul.f32 %v258, %v258
    %v275 = vmul.f32 %v259, %v259
    %v276 = vmul.f32 %v260, %v260
    %v277 = vmul.f32 %v261, %v261
    %v278 = vmul.f32 %v262, %v262
    %v279 = vsel %vm181, %v263, 0.0
    %280 = vadd.xlane.f32.xlu0 %v279
    %v281 = vpop.xlane.xlu0 %280
    %v282 = vsel %vm181, %v264, 0.0
    %283 = vadd.xlane.f32.xlu0 %v282
    %v284 = vpop.xlane.xlu0 %283
    %v285 = vsel %vm181, %v265, 0.0
    %286 = vadd.xlane.f32.xlu0 %v285
    %v287 = vpop.xlane.xlu0 %286
    %v288 = vsel %vm181, %v266, 0.0
    %289 = vadd.xlane.f32.xlu0 %v288
    %v290 = vpop.xlane.xlu0 %289
    %v291 = vsel %vm181, %v267, 0.0
    %292 = vadd.xlane.f32.xlu0 %v291
    %v293 = vpop.xlane.xlu0 %292
    %v294 = vsel %vm181, %v268, 0.0
    %295 = vadd.xlane.f32.xlu0 %v294
    %v296 = vpop.xlane.xlu0 %295
    %v297 = vsel %vm181, %v269, 0.0
    %298 = vadd.xlane.f32.xlu0 %v297
    %v299 = vpop.xlane.xlu0 %298
    %v300 = vsel %vm181, %v270, 0.0
    %301 = vadd.xlane.f32.xlu0 %v300
    %v302 = vpop.xlane.xlu0 %301
    %v303 = vsel %vm181, %v271, 0.0
    %304 = vadd.xlane.f32.xlu0 %v303
    %v305 = vpop.xlane.xlu0 %304
    %v306 = vsel %vm181, %v272, 0.0
    %307 = vadd.xlane.f32.xlu0 %v306
    %v308 = vpop.xlane.xlu0 %307
    %v309 = vsel %vm181, %v273, 0.0
    %310 = vadd.xlane.f32.xlu0 %v309
    %v311 = vpop.xlane.xlu0 %310
    %v312 = vsel %vm181, %v274, 0.0
    %313 = vadd.xlane.f32.xlu0 %v312
    %v314 = vpop.xlane.xlu0 %313
    %v315 = vsel %vm181, %v275, 0.0
    %316 = vadd.xlane.f32.xlu0 %v315
    %v317 = vpop.xlane.xlu0 %316
    %v318 = vsel %vm181, %v276, 0.0
    %319 = vadd.xlane.f32.xlu0 %v318
    %v320 = vpop.xlane.xlu0 %319
    %v321 = vsel %vm181, %v277, 0.0
    %322 = vadd.xlane.f32.xlu0 %v321
    %v323 = vpop.xlane.xlu0 %322
    %v324 = vsel %vm181, %v278, 0.0
    %325 = vadd.xlane.f32.xlu0 %v324
    %v326 = vpop.xlane.xlu0 %325
    %v327 = vmul.f32 %v281, %v230
    %v328 = vmul.f32 %v284, %v230
    %v329 = vmul.f32 %v287, %v230
    %v330 = vmul.f32 %v290, %v230
    %v331 = vmul.f32 %v293, %v230
    %v332 = vmul.f32 %v296, %v230
    %v333 = vmul.f32 %v299, %v230
    %v334 = vmul.f32 %v302, %v230
    %v335 = vmul.f32 %v305, %v230
    %v336 = vmul.f32 %v308, %v230
    %v337 = vmul.f32 %v311, %v230
    %v338 = vmul.f32 %v314, %v230
    %v339 = vmul.f32 %v317, %v230
    %v340 = vmul.f32 %v320, %v230
    %v341 = vmul.f32 %v323, %v230
    %v342 = vmul.f32 %v326, %v230
    %v343 = vadd.f32 %v327, 1e-05
    %v344 = vadd.f32 %v328, 1e-05
    %v345 = vadd.f32 %v329, 1e-05
    %v346 = vadd.f32 %v330, 1e-05
    %v347 = vadd.f32 %v331, 1e-05
    %v348 = vadd.f32 %v332, 1e-05
    %v349 = vadd.f32 %v333, 1e-05
    %v350 = vadd.f32 %v334, 1e-05
    %v351 = vadd.f32 %v335, 1e-05
    %v352 = vadd.f32 %v336, 1e-05
    %v353 = vadd.f32 %v337, 1e-05
    %v354 = vadd.f32 %v338, 1e-05
    %v355 = vadd.f32 %v339, 1e-05
    %v356 = vadd.f32 %v340, 1e-05
    %v357 = vadd.f32 %v341, 1e-05
    %v358 = vadd.f32 %v342, 1e-05
    %v359 = vrsqrt.pop %v343
    %v360 = vrsqrt.pop %v344
    %v361 = vrsqrt.pop %v345
    %v362 = vrsqrt.pop %v346
    %v363 = vrsqrt.pop %v347
    %v364 = vrsqrt.pop %v348
    %v365 = vrsqrt.pop %v349
    %v366 = vrsqrt.pop %v350
    %v367 = vrsqrt.pop %v351
    %v368 = vrsqrt.pop %v352
    %v369 = vrsqrt.pop %v353
    %v370 = vrsqrt.pop %v354
    %v371 = vrsqrt.pop %v355
    %v372 = vrsqrt.pop %v356
    %v373 = vrsqrt.pop %v357
    %v374 = vrsqrt.pop %v358
    %v375 = vmul.f32 %v247, %v359
    %v376 = vmul.f32 %v248, %v360
    %v377 = vmul.f32 %v249, %v361
    %v378 = vmul.f32 %v250, %v362
    %v379 = vmul.f32 %v251, %v363
    %v380 = vmul.f32 %v252, %v364
    %v381 = vmul.f32 %v253, %v365
    %v382 = vmul.f32 %v254, %v366
    %v383 = vmul.f32 %v255, %v367
    %v384 = vmul.f32 %v256, %v368
    %v385 = vmul.f32 %v257, %v369
    %v386 = vmul.f32 %v258, %v370
    %v387 = vmul.f32 %v259, %v371
    %v388 = vmul.f32 %v260, %v372
    %v389 = vmul.f32 %v261, %v373
    %v390 = vmul.f32 %v262, %v374
    %v391 = vlaneseq
    %v392 = vshrl.u32 %v391, 7
    %v393 = vsub.s32 0, %v392
    %v394 = vrot.slane %v107, %v393
    %v395 = vmul.f32 %v375, %v394
    %v396 = vmul.f32 %v376, %v394
    %v397 = vmul.f32 %v377, %v394
    %v398 = vmul.f32 %v378, %v394
    %v399 = vmul.f32 %v379, %v394
    %v400 = vmul.f32 %v380, %v394
    %v401 = vmul.f32 %v381, %v394
    %v402 = vmul.f32 %v382, %v394
    %v403 = vmul.f32 %v383, %v394
    %v404 = vmul.f32 %v384, %v394
    %v405 = vmul.f32 %v385, %v394
    %v406 = vmul.f32 %v386, %v394
    %v407 = vmul.f32 %v387, %v394
    %v408 = vmul.f32 %v388, %v394
    %v409 = vmul.f32 %v389, %v394
    %v410 = vmul.f32 %v390, %v394
    %v411 = vlaneseq
    %v412 = vshrl.u32 %v411, 7
    %v413 = vsub.s32 1, %v412
    %v414 = vrot.slane %v107, %v413
    %v415 = vadd.f32 %v395, %v414
    %v416 = vadd.f32 %v396, %v414
    %v417 = vadd.f32 %v397, %v414
    %v418 = vadd.f32 %v398, %v414
    %v419 = vadd.f32 %v399, %v414
    %v420 = vadd.f32 %v400, %v414
    %v421 = vadd.f32 %v401, %v414
    %v422 = vadd.f32 %v402, %v414
    %v423 = vadd.f32 %v403, %v414
    %v424 = vadd.f32 %v404, %v414
    %v425 = vadd.f32 %v405, %v414
    %v426 = vadd.f32 %v406, %v414
    %v427 = vadd.f32 %v407, %v414
    %v428 = vadd.f32 %v408, %v414
    %v429 = vadd.f32 %v409, %v414
    %v430 = vadd.f32 %v410, %v414
    %v431 = vpack.c.bf16 %v416, %v415
    %v432 = vpack.c.bf16 %v418, %v417
    %v433 = vpack.c.bf16 %v420, %v419
    %v434 = vpack.c.bf16 %v422, %v421
    %v435 = vpack.c.bf16 %v424, %v423
    %v436 = vpack.c.bf16 %v426, %v425
    %v437 = vpack.c.bf16 %v428, %v427
    %v438 = vpack.c.bf16 %v430, %v429
    %v439 = vld [vmem:[#allocation7] sm:$0xf]
    %v440 = vld [vmem:[#allocation7 + $0x4] sm:$0xf]
    %v441 = vld [vmem:[#allocation7 + $0x8] sm:$0xf]
    %v442 = vld [vmem:[#allocation7 + $0xc] sm:$0xf]
    %v447 = vunpack.c.l.b16 %v439
    %v448 = vunpack.c.l.b16 %v440
    %v449 = vunpack.c.l.b16 %v441
    %v450 = vunpack.c.l.b16 %v442
    %v451 = vpack.c.b16 %v448, %v447
    %v452 = vpack.c.b16 %v450, %v449
    %v456 = vsel %vm181, %v431, 0
    %v459 = vsel %vm181, %v432, 0
    %v462 = vsel %vm181, %v433, 0
    %v465 = vsel %vm181, %v434, 0
    %v468 = vsel %vm181, %v435, 0
    %v471 = vsel %vm181, %v436, 0
    %v474 = vsel %vm181, %v437, 0
    %v477 = vsel %vm181, %v438, 0
    %479 = vmatprep.subr.bf16.mxu0 0
    %480 = vmatpush1.bf16.msra.mxu0 0
    %481 = vmatprep.subr.bf16.mxu0 0
    %482 = vmatpush1.bf16.msra.mxu0 0
    %483 = vmatprep.subr.bf16.mxu0 0
    %484 = vmatpush1.bf16.msra.mxu0 0
    %485 = vmatprep.subr.bf16.mxu0 0
    %486 = vmatpush1.bf16.msra.mxu0 0
    %487 = vmatprep.subr.bf16.mxu0 0
    %488 = vmatpush1.bf16.msra.mxu0 0
    %489 = vmatprep.subr.bf16.mxu0 0
    %490 = vmatpush1.bf16.msra.mxu0 0
    %491 = vmatprep.subr.bf16.mxu0 0
    %492 = vmatpush1.bf16.msra.mxu0 %v452
    %493 = vmatprep.subr.bf16.mxu0 0
    %494 = vmatpush1.bf16.msra.mxu0 %v451
    %495 = vmatprep.subr.bf16.mxu0 0
    %496 = vmatpush2.bf16.msra.mxu0 0
    %497 = vmatprep.subr.bf16.mxu0 0
    %498 = vmatpush2.bf16.msra.mxu0 0
    %499 = vmatprep.subr.bf16.mxu0 0
    %500 = vmatpush2.bf16.msra.mxu0 0
    %501 = vmatprep.subr.bf16.mxu0 0
    %502 = vmatpush2.bf16.msra.mxu0 0
    %503 = vmatprep.subr.bf16.mxu0 0
    %504 = vmatpush2.bf16.msra.mxu0 0
    %505 = vmatprep.subr.bf16.mxu0 0
    %506 = vmatpush2.bf16.msra.mxu0 0
    %507 = vmatprep.subr.bf16.mxu0 0
    %508 = vmatpush2.bf16.msra.mxu0 0
    %509 = vmatprep.subr.bf16.mxu0 0
    %510 = vmatpush2.bf16.msra.mxu0 0
    %511 = vmatprep.mubr.bf16.mxu0 0
    %512 = vmatmul.mubr.bf16.gmra.mxu0 %v456
    %v513 = vpop.f32.mrf.mxu0
    %v514 = vadd.f32 0.0, %v513
    %v515 = vpop.f32.mrf.mxu0
    %v516 = vpop.f32.mrf.mxu0
    %v517 = vadd.f32 0.0, %v516
    %v518 = vpop.f32.mrf.mxu0
    %519 = vmatprep.mubr.bf16.mxu0 0
    %520 = vmatmul.mubr.bf16.gmra.mxu0 %v459
    %v521 = vpop.f32.mrf.mxu0
    %v522 = vadd.f32 0.0, %v521
    %v523 = vpop.f32.mrf.mxu0
    %v524 = vpop.f32.mrf.mxu0
    %v525 = vadd.f32 0.0, %v524
    %v526 = vpop.f32.mrf.mxu0
    %527 = vmatprep.mubr.bf16.mxu0 0
    %528 = vmatmul.mubr.bf16.gmra.mxu0 %v462
    %v529 = vpop.f32.mrf.mxu0
    %v530 = vadd.f32 0.0, %v529
    %v531 = vpop.f32.mrf.mxu0
    %v532 = vpop.f32.mrf.mxu0
    %v533 = vadd.f32 0.0, %v532
    %v534 = vpop.f32.mrf.mxu0
    %535 = vmatprep.mubr.bf16.mxu0 0
    %536 = vmatmul.mubr.bf16.gmra.mxu0 %v465
    %v537 = vpop.f32.mrf.mxu0
    %v538 = vadd.f32 0.0, %v537
    %v539 = vpop.f32.mrf.mxu0
    %v540 = vpop.f32.mrf.mxu0
    %v541 = vadd.f32 0.0, %v540
    %v542 = vpop.f32.mrf.mxu0
    %543 = vmatprep.mubr.bf16.mxu0 0
    %544 = vmatmul.mubr.bf16.gmra.mxu0 %v468
    %v545 = vpop.f32.mrf.mxu0
    %v546 = vadd.f32 0.0, %v545
    %v547 = vpop.f32.mrf.mxu0
    %v548 = vpop.f32.mrf.mxu0
    %v549 = vadd.f32 0.0, %v548
    %v550 = vpop.f32.mrf.mxu0
    %551 = vmatprep.mubr.bf16.mxu0 0
    %552 = vmatmul.mubr.bf16.gmra.mxu0 %v471
    %v553 = vpop.f32.mrf.mxu0
    %v554 = vadd.f32 0.0, %v553
    %v555 = vpop.f32.mrf.mxu0
    %v556 = vpop.f32.mrf.mxu0
    %v557 = vadd.f32 0.0, %v556
    %v558 = vpop.f32.mrf.mxu0
    %559 = vmatprep.mubr.bf16.mxu0 0
    %560 = vmatmul.mubr.bf16.gmra.mxu0 %v474
    %v561 = vpop.f32.mrf.mxu0
    %v562 = vadd.f32 0.0, %v561
    %v563 = vpop.f32.mrf.mxu0
    %v564 = vpop.f32.mrf.mxu0
    %v565 = vadd.f32 0.0, %v564
    %v566 = vpop.f32.mrf.mxu0
    %567 = vmatprep.mubr.bf16.mxu0 0
    %568 = vmatmul.mubr.bf16.gmra.mxu0 %v477
    %v569 = vpop.f32.mrf.mxu0
    %v570 = vadd.f32 0.0, %v569
    %v571 = vpop.f32.mrf.mxu0
    %v572 = vpop.f32.mrf.mxu0
    %v573 = vadd.f32 0.0, %v572
    %v574 = vpop.f32.mrf.mxu0
    %575 = vdwg.mxu0
    %v576 = vlaneseq
    %v577 = vshrl.u32 %v576, 7
    %v578 = vsub.s32 2, %v577
    %v579 = vrot.slane %v107, %v578
    %v580 = vadd.f32 %v514, %v579
    %v581 = vadd.f32 %v517, %v579
    %v582 = vadd.f32 %v522, %v579
    %v583 = vadd.f32 %v525, %v579
    %v584 = vadd.f32 %v530, %v579
    %v585 = vadd.f32 %v533, %v579
    %v586 = vadd.f32 %v538, %v579
    %v587 = vadd.f32 %v541, %v579
    %v588 = vadd.f32 %v546, %v579
    %v589 = vadd.f32 %v549, %v579
    %v590 = vadd.f32 %v554, %v579
    %v591 = vadd.f32 %v557, %v579
    %v592 = vadd.f32 %v562, %v579
    %v593 = vadd.f32 %v565, %v579
    %v594 = vadd.f32 %v570, %v579
    %v595 = vadd.f32 %v573, %v579
    %v596 = vlaneseq
    %v597 = vshrl.u32 %v596, 7
    %v598 = vsub.s32 3, %v597
    %v599 = vrot.slane %v107, %v598
    %601 = vrot.lane.b32.xlu0 %v599, 32
    %v602 = vpop.permute.xlu0 %601
    %v604 = vadd.f32 %v514, %v602
    %v605 = vadd.f32 %v517, %v602
    %v606 = vadd.f32 %v522, %v602
    %v607 = vadd.f32 %v525, %v602
    %v608 = vadd.f32 %v530, %v602
    %v609 = vadd.f32 %v533, %v602
    %v610 = vadd.f32 %v538, %v602
    %v611 = vadd.f32 %v541, %v602
    %v612 = vadd.f32 %v546, %v602
    %v613 = vadd.f32 %v549, %v602
    %v614 = vadd.f32 %v554, %v602
    %v615 = vadd.f32 %v557, %v602
    %v616 = vadd.f32 %v562, %v602
    %v617 = vadd.f32 %v565, %v602
    %v618 = vadd.f32 %v570, %v602
    %v619 = vadd.f32 %v573, %v602
    %v620 = vlaneseq
    %v621 = vshrl.u32 %v620, 7
    %v622 = vsub.s32 4, %v621
    %v623 = vrot.slane %v107, %v622
    %625 = vrot.lane.b32.xlu0 %v623, 64
    %v626 = vpop.permute.xlu0 %625
    %v628 = vadd.f32 %v514, %v626
    %v629 = vadd.f32 %v517, %v626
    %v630 = vadd.f32 %v522, %v626
    %v631 = vadd.f32 %v525, %v626
    %v632 = vadd.f32 %v530, %v626
    %v633 = vadd.f32 %v533, %v626
    %v634 = vadd.f32 %v538, %v626
    %v635 = vadd.f32 %v541, %v626
    %v636 = vadd.f32 %v546, %v626
    %v637 = vadd.f32 %v549, %v626
    %v638 = vadd.f32 %v554, %v626
    %v639 = vadd.f32 %v557, %v626
    %v640 = vadd.f32 %v562, %v626
    %v641 = vadd.f32 %v565, %v626
    %v642 = vadd.f32 %v570, %v626
    %v643 = vadd.f32 %v573, %v626
    %v644 = vpack.c.bf16 %v581, %v580
    %v645 = vpack.c.bf16 %v583, %v582
    %v646 = vpack.c.bf16 %v585, %v584
    %v647 = vpack.c.bf16 %v587, %v586
    %v648 = vpack.c.bf16 %v589, %v588
    %v649 = vpack.c.bf16 %v591, %v590
    %v650 = vpack.c.bf16 %v593, %v592
    %v651 = vpack.c.bf16 %v595, %v594
    %v652 = vpack.c.bf16 %v605, %v604
    %v653 = vpack.c.bf16 %v607, %v606
    %v654 = vpack.c.bf16 %v609, %v608
    %v655 = vpack.c.bf16 %v611, %v610
    %v656 = vpack.c.bf16 %v613, %v612
    %v657 = vpack.c.bf16 %v615, %v614
    %v658 = vpack.c.bf16 %v617, %v616
    %v659 = vpack.c.bf16 %v619, %v618
    %v660 = vpack.c.bf16 %v629, %v628
    %v661 = vpack.c.bf16 %v631, %v630
    %v662 = vpack.c.bf16 %v633, %v632
    %v663 = vpack.c.bf16 %v635, %v634
    %v664 = vpack.c.bf16 %v637, %v636
    %v665 = vpack.c.bf16 %v639, %v638
    %v666 = vpack.c.bf16 %v641, %v640
    %v667 = vpack.c.bf16 %v643, %v642
    %672 = vrot.lane.b32.xlu0 %v652, 96
    %v673 = vpop.permute.xlu0 %672
    %674 = vrot.lane.b32.xlu0 %v653, 96
    %v675 = vpop.permute.xlu0 %674
    %676 = vrot.lane.b32.xlu0 %v654, 96
    %v677 = vpop.permute.xlu0 %676
    %678 = vrot.lane.b32.xlu0 %v655, 96
    %v679 = vpop.permute.xlu0 %678
    %vm680 = vcmask 64512
    %v682 = vsel %vm680, %v644, 0
    %v685 = vsel %vm680, %v645, 0
    %v688 = vsel %vm680, %v646, 0
    %v691 = vsel %vm680, %v647, 0
    %v694 = vsel %vm680, %v673, 0
    %v697 = vsel %vm680, %v675, 0
    %v700 = vsel %vm680, %v677, 0
    %v703 = vsel %vm680, %v679, 0
    %705 = vmatprep.subr.bf16.mxu0 0
    %706 = vmatpush1.bf16.xpose.msra.mxu0 0
    %707 = vmatprep.subr.bf16.mxu0 0
    %708 = vmatpush1.bf16.xpose.msra.mxu0 0
    %709 = vmatprep.subr.bf16.mxu0 0
    %710 = vmatpush1.bf16.xpose.msra.mxu0 0
    %711 = vmatprep.subr.bf16.mxu0 0
    %712 = vmatpush1.bf16.xpose.msra.mxu0 0
    %713 = vmatprep.subr.bf16.mxu0 0
    %714 = vmatpush1.bf16.xpose.msra.mxu0 %v703
    %715 = vmatprep.subr.bf16.mxu0 0
    %716 = vmatpush1.bf16.xpose.msra.mxu0 %v700
    %717 = vmatprep.subr.bf16.mxu0 0
    %718 = vmatpush1.bf16.xpose.msra.mxu0 %v697
    %719 = vmatprep.subr.bf16.mxu0 0
    %720 = vmatpush1.bf16.xpose.msra.mxu0 %v694
    %721 = vmatprep.subr.bf16.mxu0 0
    %722 = vmatpush2.bf16.xpose.msra.mxu0 0
    %723 = vmatprep.subr.bf16.mxu0 0
    %724 = vmatpush2.bf16.xpose.msra.mxu0 0
    %725 = vmatprep.subr.bf16.mxu0 0
    %726 = vmatpush2.bf16.xpose.msra.mxu0 0
    %727 = vmatprep.subr.bf16.mxu0 0
    %728 = vmatpush2.bf16.xpose.msra.mxu0 0
    %729 = vmatprep.subr.bf16.mxu0 0
    %730 = vmatpush2.bf16.xpose.msra.mxu0 0
    %731 = vmatprep.subr.bf16.mxu0 0
    %732 = vmatpush2.bf16.xpose.msra.mxu0 0
    %733 = vmatprep.subr.bf16.mxu0 0
    %734 = vmatpush2.bf16.xpose.msra.mxu0 0
    %735 = vmatprep.subr.bf16.mxu0 0
    %736 = vmatpush2.bf16.xpose.msra.mxu0 0
    %737 = vmatprep.mubr.bf16.mxu0 0
    %738 = vmatmul.mubr.bf16.gmra.mxu0 %v682
    %v739 = vpop.f32.mrf.mxu0
    %v740 = vadd.f32 0.0, %v739
    %v741 = vpop.f32.mrf.mxu0
    %v742 = vpop.f32.mrf.mxu0
    %v743 = vadd.f32 0.0, %v742
    %v744 = vpop.f32.mrf.mxu0
    %745 = vmatprep.mubr.bf16.mxu0 0
    %746 = vmatmul.mubr.bf16.gmra.mxu0 %v685
    %v747 = vpop.f32.mrf.mxu0
    %v748 = vadd.f32 0.0, %v747
    %v749 = vpop.f32.mrf.mxu0
    %v750 = vpop.f32.mrf.mxu0
    %v751 = vadd.f32 0.0, %v750
    %v752 = vpop.f32.mrf.mxu0
    %753 = vmatprep.mubr.bf16.mxu0 0
    %754 = vmatmul.mubr.bf16.gmra.mxu0 %v688
    %v755 = vpop.f32.mrf.mxu0
    %v756 = vadd.f32 0.0, %v755
    %v757 = vpop.f32.mrf.mxu0
    %v758 = vpop.f32.mrf.mxu0
    %v759 = vadd.f32 0.0, %v758
    %v760 = vpop.f32.mrf.mxu0
    %761 = vmatprep.mubr.bf16.mxu0 0
    %762 = vmatmul.mubr.bf16.gmra.mxu0 %v691
    %v763 = vpop.f32.mrf.mxu0
    %v764 = vadd.f32 0.0, %v763
    %v765 = vpop.f32.mrf.mxu0
    %v766 = vpop.f32.mrf.mxu0
    %v767 = vadd.f32 0.0, %v766
    %v768 = vpop.f32.mrf.mxu0
    %769 = vdwg.mxu0
    %774 = vrot.lane.b32.xlu0 %v656, 96
    %v775 = vpop.permute.xlu0 %774
    %776 = vrot.lane.b32.xlu0 %v657, 96
    %v777 = vpop.permute.xlu0 %776
    %778 = vrot.lane.b32.xlu0 %v658, 96
    %v779 = vpop.permute.xlu0 %778
    %780 = vrot.lane.b32.xlu0 %v659, 96
    %v781 = vpop.permute.xlu0 %780
    %v783 = vsel %vm680, %v648, 0
    %v786 = vsel %vm680, %v649, 0
    %v789 = vsel %vm680, %v650, 0
    %v792 = vsel %vm680, %v651, 0
    %v795 = vsel %vm680, %v775, 0
    %v798 = vsel %vm680, %v777, 0
    %v801 = vsel %vm680, %v779, 0
    %v804 = vsel %vm680, %v781, 0
    %806 = vmatprep.subr.bf16.mxu0 0
    %807 = vmatpush1.bf16.xpose.msra.mxu0 0
    %808 = vmatprep.subr.bf16.mxu0 0
    %809 = vmatpush1.bf16.xpose.msra.mxu0 0
    %810 = vmatprep.subr.bf16.mxu0 0
    %811 = vmatpush1.bf16.xpose.msra.mxu0 0
    %812 = vmatprep.subr.bf16.mxu0 0
    %813 = vmatpush1.bf16.xpose.msra.mxu0 0
    %814 = vmatprep.subr.bf16.mxu0 0
    %815 = vmatpush1.bf16.xpose.msra.mxu0 %v804
    %816 = vmatprep.subr.bf16.mxu0 0
    %817 = vmatpush1.bf16.xpose.msra.mxu0 %v801
    %818 = vmatprep.subr.bf16.mxu0 0
    %819 = vmatpush1.bf16.xpose.msra.mxu0 %v798
    %820 = vmatprep.subr.bf16.mxu0 0
    %821 = vmatpush1.bf16.xpose.msra.mxu0 %v795
    %822 = vmatprep.subr.bf16.mxu0 0
    %823 = vmatpush2.bf16.xpose.msra.mxu0 0
    %824 = vmatprep.subr.bf16.mxu0 0
    %825 = vmatpush2.bf16.xpose.msra.mxu0 0
    %826 = vmatprep.subr.bf16.mxu0 0
    %827 = vmatpush2.bf16.xpose.msra.mxu0 0
    %828 = vmatprep.subr.bf16.mxu0 0
    %829 = vmatpush2.bf16.xpose.msra.mxu0 0
    %830 = vmatprep.subr.bf16.mxu0 0
    %831 = vmatpush2.bf16.xpose.msra.mxu0 0
    %832 = vmatprep.subr.bf16.mxu0 0
    %833 = vmatpush2.bf16.xpose.msra.mxu0 0
    %834 = vmatprep.subr.bf16.mxu0 0
    %835 = vmatpush2.bf16.xpose.msra.mxu0 0
    %836 = vmatprep.subr.bf16.mxu0 0
    %837 = vmatpush2.bf16.xpose.msra.mxu0 0
    %838 = vmatprep.mubr.bf16.mxu0 0
    %839 = vmatmul.mubr.bf16.gmra.mxu0 %v783
    %v840 = vpop.f32.mrf.mxu0
    %v841 = vadd.f32 0.0, %v840
    %v842 = vpop.f32.mrf.mxu0
    %v843 = vpop.f32.mrf.mxu0
    %v844 = vadd.f32 0.0, %v843
    %v845 = vpop.f32.mrf.mxu0
    %846 = vmatprep.mubr.bf16.mxu0 0
    %847 = vmatmul.mubr.bf16.gmra.mxu0 %v786
    %v848 = vpop.f32.mrf.mxu0
    %v849 = vadd.f32 0.0, %v848
    %v850 = vpop.f32.mrf.mxu0
    %v851 = vpop.f32.mrf.mxu0
    %v852 = vadd.f32 0.0, %v851
    %v853 = vpop.f32.mrf.mxu0
    %854 = vmatprep.mubr.bf16.mxu0 0
    %855 = vmatmul.mubr.bf16.gmra.mxu0 %v789
    %v856 = vpop.f32.mrf.mxu0
    %v857 = vadd.f32 0.0, %v856
    %v858 = vpop.f32.mrf.mxu0
    %v859 = vpop.f32.mrf.mxu0
    %v860 = vadd.f32 0.0, %v859
    %v861 = vpop.f32.mrf.mxu0
    %862 = vmatprep.mubr.bf16.mxu0 0
    %863 = vmatmul.mubr.bf16.gmra.mxu0 %v792
    %v864 = vpop.f32.mrf.mxu0
    %v865 = vadd.f32 0.0, %v864
    %v866 = vpop.f32.mrf.mxu0
    %v867 = vpop.f32.mrf.mxu0
    %v868 = vadd.f32 0.0, %v867
    %v869 = vpop.f32.mrf.mxu0
    %870 = vdwg.mxu0
    %v871 = vmul.f32 %v740, 0.35355338
    %v872 = vmul.f32 %v743, 0.35355338
    %v873 = vmul.f32 %v748, 0.35355338
    %v874 = vmul.f32 %v751, 0.35355338
    %v875 = vmul.f32 %v756, 0.35355338
    %v876 = vmul.f32 %v759, 0.35355338
    %v877 = vmul.f32 %v764, 0.35355338
    %v878 = vmul.f32 %v767, 0.35355338
    %v879 = vmul.f32 %v841, 0.35355338
    %v880 = vmul.f32 %v844, 0.35355338
    %v881 = vmul.f32 %v849, 0.35355338
    %v882 = vmul.f32 %v852, 0.35355338
    %v883 = vmul.f32 %v857, 0.35355338
    %v884 = vmul.f32 %v860, 0.35355338
    %v885 = vmul.f32 %v865, 0.35355338
    %v886 = vmul.f32 %v868, 0.35355338
    %vm887 = vcmask 523264
    %v888 = vsel %vm887, %v871, -inf
    %889 = vmax.xlane.f32.xlu0 %v888
    %v890 = vpop.xlane.xlu0 %889
    %v891 = vsel %vm887, %v872, -inf
    %892 = vmax.xlane.f32.xlu0 %v891
    %v893 = vpop.xlane.xlu0 %892
    %v894 = vsel %vm887, %v873, -inf
    %895 = vmax.xlane.f32.xlu0 %v894
    %v896 = vpop.xlane.xlu0 %895
    %v897 = vsel %vm887, %v874, -inf
    %898 = vmax.xlane.f32.xlu0 %v897
    %v899 = vpop.xlane.xlu0 %898
    %v900 = vsel %vm887, %v875, -inf
    %901 = vmax.xlane.f32.xlu0 %v900
    %v902 = vpop.xlane.xlu0 %901
    %v903 = vsel %vm887, %v876, -inf
    %904 = vmax.xlane.f32.xlu0 %v903
    %v905 = vpop.xlane.xlu0 %904
    %v906 = vsel %vm887, %v877, -inf
    %907 = vmax.xlane.f32.xlu0 %v906
    %v908 = vpop.xlane.xlu0 %907
    %v909 = vsel %vm887, %v878, -inf
    %910 = vmax.xlane.f32.xlu0 %v909
    %v911 = vpop.xlane.xlu0 %910
    %v912 = vsel %vm887, %v879, -inf
    %913 = vmax.xlane.f32.xlu0 %v912
    %v914 = vpop.xlane.xlu0 %913
    %v915 = vsel %vm887, %v880, -inf
    %916 = vmax.xlane.f32.xlu0 %v915
    %v917 = vpop.xlane.xlu0 %916
    %v918 = vsel %vm887, %v881, -inf
    %919 = vmax.xlane.f32.xlu0 %v918
    %v920 = vpop.xlane.xlu0 %919
    %v921 = vsel %vm887, %v882, -inf
    %922 = vmax.xlane.f32.xlu0 %v921
    %v923 = vpop.xlane.xlu0 %922
    %v924 = vsel %vm887, %v883, -inf
    %925 = vmax.xlane.f32.xlu0 %v924
    %v926 = vpop.xlane.xlu0 %925
    %v927 = vsel %vm887, %v884, -inf
    %928 = vmax.xlane.f32.xlu0 %v927
    %v929 = vpop.xlane.xlu0 %928
    %v930 = vsel %vm887, %v885, -inf
    %931 = vmax.xlane.f32.xlu0 %v930
    %v932 = vpop.xlane.xlu0 %931
    %v933 = vsel %vm887, %v886, -inf
    %934 = vmax.xlane.f32.xlu0 %v933
    %v935 = vpop.xlane.xlu0 %934
    %v936 = vsub.f32 %v871, %v890
    %v937 = vsub.f32 %v872, %v893
    %v938 = vsub.f32 %v873, %v896
    %v939 = vsub.f32 %v874, %v899
    %v940 = vsub.f32 %v875, %v902
    %v941 = vsub.f32 %v876, %v905
    %v942 = vsub.f32 %v877, %v908
    %v943 = vsub.f32 %v878, %v911
    %v944 = vsub.f32 %v879, %v914
    %v945 = vsub.f32 %v880, %v917
    %v946 = vsub.f32 %v881, %v920
    %v947 = vsub.f32 %v882, %v923
    %v948 = vsub.f32 %v883, %v926
    %v949 = vsub.f32 %v884, %v929
    %v950 = vsub.f32 %v885, %v932
    %v951 = vsub.f32 %v886, %v935
    %v952 = vmul.f32 %v936, 1.442695
    %v953 = vpow.pop %v952
    %v954 = vmul.f32 %v937, 1.442695
    %v955 = vpow.pop %v954
    %v956 = vmul.f32 %v938, 1.442695
    %v957 = vpow.pop %v956
    %v958 = vmul.f32 %v939, 1.442695
    %v959 = vpow.pop %v958
    %v960 = vmul.f32 %v940, 1.442695
    %v961 = vpow.pop %v960
    %v962 = vmul.f32 %v941, 1.442695
    %v963 = vpow.pop %v962
    %v964 = vmul.f32 %v942, 1.442695
    %v965 = vpow.pop %v964
    %v966 = vmul.f32 %v943, 1.442695
    %v967 = vpow.pop %v966
    %v968 = vmul.f32 %v944, 1.442695
    %v969 = vpow.pop %v968
    %v970 = vmul.f32 %v945, 1.442695
    %v971 = vpow.pop %v970
    %v972 = vmul.f32 %v946, 1.442695
    %v973 = vpow.pop %v972
    %v974 = vmul.f32 %v947, 1.442695
    %v975 = vpow.pop %v974
    %v976 = vmul.f32 %v948, 1.442695
    %v977 = vpow.pop %v976
    %v978 = vmul.f32 %v949, 1.442695
    %v979 = vpow.pop %v978
    %v980 = vmul.f32 %v950, 1.442695
    %v981 = vpow.pop %v980
    %v982 = vmul.f32 %v951, 1.442695
    %v983 = vpow.pop %v982
    %v984 = vsel %vm887, %v953, 0.0
    %985 = vadd.xlane.f32.xlu0 %v984
    %v986 = vpop.xlane.xlu0 %985
    %v987 = vsel %vm887, %v955, 0.0
    %988 = vadd.xlane.f32.xlu0 %v987
    %v989 = vpop.xlane.xlu0 %988
    %v990 = vsel %vm887, %v957, 0.0
    %991 = vadd.xlane.f32.xlu0 %v990
    %v992 = vpop.xlane.xlu0 %991
    %v993 = vsel %vm887, %v959, 0.0
    %994 = vadd.xlane.f32.xlu0 %v993
    %v995 = vpop.xlane.xlu0 %994
    %v996 = vsel %vm887, %v961, 0.0
    %997 = vadd.xlane.f32.xlu0 %v996
    %v998 = vpop.xlane.xlu0 %997
    %v999 = vsel %vm887, %v963, 0.0
    %1000 = vadd.xlane.f32.xlu0 %v999
    %v1001 = vpop.xlane.xlu0 %1000
    %v1002 = vsel %vm887, %v965, 0.0
    %1003 = vadd.xlane.f32.xlu0 %v1002
    %v1004 = vpop.xlane.xlu0 %1003
    %v1005 = vsel %vm887, %v967, 0.0
    %1006 = vadd.xlane.f32.xlu0 %v1005
    %v1007 = vpop.xlane.xlu0 %1006
    %v1008 = vsel %vm887, %v969, 0.0
    %1009 = vadd.xlane.f32.xlu0 %v1008
    %v1010 = vpop.xlane.xlu0 %1009
    %v1011 = vsel %vm887, %v971, 0.0
    %1012 = vadd.xlane.f32.xlu0 %v1011
    %v1013 = vpop.xlane.xlu0 %1012
    %v1014 = vsel %vm887, %v973, 0.0
    %1015 = vadd.xlane.f32.xlu0 %v1014
    %v1016 = vpop.xlane.xlu0 %1015
    %v1017 = vsel %vm887, %v975, 0.0
    %1018 = vadd.xlane.f32.xlu0 %v1017
    %v1019 = vpop.xlane.xlu0 %1018
    %v1020 = vsel %vm887, %v977, 0.0
    %1021 = vadd.xlane.f32.xlu0 %v1020
    %v1022 = vpop.xlane.xlu0 %1021
    %v1023 = vsel %vm887, %v979, 0.0
    %1024 = vadd.xlane.f32.xlu0 %v1023
    %v1025 = vpop.xlane.xlu0 %1024
    %v1026 = vsel %vm887, %v981, 0.0
    %1027 = vadd.xlane.f32.xlu0 %v1026
    %v1028 = vpop.xlane.xlu0 %1027
    %v1029 = vsel %vm887, %v983, 0.0
    %1030 = vadd.xlane.f32.xlu0 %v1029
    %v1031 = vpop.xlane.xlu0 %1030
    %v1032 = vpack.c.bf16 %v955, %v953
    %v1033 = vpack.c.bf16 %v959, %v957
    %v1034 = vpack.c.bf16 %v963, %v961
    %v1035 = vpack.c.bf16 %v967, %v965
    %v1036 = vpack.c.bf16 %v971, %v969
    %v1037 = vpack.c.bf16 %v975, %v973
    %v1038 = vpack.c.bf16 %v979, %v977
    %v1039 = vpack.c.bf16 %v983, %v981
    %1044 = vrot.lane.b32.xlu0 %v660, 64
    %v1045 = vpop.permute.xlu0 %1044
    %1046 = vrot.lane.b32.xlu0 %v661, 64
    %v1047 = vpop.permute.xlu0 %1046
    %1048 = vrot.lane.b32.xlu0 %v662, 64
    %v1049 = vpop.permute.xlu0 %1048
    %1050 = vrot.lane.b32.xlu0 %v663, 64
    %v1051 = vpop.permute.xlu0 %1050
    %v1057 = vsel %vm887, %v1032, 0
    %v1060 = vsel %vm887, %v1033, 0
    %v1063 = vsel %vm887, %v1034, 0
    %v1066 = vsel %vm887, %v1035, 0
    %1068 = vmatprep.subr.bf16.mxu0 0
    %1069 = vmatpush1.bf16.msra.mxu0 0
    %1070 = vmatprep.subr.bf16.mxu0 0
    %1071 = vmatpush1.bf16.msra.mxu0 0
    %1072 = vmatprep.subr.bf16.mxu0 0
    %1073 = vmatpush1.bf16.msra.mxu0 0
    %1074 = vmatprep.subr.bf16.mxu0 0
    %1075 = vmatpush1.bf16.msra.mxu0 0
    %1076 = vmatprep.subr.bf16.mxu0 0
    %1077 = vmatpush1.bf16.msra.mxu0 %v1051
    %1078 = vmatprep.subr.bf16.mxu0 0
    %1079 = vmatpush1.bf16.msra.mxu0 %v1049
    %1080 = vmatprep.subr.bf16.mxu0 0
    %1081 = vmatpush1.bf16.msra.mxu0 %v1047
    %1082 = vmatprep.subr.bf16.mxu0 0
    %1083 = vmatpush1.bf16.msra.mxu0 %v1045
    %1084 = vmatprep.subr.bf16.mxu0 0
    %1085 = vmatpush2.bf16.msra.mxu0 0
    %1086 = vmatprep.subr.bf16.mxu0 0
    %1087 = vmatpush2.bf16.msra.mxu0 0
    %1088 = vmatprep.subr.bf16.mxu0 0
    %1089 = vmatpush2.bf16.msra.mxu0 0
    %1090 = vmatprep.subr.bf16.mxu0 0
    %1091 = vmatpush2.bf16.msra.mxu0 0
    %1092 = vmatprep.subr.bf16.mxu0 0
    %1093 = vmatpush2.bf16.msra.mxu0 0
    %1094 = vmatprep.subr.bf16.mxu0 0
    %1095 = vmatpush2.bf16.msra.mxu0 0
    %1096 = vmatprep.subr.bf16.mxu0 0
    %1097 = vmatpush2.bf16.msra.mxu0 0
    %1098 = vmatprep.subr.bf16.mxu0 0
    %1099 = vmatpush2.bf16.msra.mxu0 0
    %1100 = vmatprep.mubr.bf16.mxu0 0
    %1101 = vmatmul.mubr.bf16.gmra.mxu0 %v1057
    %v1102 = vpop.f32.mrf.mxu0
    %v1103 = vadd.f32 0.0, %v1102
    %v1104 = vpop.f32.mrf.mxu0
    %v1105 = vpop.f32.mrf.mxu0
    %v1106 = vadd.f32 0.0, %v1105
    %v1107 = vpop.f32.mrf.mxu0
    %1108 = vmatprep.mubr.bf16.mxu0 0
    %1109 = vmatmul.mubr.bf16.gmra.mxu0 %v1060
    %v1110 = vpop.f32.mrf.mxu0
    %v1111 = vadd.f32 0.0, %v1110
    %v1112 = vpop.f32.mrf.mxu0
    %v1113 = vpop.f32.mrf.mxu0
    %v1114 = vadd.f32 0.0, %v1113
    %v1115 = vpop.f32.mrf.mxu0
    %1116 = vmatprep.mubr.bf16.mxu0 0
    %1117 = vmatmul.mubr.bf16.gmra.mxu0 %v1063
    %v1118 = vpop.f32.mrf.mxu0
    %v1119 = vadd.f32 0.0, %v1118
    %v1120 = vpop.f32.mrf.mxu0
    %v1121 = vpop.f32.mrf.mxu0
    %v1122 = vadd.f32 0.0, %v1121
    %v1123 = vpop.f32.mrf.mxu0
    %1124 = vmatprep.mubr.bf16.mxu0 0
    %1125 = vmatmul.mubr.bf16.gmra.mxu0 %v1066
    %v1126 = vpop.f32.mrf.mxu0
    %v1127 = vadd.f32 0.0, %v1126
    %v1128 = vpop.f32.mrf.mxu0
    %v1129 = vpop.f32.mrf.mxu0
    %v1130 = vadd.f32 0.0, %v1129
    %v1131 = vpop.f32.mrf.mxu0
    %1132 = vdwg.mxu0
    %1137 = vrot.lane.b32.xlu0 %v664, 64
    %v1138 = vpop.permute.xlu0 %1137
    %1139 = vrot.lane.b32.xlu0 %v665, 64
    %v1140 = vpop.permute.xlu0 %1139
    %1141 = vrot.lane.b32.xlu0 %v666, 64
    %v1142 = vpop.permute.xlu0 %1141
    %1143 = vrot.lane.b32.xlu0 %v667, 64
    %v1144 = vpop.permute.xlu0 %1143
    %v1150 = vsel %vm887, %v1036, 0
    %v1153 = vsel %vm887, %v1037, 0
    %v1156 = vsel %vm887, %v1038, 0
    %v1159 = vsel %vm887, %v1039, 0
    %1161 = vmatprep.subr.bf16.mxu0 0
    %1162 = vmatpush1.bf16.msra.mxu0 0
    %1163 = vmatprep.subr.bf16.mxu0 0
    %1164 = vmatpush1.bf16.msra.mxu0 0
    %1165 = vmatprep.subr.bf16.mxu0 0
    %1166 = vmatpush1.bf16.msra.mxu0 0
    %1167 = vmatprep.subr.bf16.mxu0 0
    %1168 = vmatpush1.bf16.msra.mxu0 0
    %1169 = vmatprep.subr.bf16.mxu0 0
    %1170 = vmatpush1.bf16.msra.mxu0 %v1144
    %1171 = vmatprep.subr.bf16.mxu0 0
    %1172 = vmatpush1.bf16.msra.mxu0 %v1142
    %1173 = vmatprep.subr.bf16.mxu0 0
    %1174 = vmatpush1.bf16.msra.mxu0 %v1140
    %1175 = vmatprep.subr.bf16.mxu0 0
    %1176 = vmatpush1.bf16.msra.mxu0 %v1138
    %1177 = vmatprep.subr.bf16.mxu0 0
    %1178 = vmatpush2.bf16.msra.mxu0 0
    %1179 = vmatprep.subr.bf16.mxu0 0
    %1180 = vmatpush2.bf16.msra.mxu0 0
    %1181 = vmatprep.subr.bf16.mxu0 0
    %1182 = vmatpush2.bf16.msra.mxu0 0
    %1183 = vmatprep.subr.bf16.mxu0 0
    %1184 = vmatpush2.bf16.msra.mxu0 0
    %1185 = vmatprep.subr.bf16.mxu0 0
    %1186 = vmatpush2.bf16.msra.mxu0 0
    %1187 = vmatprep.subr.bf16.mxu0 0
    %1188 = vmatpush2.bf16.msra.mxu0 0
    %1189 = vmatprep.subr.bf16.mxu0 0
    %1190 = vmatpush2.bf16.msra.mxu0 0
    %1191 = vmatprep.subr.bf16.mxu0 0
    %1192 = vmatpush2.bf16.msra.mxu0 0
    %1193 = vmatprep.mubr.bf16.mxu0 0
    %1194 = vmatmul.mubr.bf16.gmra.mxu0 %v1150
    %v1195 = vpop.f32.mrf.mxu0
    %v1196 = vadd.f32 0.0, %v1195
    %v1197 = vpop.f32.mrf.mxu0
    %v1198 = vpop.f32.mrf.mxu0
    %v1199 = vadd.f32 0.0, %v1198
    %v1200 = vpop.f32.mrf.mxu0
    %1201 = vmatprep.mubr.bf16.mxu0 0
    %1202 = vmatmul.mubr.bf16.gmra.mxu0 %v1153
    %v1203 = vpop.f32.mrf.mxu0
    %v1204 = vadd.f32 0.0, %v1203
    %v1205 = vpop.f32.mrf.mxu0
    %v1206 = vpop.f32.mrf.mxu0
    %v1207 = vadd.f32 0.0, %v1206
    %v1208 = vpop.f32.mrf.mxu0
    %1209 = vmatprep.mubr.bf16.mxu0 0
    %1210 = vmatmul.mubr.bf16.gmra.mxu0 %v1156
    %v1211 = vpop.f32.mrf.mxu0
    %v1212 = vadd.f32 0.0, %v1211
    %v1213 = vpop.f32.mrf.mxu0
    %v1214 = vpop.f32.mrf.mxu0
    %v1215 = vadd.f32 0.0, %v1214
    %v1216 = vpop.f32.mrf.mxu0
    %1217 = vmatprep.mubr.bf16.mxu0 0
    %1218 = vmatmul.mubr.bf16.gmra.mxu0 %v1159
    %v1219 = vpop.f32.mrf.mxu0
    %v1220 = vadd.f32 0.0, %v1219
    %v1221 = vpop.f32.mrf.mxu0
    %v1222 = vpop.f32.mrf.mxu0
    %v1223 = vadd.f32 0.0, %v1222
    %v1224 = vpop.f32.mrf.mxu0
    %1225 = vdwg.mxu0
    %v1226 = vrcp.pop %v986
    %v1227 = vrcp.pop %v989
    %v1228 = vrcp.pop %v992
    %v1229 = vrcp.pop %v995
    %v1230 = vrcp.pop %v998
    %v1231 = vrcp.pop %v1001
    %v1232 = vrcp.pop %v1004
    %v1233 = vrcp.pop %v1007
    %v1234 = vrcp.pop %v1010
    %v1235 = vrcp.pop %v1013
    %v1236 = vrcp.pop %v1016
    %v1237 = vrcp.pop %v1019
    %v1238 = vrcp.pop %v1022
    %v1239 = vrcp.pop %v1025
    %v1240 = vrcp.pop %v1028
    %v1241 = vrcp.pop %v1031
    %v1242 = vmul.f32 %v1103, %v1226
    %v1243 = vmul.f32 %v1106, %v1227
    %v1244 = vmul.f32 %v1111, %v1228
    %v1245 = vmul.f32 %v1114, %v1229
    %v1246 = vmul.f32 %v1119, %v1230
    %v1247 = vmul.f32 %v1122, %v1231
    %v1248 = vmul.f32 %v1127, %v1232
    %v1249 = vmul.f32 %v1130, %v1233
    %v1250 = vmul.f32 %v1196, %v1234
    %v1251 = vmul.f32 %v1199, %v1235
    %v1252 = vmul.f32 %v1204, %v1236
    %v1253 = vmul.f32 %v1207, %v1237
    %v1254 = vmul.f32 %v1212, %v1238
    %v1255 = vmul.f32 %v1215, %v1239
    %v1256 = vmul.f32 %v1220, %v1240
    %v1257 = vmul.f32 %v1223, %v1241
    %1262 = vrot.lane.b32.xlu0 %v644, 120
    %v1263 = vpop.permute.xlu0 %1262
    %1264 = vrot.lane.b32.xlu0 %v645, 120
    %v1265 = vpop.permute.xlu0 %1264
    %1266 = vrot.lane.b32.xlu0 %v646, 120
    %v1267 = vpop.permute.xlu0 %1266
    %1268 = vrot.lane.b32.xlu0 %v647, 120
    %v1269 = vpop.permute.xlu0 %1268
    %1270 = vrot.lane.b32.xlu0 %v652, 88
    %v1271 = vpop.permute.xlu0 %1270
    %1272 = vrot.lane.b32.xlu0 %v653, 88
    %v1273 = vpop.permute.xlu0 %1272
    %1274 = vrot.lane.b32.xlu0 %v654, 88
    %v1275 = vpop.permute.xlu0 %1274
    %1276 = vrot.lane.b32.xlu0 %v655, 88
    %v1277 = vpop.permute.xlu0 %1276
    %v1279 = vsel %vm680, %v1263, 0
    %v1282 = vsel %vm680, %v1265, 0
    %v1285 = vsel %vm680, %v1267, 0
    %v1288 = vsel %vm680, %v1269, 0
    %v1291 = vsel %vm680, %v1271, 0
    %v1294 = vsel %vm680, %v1273, 0
    %v1297 = vsel %vm680, %v1275, 0
    %v1300 = vsel %vm680, %v1277, 0
    %1302 = vmatprep.subr.bf16.mxu0 0
    %1303 = vmatpush1.bf16.xpose.msra.mxu0 0
    %1304 = vmatprep.subr.bf16.mxu0 0
    %1305 = vmatpush1.bf16.xpose.msra.mxu0 0
    %1306 = vmatprep.subr.bf16.mxu0 0
    %1307 = vmatpush1.bf16.xpose.msra.mxu0 0
    %1308 = vmatprep.subr.bf16.mxu0 0
    %1309 = vmatpush1.bf16.xpose.msra.mxu0 0
    %1310 = vmatprep.subr.bf16.mxu0 0
    %1311 = vmatpush1.bf16.xpose.msra.mxu0 %v1300
    %1312 = vmatprep.subr.bf16.mxu0 0
    %1313 = vmatpush1.bf16.xpose.msra.mxu0 %v1297
    %1314 = vmatprep.subr.bf16.mxu0 0
    %1315 = vmatpush1.bf16.xpose.msra.mxu0 %v1294
    %1316 = vmatprep.subr.bf16.mxu0 0
    %1317 = vmatpush1.bf16.xpose.msra.mxu0 %v1291
    %1318 = vmatprep.subr.bf16.mxu0 0
    %1319 = vmatpush2.bf16.xpose.msra.mxu0 0
    %1320 = vmatprep.subr.bf16.mxu0 0
    %1321 = vmatpush2.bf16.xpose.msra.mxu0 0
    %1322 = vmatprep.subr.bf16.mxu0 0
    %1323 = vmatpush2.bf16.xpose.msra.mxu0 0
    %1324 = vmatprep.subr.bf16.mxu0 0
    %1325 = vmatpush2.bf16.xpose.msra.mxu0 0
    %1326 = vmatprep.subr.bf16.mxu0 0
    %1327 = vmatpush2.bf16.xpose.msra.mxu0 0
    %1328 = vmatprep.subr.bf16.mxu0 0
    %1329 = vmatpush2.bf16.xpose.msra.mxu0 0
    %1330 = vmatprep.subr.bf16.mxu0 0
    %1331 = vmatpush2.bf16.xpose.msra.mxu0 0
    %1332 = vmatprep.subr.bf16.mxu0 0
    %1333 = vmatpush2.bf16.xpose.msra.mxu0 0
    %1334 = vmatprep.mubr.bf16.mxu0 0
    %1335 = vmatmul.mubr.bf16.gmra.mxu0 %v1279
    %v1336 = vpop.f32.mrf.mxu0
    %v1337 = vadd.f32 0.0, %v1336
    %v1338 = vpop.f32.mrf.mxu0
    %v1339 = vpop.f32.mrf.mxu0
    %v1340 = vadd.f32 0.0, %v1339
    %v1341 = vpop.f32.mrf.mxu0
    %1342 = vmatprep.mubr.bf16.mxu0 0
    %1343 = vmatmul.mubr.bf16.gmra.mxu0 %v1282
    %v1344 = vpop.f32.mrf.mxu0
    %v1345 = vadd.f32 0.0, %v1344
    %v1346 = vpop.f32.mrf.mxu0
    %v1347 = vpop.f32.mrf.mxu0
    %v1348 = vadd.f32 0.0, %v1347
    %v1349 = vpop.f32.mrf.mxu0
    %1350 = vmatprep.mubr.bf16.mxu0 0
    %1351 = vmatmul.mubr.bf16.gmra.mxu0 %v1285
    %v1352 = vpop.f32.mrf.mxu0
    %v1353 = vadd.f32 0.0, %v1352
    %v1354 = vpop.f32.mrf.mxu0
    %v1355 = vpop.f32.mrf.mxu0
    %v1356 = vadd.f32 0.0, %v1355
    %v1357 = vpop.f32.mrf.mxu0
    %1358 = vmatprep.mubr.bf16.mxu0 0
    %1359 = vmatmul.mubr.bf16.gmra.mxu0 %v1288
    %v1360 = vpop.f32.mrf.mxu0
    %v1361 = vadd.f32 0.0, %v1360
    %v1362 = vpop.f32.mrf.mxu0
    %v1363 = vpop.f32.mrf.mxu0
    %v1364 = vadd.f32 0.0, %v1363
    %v1365 = vpop.f32.mrf.mxu0
    %1366 = vdwg.mxu0
    %1371 = vrot.lane.b32.xlu0 %v648, 120
    %v1372 = vpop.permute.xlu0 %1371
    %1373 = vrot.lane.b32.xlu0 %v649, 120
    %v1374 = vpop.permute.xlu0 %1373
    %1375 = vrot.lane.b32.xlu0 %v650, 120
    %v1376 = vpop.permute.xlu0 %1375
    %1377 = vrot.lane.b32.xlu0 %v651, 120
    %v1378 = vpop.permute.xlu0 %1377
    %1379 = vrot.lane.b32.xlu0 %v656, 88
    %v1380 = vpop.permute.xlu0 %1379
    %1381 = vrot.lane.b32.xlu0 %v657, 88
    %v1382 = vpop.permute.xlu0 %1381
    %1383 = vrot.lane.b32.xlu0 %v658, 88
    %v1384 = vpop.permute.xlu0 %1383
    %1385 = vrot.lane.b32.xlu0 %v659, 88
    %v1386 = vpop.permute.xlu0 %1385
    %v1388 = vsel %vm680, %v1372, 0
    %v1391 = vsel %vm680, %v1374, 0
    %v1394 = vsel %vm680, %v1376, 0
    %v1397 = vsel %vm680, %v1378, 0
    %v1400 = vsel %vm680, %v1380, 0
    %v1403 = vsel %vm680, %v1382, 0
    %v1406 = vsel %vm680, %v1384, 0
    %v1409 = vsel %vm680, %v1386, 0
    %1411 = vmatprep.subr.bf16.mxu0 0
    %1412 = vmatpush1.bf16.xpose.msra.mxu0 0
    %1413 = vmatprep.subr.bf16.mxu0 0
    %1414 = vmatpush1.bf16.xpose.msra.mxu0 0
    %1415 = vmatprep.subr.bf16.mxu0 0
    %1416 = vmatpush1.bf16.xpose.msra.mxu0 0
    %1417 = vmatprep.subr.bf16.mxu0 0
    %1418 = vmatpush1.bf16.xpose.msra.mxu0 0
    %1419 = vmatprep.subr.bf16.mxu0 0
    %1420 = vmatpush1.bf16.xpose.msra.mxu0 %v1409
    %1421 = vmatprep.subr.bf16.mxu0 0
    %1422 = vmatpush1.bf16.xpose.msra.mxu0 %v1406
    %1423 = vmatprep.subr.bf16.mxu0 0
    %1424 = vmatpush1.bf16.xpose.msra.mxu0 %v1403
    %1425 = vmatprep.subr.bf16.mxu0 0
    %1426 = vmatpush1.bf16.xpose.msra.mxu0 %v1400
    %1427 = vmatprep.subr.bf16.mxu0 0
    %1428 = vmatpush2.bf16.xpose.msra.mxu0 0
    %1429 = vmatprep.subr.bf16.mxu0 0
    %1430 = vmatpush2.bf16.xpose.msra.mxu0 0
    %1431 = vmatprep.subr.bf16.mxu0 0
    %1432 = vmatpush2.bf16.xpose.msra.mxu0 0
    %1433 = vmatprep.subr.bf16.mxu0 0
    %1434 = vmatpush2.bf16.xpose.msra.mxu0 0
    %1435 = vmatprep.subr.bf16.mxu0 0
    %1436 = vmatpush2.bf16.xpose.msra.mxu0 0
    %1437 = vmatprep.subr.bf16.mxu0 0
    %1438 = vmatpush2.bf16.xpose.msra.mxu0 0
    %1439 = vmatprep.subr.bf16.mxu0 0
    %1440 = vmatpush2.bf16.xpose.msra.mxu0 0
    %1441 = vmatprep.subr.bf16.mxu0 0
    %1442 = vmatpush2.bf16.xpose.msra.mxu0 0
    %1443 = vmatprep.mubr.bf16.mxu0 0
    %1444 = vmatmul.mubr.bf16.gmra.mxu0 %v1388
    %v1445 = vpop.f32.mrf.mxu0
    %v1446 = vadd.f32 0.0, %v1445
    %v1447 = vpop.f32.mrf.mxu0
    %v1448 = vpop.f32.mrf.mxu0
    %v1449 = vadd.f32 0.0, %v1448
    %v1450 = vpop.f32.mrf.mxu0
    %1451 = vmatprep.mubr.bf16.mxu0 0
    %1452 = vmatmul.mubr.bf16.gmra.mxu0 %v1391
    %v1453 = vpop.f32.mrf.mxu0
    %v1454 = vadd.f32 0.0, %v1453
    %v1455 = vpop.f32.mrf.mxu0
    %v1456 = vpop.f32.mrf.mxu0
    %v1457 = vadd.f32 0.0, %v1456
    %v1458 = vpop.f32.mrf.mxu0
    %1459 = vmatprep.mubr.bf16.mxu0 0
    %1460 = vmatmul.mubr.bf16.gmra.mxu0 %v1394
    %v1461 = vpop.f32.mrf.mxu0
    %v1462 = vadd.f32 0.0, %v1461
    %v1463 = vpop.f32.mrf.mxu0
    %v1464 = vpop.f32.mrf.mxu0
    %v1465 = vadd.f32 0.0, %v1464
    %v1466 = vpop.f32.mrf.mxu0
    %1467 = vmatprep.mubr.bf16.mxu0 0
    %1468 = vmatmul.mubr.bf16.gmra.mxu0 %v1397
    %v1469 = vpop.f32.mrf.mxu0
    %v1470 = vadd.f32 0.0, %v1469
    %v1471 = vpop.f32.mrf.mxu0
    %v1472 = vpop.f32.mrf.mxu0
    %v1473 = vadd.f32 0.0, %v1472
    %v1474 = vpop.f32.mrf.mxu0
    %1475 = vdwg.mxu0
    %v1476 = vmul.f32 %v1337, 0.35355338
    %v1477 = vmul.f32 %v1340, 0.35355338
    %v1478 = vmul.f32 %v1345, 0.35355338
    %v1479 = vmul.f32 %v1348, 0.35355338
    %v1480 = vmul.f32 %v1353, 0.35355338
    %v1481 = vmul.f32 %v1356, 0.35355338
    %v1482 = vmul.f32 %v1361, 0.35355338
    %v1483 = vmul.f32 %v1364, 0.35355338
    %v1484 = vmul.f32 %v1446, 0.35355338
    %v1485 = vmul.f32 %v1449, 0.35355338
    %v1486 = vmul.f32 %v1454, 0.35355338
    %v1487 = vmul.f32 %v1457, 0.35355338
    %v1488 = vmul.f32 %v1462, 0.35355338
    %v1489 = vmul.f32 %v1465, 0.35355338
    %v1490 = vmul.f32 %v1470, 0.35355338
    %v1491 = vmul.f32 %v1473, 0.35355338
    %v1492 = vsel %vm887, %v1476, -inf
    %1493 = vmax.xlane.f32.xlu0 %v1492
    %v1494 = vpop.xlane.xlu0 %1493
    %v1495 = vsel %vm887, %v1477, -inf
    %1496 = vmax.xlane.f32.xlu0 %v1495
    %v1497 = vpop.xlane.xlu0 %1496
    %v1498 = vsel %vm887, %v1478, -inf
    %1499 = vmax.xlane.f32.xlu0 %v1498
    %v1500 = vpop.xlane.xlu0 %1499
    %v1501 = vsel %vm887, %v1479, -inf
    %1502 = vmax.xlane.f32.xlu0 %v1501
    %v1503 = vpop.xlane.xlu0 %1502
    %v1504 = vsel %vm887, %v1480, -inf
    %1505 = vmax.xlane.f32.xlu0 %v1504
    %v1506 = vpop.xlane.xlu0 %1505
    %v1507 = vsel %vm887, %v1481, -inf
    %1508 = vmax.xlane.f32.xlu0 %v1507
    %v1509 = vpop.xlane.xlu0 %1508
    %v1510 = vsel %vm887, %v1482, -inf
    %1511 = vmax.xlane.f32.xlu0 %v1510
    %v1512 = vpop.xlane.xlu0 %1511
    %v1513 = vsel %vm887, %v1483, -inf
    %1514 = vmax.xlane.f32.xlu0 %v1513
    %v1515 = vpop.xlane.xlu0 %1514
    %v1516 = vsel %vm887, %v1484, -inf
    %1517 = vmax.xlane.f32.xlu0 %v1516
    %v1518 = vpop.xlane.xlu0 %1517
    %v1519 = vsel %vm887, %v1485, -inf
    %1520 = vmax.xlane.f32.xlu0 %v1519
    %v1521 = vpop.xlane.xlu0 %1520
    %v1522 = vsel %vm887, %v1486, -inf
    %1523 = vmax.xlane.f32.xlu0 %v1522
    %v1524 = vpop.xlane.xlu0 %1523
    %v1525 = vsel %vm887, %v1487, -inf
    %1526 = vmax.xlane.f32.xlu0 %v1525
    %v1527 = vpop.xlane.xlu0 %1526
    %v1528 = vsel %vm887, %v1488, -inf
    %1529 = vmax.xlane.f32.xlu0 %v1528
    %v1530 = vpop.xlane.xlu0 %1529
    %v1531 = vsel %vm887, %v1489, -inf
    %1532 = vmax.xlane.f32.xlu0 %v1531
    %v1533 = vpop.xlane.xlu0 %1532
    %v1534 = vsel %vm887, %v1490, -inf
    %1535 = vmax.xlane.f32.xlu0 %v1534
    %v1536 = vpop.xlane.xlu0 %1535
    %v1537 = vsel %vm887, %v1491, -inf
    %1538 = vmax.xlane.f32.xlu0 %v1537
    %v1539 = vpop.xlane.xlu0 %1538
    %v1540 = vsub.f32 %v1476, %v1494
    %v1541 = vsub.f32 %v1477, %v1497
    %v1542 = vsub.f32 %v1478, %v1500
    %v1543 = vsub.f32 %v1479, %v1503
    %v1544 = vsub.f32 %v1480, %v1506
    %v1545 = vsub.f32 %v1481, %v1509
    %v1546 = vsub.f32 %v1482, %v1512
    %v1547 = vsub.f32 %v1483, %v1515
    %v1548 = vsub.f32 %v1484, %v1518
    %v1549 = vsub.f32 %v1485, %v1521
    %v1550 = vsub.f32 %v1486, %v1524
    %v1551 = vsub.f32 %v1487, %v1527
    %v1552 = vsub.f32 %v1488, %v1530
    %v1553 = vsub.f32 %v1489, %v1533
    %v1554 = vsub.f32 %v1490, %v1536
    %v1555 = vsub.f32 %v1491, %v1539
    %v1556 = vmul.f32 %v1540, 1.442695
    %v1557 = vpow.pop %v1556
    %v1558 = vmul.f32 %v1541, 1.442695
    %v1559 = vpow.pop %v1558
    %v1560 = vmul.f32 %v1542, 1.442695
    %v1561 = vpow.pop %v1560
    %v1562 = vmul.f32 %v1543, 1.442695
    %v1563 = vpow.pop %v1562
    %v1564 = vmul.f32 %v1544, 1.442695
    %v1565 = vpow.pop %v1564
    %v1566 = vmul.f32 %v1545, 1.442695
    %v1567 = vpow.pop %v1566
    %v1568 = vmul.f32 %v1546, 1.442695
    %v1569 = vpow.pop %v1568
    %v1570 = vmul.f32 %v1547, 1.442695
    %v1571 = vpow.pop %v1570
    %v1572 = vmul.f32 %v1548, 1.442695
    %v1573 = vpow.pop %v1572
    %v1574 = vmul.f32 %v1549, 1.442695
    %v1575 = vpow.pop %v1574
    %v1576 = vmul.f32 %v1550, 1.442695
    %v1577 = vpow.pop %v1576
    %v1578 = vmul.f32 %v1551, 1.442695
    %v1579 = vpow.pop %v1578
    %v1580 = vmul.f32 %v1552, 1.442695
    %v1581 = vpow.pop %v1580
    %v1582 = vmul.f32 %v1553, 1.442695
    %v1583 = vpow.pop %v1582
    %v1584 = vmul.f32 %v1554, 1.442695
    %v1585 = vpow.pop %v1584
    %v1586 = vmul.f32 %v1555, 1.442695
    %v1587 = vpow.pop %v1586
    %v1588 = vsel %vm887, %v1557, 0.0
    %1589 = vadd.xlane.f32.xlu0 %v1588
    %v1590 = vpop.xlane.xlu0 %1589
    %v1591 = vsel %vm887, %v1559, 0.0
    %1592 = vadd.xlane.f32.xlu0 %v1591
    %v1593 = vpop.xlane.xlu0 %1592
    %v1594 = vsel %vm887, %v1561, 0.0
    %1595 = vadd.xlane.f32.xlu0 %v1594
    %v1596 = vpop.xlane.xlu0 %1595
    %v1597 = vsel %vm887, %v1563, 0.0
    %1598 = vadd.xlane.f32.xlu0 %v1597
    %v1599 = vpop.xlane.xlu0 %1598
    %v1600 = vsel %vm887, %v1565, 0.0
    %1601 = vadd.xlane.f32.xlu0 %v1600
    %v1602 = vpop.xlane.xlu0 %1601
    %v1603 = vsel %vm887, %v1567, 0.0
    %1604 = vadd.xlane.f32.xlu0 %v1603
    %v1605 = vpop.xlane.xlu0 %1604
    %v1606 = vsel %vm887, %v1569, 0.0
    %1607 = vadd.xlane.f32.xlu0 %v1606
    %v1608 = vpop.xlane.xlu0 %1607
    %v1609 = vsel %vm887, %v1571, 0.0
    %1610 = vadd.xlane.f32.xlu0 %v1609
    %v1611 = vpop.xlane.xlu0 %1610
    %v1612 = vsel %vm887, %v1573, 0.0
    %1613 = vadd.xlane.f32.xlu0 %v1612
    %v1614 = vpop.xlane.xlu0 %1613
    %v1615 = vsel %vm887, %v1575, 0.0
    %1616 = vadd.xlane.f32.xlu0 %v1615
    %v1617 = vpop.xlane.xlu0 %1616
    %v1618 = vsel %vm887, %v1577, 0.0
    %1619 = vadd.xlane.f32.xlu0 %v1618
    %v1620 = vpop.xlane.xlu0 %1619
    %v1621 = vsel %vm887, %v1579, 0.0
    %1622 = vadd.xlane.f32.xlu0 %v1621
    %v1623 = vpop.xlane.xlu0 %1622
    %v1624 = vsel %vm887, %v1581, 0.0
    %1625 = vadd.xlane.f32.xlu0 %v1624
    %v1626 = vpop.xlane.xlu0 %1625
    %v1627 = vsel %vm887, %v1583, 0.0
    %1628 = vadd.xlane.f32.xlu0 %v1627
    %v1629 = vpop.xlane.xlu0 %1628
    %v1630 = vsel %vm887, %v1585, 0.0
    %1631 = vadd.xlane.f32.xlu0 %v1630
    %v1632 = vpop.xlane.xlu0 %1631
    %v1633 = vsel %vm887, %v1587, 0.0
    %1634 = vadd.xlane.f32.xlu0 %v1633
    %v1635 = vpop.xlane.xlu0 %1634
    %v1636 = vpack.c.bf16 %v1559, %v1557
    %v1637 = vpack.c.bf16 %v1563, %v1561
    %v1638 = vpack.c.bf16 %v1567, %v1565
    %v1639 = vpack.c.bf16 %v1571, %v1569
    %v1640 = vpack.c.bf16 %v1575, %v1573
    %v1641 = vpack.c.bf16 %v1579, %v1577
    %v1642 = vpack.c.bf16 %v1583, %v1581
    %v1643 = vpack.c.bf16 %v1587, %v1585
    %1644 = vrot.lane.b32.xlu0 %v660, 56
    %v1645 = vpop.permute.xlu0 %1644
    %1646 = vrot.lane.b32.xlu0 %v661, 56
    %v1647 = vpop.permute.xlu0 %1646
    %1648 = vrot.lane.b32.xlu0 %v662, 56
    %v1649 = vpop.permute.xlu0 %1648
    %1650 = vrot.lane.b32.xlu0 %v663, 56
    %v1651 = vpop.permute.xlu0 %1650
    %v1657 = vsel %vm887, %v1636, 0
    %v1660 = vsel %vm887, %v1637, 0
    %v1663 = vsel %vm887, %v1638, 0
    %v1666 = vsel %vm887, %v1639, 0
    %1668 = vmatprep.subr.bf16.mxu0 0
    %1669 = vmatpush1.bf16.msra.mxu0 0
    %1670 = vmatprep.subr.bf16.mxu0 0
    %1671 = vmatpush1.bf16.msra.mxu0 0
    %1672 = vmatprep.subr.bf16.mxu0 0
    %1673 = vmatpush1.bf16.msra.mxu0 0
    %1674 = vmatprep.subr.bf16.mxu0 0
    %1675 = vmatpush1.bf16.msra.mxu0 0
    %1676 = vmatprep.subr.bf16.mxu0 0
    %1677 = vmatpush1.bf16.msra.mxu0 %v1651
    %1678 = vmatprep.subr.bf16.mxu0 0
    %1679 = vmatpush1.bf16.msra.mxu0 %v1649
    %1680 = vmatprep.subr.bf16.mxu0 0
    %1681 = vmatpush1.bf16.msra.mxu0 %v1647
    %1682 = vmatprep.subr.bf16.mxu0 0
    %1683 = vmatpush1.bf16.msra.mxu0 %v1645
    %1684 = vmatprep.subr.bf16.mxu0 0
    %1685 = vmatpush2.bf16.msra.mxu0 0
    %1686 = vmatprep.subr.bf16.mxu0 0
    %1687 = vmatpush2.bf16.msra.mxu0 0
    %1688 = vmatprep.subr.bf16.mxu0 0
    %1689 = vmatpush2.bf16.msra.mxu0 0
    %1690 = vmatprep.subr.bf16.mxu0 0
    %1691 = vmatpush2.bf16.msra.mxu0 0
    %1692 = vmatprep.subr.bf16.mxu0 0
    %1693 = vmatpush2.bf16.msra.mxu0 0
    %1694 = vmatprep.subr.bf16.mxu0 0
    %1695 = vmatpush2.bf16.msra.mxu0 0
    %1696 = vmatprep.subr.bf16.mxu0 0
    %1697 = vmatpush2.bf16.msra.mxu0 0
    %1698 = vmatprep.subr.bf16.mxu0 0
    %1699 = vmatpush2.bf16.msra.mxu0 0
    %1700 = vmatprep.mubr.bf16.mxu0 0
    %1701 = vmatmul.mubr.bf16.gmra.mxu0 %v1657
    %v1702 = vpop.f32.mrf.mxu0
    %v1703 = vadd.f32 0.0, %v1702
    %v1704 = vpop.f32.mrf.mxu0
    %v1705 = vpop.f32.mrf.mxu0
    %v1706 = vadd.f32 0.0, %v1705
    %v1707 = vpop.f32.mrf.mxu0
    %1708 = vmatprep.mubr.bf16.mxu0 0
    %1709 = vmatmul.mubr.bf16.gmra.mxu0 %v1660
    %v1710 = vpop.f32.mrf.mxu0
    %v1711 = vadd.f32 0.0, %v1710
    %v1712 = vpop.f32.mrf.mxu0
    %v1713 = vpop.f32.mrf.mxu0
    %v1714 = vadd.f32 0.0, %v1713
    %v1715 = vpop.f32.mrf.mxu0
    %1716 = vmatprep.mubr.bf16.mxu0 0
    %1717 = vmatmul.mubr.bf16.gmra.mxu0 %v1663
    %v1718 = vpop.f32.mrf.mxu0
    %v1719 = vadd.f32 0.0, %v1718
    %v1720 = vpop.f32.mrf.mxu0
    %v1721 = vpop.f32.mrf.mxu0
    %v1722 = vadd.f32 0.0, %v1721
    %v1723 = vpop.f32.mrf.mxu0
    %1724 = vmatprep.mubr.bf16.mxu0 0
    %1725 = vmatmul.mubr.bf16.gmra.mxu0 %v1666
    %v1726 = vpop.f32.mrf.mxu0
    %v1727 = vadd.f32 0.0, %v1726
    %v1728 = vpop.f32.mrf.mxu0
    %v1729 = vpop.f32.mrf.mxu0
    %v1730 = vadd.f32 0.0, %v1729
    %v1731 = vpop.f32.mrf.mxu0
    %1732 = vdwg.mxu0
    %1733 = vrot.lane.b32.xlu0 %v664, 56
    %v1734 = vpop.permute.xlu0 %1733
    %1735 = vrot.lane.b32.xlu0 %v665, 56
    %v1736 = vpop.permute.xlu0 %1735
    %1737 = vrot.lane.b32.xlu0 %v666, 56
    %v1738 = vpop.permute.xlu0 %1737
    %1739 = vrot.lane.b32.xlu0 %v667, 56
    %v1740 = vpop.permute.xlu0 %1739
    %v1746 = vsel %vm887, %v1640, 0
    %v1749 = vsel %vm887, %v1641, 0
    %v1752 = vsel %vm887, %v1642, 0
    %v1755 = vsel %vm887, %v1643, 0
    %1757 = vmatprep.subr.bf16.mxu0 0
    %1758 = vmatpush1.bf16.msra.mxu0 0
    %1759 = vmatprep.subr.bf16.mxu0 0
    %1760 = vmatpush1.bf16.msra.mxu0 0
    %1761 = vmatprep.subr.bf16.mxu0 0
    %1762 = vmatpush1.bf16.msra.mxu0 0
    %1763 = vmatprep.subr.bf16.mxu0 0
    %1764 = vmatpush1.bf16.msra.mxu0 0
    %1765 = vmatprep.subr.bf16.mxu0 0
    %1766 = vmatpush1.bf16.msra.mxu0 %v1740
    %1767 = vmatprep.subr.bf16.mxu0 0
    %1768 = vmatpush1.bf16.msra.mxu0 %v1738
    %1769 = vmatprep.subr.bf16.mxu0 0
    %1770 = vmatpush1.bf16.msra.mxu0 %v1736
    %1771 = vmatprep.subr.bf16.mxu0 0
    %1772 = vmatpush1.bf16.msra.mxu0 %v1734
    %1773 = vmatprep.subr.bf16.mxu0 0
    %1774 = vmatpush2.bf16.msra.mxu0 0
    %1775 = vmatprep.subr.bf16.mxu0 0
    %1776 = vmatpush2.bf16.msra.mxu0 0
    %1777 = vmatprep.subr.bf16.mxu0 0
    %1778 = vmatpush2.bf16.msra.mxu0 0
    %1779 = vmatprep.subr.bf16.mxu0 0
    %1780 = vmatpush2.bf16.msra.mxu0 0
    %1781 = vmatprep.subr.bf16.mxu0 0
    %1782 = vmatpush2.bf16.msra.mxu0 0
    %1783 = vmatprep.subr.bf16.mxu0 0
    %1784 = vmatpush2.bf16.msra.mxu0 0
    %1785 = vmatprep.subr.bf16.mxu0 0
    %1786 = vmatpush2.bf16.msra.mxu0 0
    %1787 = vmatprep.subr.bf16.mxu0 0
    %1788 = vmatpush2.bf16.msra.mxu0 0
    %1789 = vmatprep.mubr.bf16.mxu0 0
    %1790 = vmatmul.mubr.bf16.gmra.mxu0 %v1746
    %v1791 = vpop.f32.mrf.mxu0
    %v1792 = vadd.f32 0.0, %v1791
    %v1793 = vpop.f32.mrf.mxu0
    %v1794 = vpop.f32.mrf.mxu0
    %v1795 = vadd.f32 0.0, %v1794
    %v1796 = vpop.f32.mrf.mxu0
    %1797 = vmatprep.mubr.bf16.mxu0 0
    %1798 = vmatmul.mubr.bf16.gmra.mxu0 %v1749
    %v1799 = vpop.f32.mrf.mxu0
    %v1800 = vadd.f32 0.0, %v1799
    %v1801 = vpop.f32.mrf.mxu0
    %v1802 = vpop.f32.mrf.mxu0
    %v1803 = vadd.f32 0.0, %v1802
    %v1804 = vpop.f32.mrf.mxu0
    %1805 = vmatprep.mubr.bf16.mxu0 0
    %1806 = vmatmul.mubr.bf16.gmra.mxu0 %v1752
    %v1807 = vpop.f32.mrf.mxu0
    %v1808 = vadd.f32 0.0, %v1807
    %v1809 = vpop.f32.mrf.mxu0
    %v1810 = vpop.f32.mrf.mxu0
    %v1811 = vadd.f32 0.0, %v1810
    %v1812 = vpop.f32.mrf.mxu0
    %1813 = vmatprep.mubr.bf16.mxu0 0
    %1814 = vmatmul.mubr.bf16.gmra.mxu0 %v1755
    %v1815 = vpop.f32.mrf.mxu0
    %v1816 = vadd.f32 0.0, %v1815
    %v1817 = vpop.f32.mrf.mxu0
    %v1818 = vpop.f32.mrf.mxu0
    %v1819 = vadd.f32 0.0, %v1818
    %v1820 = vpop.f32.mrf.mxu0
    %1821 = vdwg.mxu0
    %v1822 = vrcp.pop %v1590
    %v1823 = vrcp.pop %v1593
    %v1824 = vrcp.pop %v1596
    %v1825 = vrcp.pop %v1599
    %v1826 = vrcp.pop %v1602
    %v1827 = vrcp.pop %v1605
    %v1828 = vrcp.pop %v1608
    %v1829 = vrcp.pop %v1611
    %v1830 = vrcp.pop %v1614
    %v1831 = vrcp.pop %v1617
    %v1832 = vrcp.pop %v1620
    %v1833 = vrcp.pop %v1623
    %v1834 = vrcp.pop %v1626
    %v1835 = vrcp.pop %v1629
    %v1836 = vrcp.pop %v1632
    %v1837 = vrcp.pop %v1635
    %v1838 = vmul.f32 %v1703, %v1822
    %v1839 = vmul.f32 %v1706, %v1823
    %v1840 = vmul.f32 %v1711, %v1824
    %v1841 = vmul.f32 %v1714, %v1825
    %v1842 = vmul.f32 %v1719, %v1826
    %v1843 = vmul.f32 %v1722, %v1827
    %v1844 = vmul.f32 %v1727, %v1828
    %v1845 = vmul.f32 %v1730, %v1829
    %v1846 = vmul.f32 %v1792, %v1830
    %v1847 = vmul.f32 %v1795, %v1831
    %v1848 = vmul.f32 %v1800, %v1832
    %v1849 = vmul.f32 %v1803, %v1833
    %v1850 = vmul.f32 %v1808, %v1834
    %v1851 = vmul.f32 %v1811, %v1835
    %v1852 = vmul.f32 %v1816, %v1836
    %v1853 = vmul.f32 %v1819, %v1837
    %1854 = vrot.lane.b32.xlu0 %v644, 112
    %v1855 = vpop.permute.xlu0 %1854
    %1856 = vrot.lane.b32.xlu0 %v645, 112
    %v1857 = vpop.permute.xlu0 %1856
    %1858 = vrot.lane.b32.xlu0 %v646, 112
    %v1859 = vpop.permute.xlu0 %1858
    %1860 = vrot.lane.b32.xlu0 %v647, 112
    %v1861 = vpop.permute.xlu0 %1860
    %1862 = vrot.lane.b32.xlu0 %v652, 80
    %v1863 = vpop.permute.xlu0 %1862
    %1864 = vrot.lane.b32.xlu0 %v653, 80
    %v1865 = vpop.permute.xlu0 %1864
    %1866 = vrot.lane.b32.xlu0 %v654, 80
    %v1867 = vpop.permute.xlu0 %1866
    %1868 = vrot.lane.b32.xlu0 %v655, 80
    %v1869 = vpop.permute.xlu0 %1868
    %v1871 = vsel %vm680, %v1855, 0
    %v1874 = vsel %vm680, %v1857, 0
    %v1877 = vsel %vm680, %v1859, 0
    %v1880 = vsel %vm680, %v1861, 0
    %v1883 = vsel %vm680, %v1863, 0
    %v1886 = vsel %vm680, %v1865, 0
    %v1889 = vsel %vm680, %v1867, 0
    %v1892 = vsel %vm680, %v1869, 0
    %1894 = vmatprep.subr.bf16.mxu0 0
    %1895 = vmatpush1.bf16.xpose.msra.mxu0 0
    %1896 = vmatprep.subr.bf16.mxu0 0
    %1897 = vmatpush1.bf16.xpose.msra.mxu0 0
    %1898 = vmatprep.subr.bf16.mxu0 0
    %1899 = vmatpush1.bf16.xpose.msra.mxu0 0
    %1900 = vmatprep.subr.bf16.mxu0 0
    %1901 = vmatpush1.bf16.xpose.msra.mxu0 0
    %1902 = vmatprep.subr.bf16.mxu0 0
    %1903 = vmatpush1.bf16.xpose.msra.mxu0 %v1892
    %1904 = vmatprep.subr.bf16.mxu0 0
    %1905 = vmatpush1.bf16.xpose.msra.mxu0 %v1889
    %1906 = vmatprep.subr.bf16.mxu0 0
    %1907 = vmatpush1.bf16.xpose.msra.mxu0 %v1886
    %1908 = vmatprep.subr.bf16.mxu0 0
    %1909 = vmatpush1.bf16.xpose.msra.mxu0 %v1883
    %1910 = vmatprep.subr.bf16.mxu0 0
    %1911 = vmatpush2.bf16.xpose.msra.mxu0 0
    %1912 = vmatprep.subr.bf16.mxu0 0
    %1913 = vmatpush2.bf16.xpose.msra.mxu0 0
    %1914 = vmatprep.subr.bf16.mxu0 0
    %1915 = vmatpush2.bf16.xpose.msra.mxu0 0
    %1916 = vmatprep.subr.bf16.mxu0 0
    %1917 = vmatpush2.bf16.xpose.msra.mxu0 0
    %1918 = vmatprep.subr.bf16.mxu0 0
    %1919 = vmatpush2.bf16.xpose.msra.mxu0 0
    %1920 = vmatprep.subr.bf16.mxu0 0
    %1921 = vmatpush2.bf16.xpose.msra.mxu0 0
    %1922 = vmatprep.subr.bf16.mxu0 0
    %1923 = vmatpush2.bf16.xpose.msra.mxu0 0
    %1924 = vmatprep.subr.bf16.mxu0 0
    %1925 = vmatpush2.bf16.xpose.msra.mxu0 0
    %1926 = vmatprep.mubr.bf16.mxu0 0
    %1927 = vmatmul.mubr.bf16.gmra.mxu0 %v1871
    %v1928 = vpop.f32.mrf.mxu0
    %v1929 = vadd.f32 0.0, %v1928
    %v1930 = vpop.f32.mrf.mxu0
    %v1931 = vpop.f32.mrf.mxu0
    %v1932 = vadd.f32 0.0, %v1931
    %v1933 = vpop.f32.mrf.mxu0
    %1934 = vmatprep.mubr.bf16.mxu0 0
    %1935 = vmatmul.mubr.bf16.gmra.mxu0 %v1874
    %v1936 = vpop.f32.mrf.mxu0
    %v1937 = vadd.f32 0.0, %v1936
    %v1938 = vpop.f32.mrf.mxu0
    %v1939 = vpop.f32.mrf.mxu0
    %v1940 = vadd.f32 0.0, %v1939
    %v1941 = vpop.f32.mrf.mxu0
    %1942 = vmatprep.mubr.bf16.mxu0 0
    %1943 = vmatmul.mubr.bf16.gmra.mxu0 %v1877
    %v1944 = vpop.f32.mrf.mxu0
    %v1945 = vadd.f32 0.0, %v1944
    %v1946 = vpop.f32.mrf.mxu0
    %v1947 = vpop.f32.mrf.mxu0
    %v1948 = vadd.f32 0.0, %v1947
    %v1949 = vpop.f32.mrf.mxu0
    %1950 = vmatprep.mubr.bf16.mxu0 0
    %1951 = vmatmul.mubr.bf16.gmra.mxu0 %v1880
    %v1952 = vpop.f32.mrf.mxu0
    %v1953 = vadd.f32 0.0, %v1952
    %v1954 = vpop.f32.mrf.mxu0
    %v1955 = vpop.f32.mrf.mxu0
    %v1956 = vadd.f32 0.0, %v1955
    %v1957 = vpop.f32.mrf.mxu0
    %1958 = vdwg.mxu0
    %1959 = vrot.lane.b32.xlu0 %v648, 112
    %v1960 = vpop.permute.xlu0 %1959
    %1961 = vrot.lane.b32.xlu0 %v649, 112
    %v1962 = vpop.permute.xlu0 %1961
    %1963 = vrot.lane.b32.xlu0 %v650, 112
    %v1964 = vpop.permute.xlu0 %1963
    %1965 = vrot.lane.b32.xlu0 %v651, 112
    %v1966 = vpop.permute.xlu0 %1965
    %1967 = vrot.lane.b32.xlu0 %v656, 80
    %v1968 = vpop.permute.xlu0 %1967
    %1969 = vrot.lane.b32.xlu0 %v657, 80
    %v1970 = vpop.permute.xlu0 %1969
    %1971 = vrot.lane.b32.xlu0 %v658, 80
    %v1972 = vpop.permute.xlu0 %1971
    %1973 = vrot.lane.b32.xlu0 %v659, 80
    %v1974 = vpop.permute.xlu0 %1973
    %v1976 = vsel %vm680, %v1960, 0
    %v1979 = vsel %vm680, %v1962, 0
    %v1982 = vsel %vm680, %v1964, 0
    %v1985 = vsel %vm680, %v1966, 0
    %v1988 = vsel %vm680, %v1968, 0
    %v1991 = vsel %vm680, %v1970, 0
    %v1994 = vsel %vm680, %v1972, 0
    %v1997 = vsel %vm680, %v1974, 0
    %1999 = vmatprep.subr.bf16.mxu0 0
    %2000 = vmatpush1.bf16.xpose.msra.mxu0 0
    %2001 = vmatprep.subr.bf16.mxu0 0
    %2002 = vmatpush1.bf16.xpose.msra.mxu0 0
    %2003 = vmatprep.subr.bf16.mxu0 0
    %2004 = vmatpush1.bf16.xpose.msra.mxu0 0
    %2005 = vmatprep.subr.bf16.mxu0 0
    %2006 = vmatpush1.bf16.xpose.msra.mxu0 0
    %2007 = vmatprep.subr.bf16.mxu0 0
    %2008 = vmatpush1.bf16.xpose.msra.mxu0 %v1997
    %2009 = vmatprep.subr.bf16.mxu0 0
    %2010 = vmatpush1.bf16.xpose.msra.mxu0 %v1994
    %2011 = vmatprep.subr.bf16.mxu0 0
    %2012 = vmatpush1.bf16.xpose.msra.mxu0 %v1991
    %2013 = vmatprep.subr.bf16.mxu0 0
    %2014 = vmatpush1.bf16.xpose.msra.mxu0 %v1988
    %2015 = vmatprep.subr.bf16.mxu0 0
    %2016 = vmatpush2.bf16.xpose.msra.mxu0 0
    %2017 = vmatprep.subr.bf16.mxu0 0
    %2018 = vmatpush2.bf16.xpose.msra.mxu0 0
    %2019 = vmatprep.subr.bf16.mxu0 0
    %2020 = vmatpush2.bf16.xpose.msra.mxu0 0
    %2021 = vmatprep.subr.bf16.mxu0 0
    %2022 = vmatpush2.bf16.xpose.msra.mxu0 0
    %2023 = vmatprep.subr.bf16.mxu0 0
    %2024 = vmatpush2.bf16.xpose.msra.mxu0 0
    %2025 = vmatprep.subr.bf16.mxu0 0
    %2026 = vmatpush2.bf16.xpose.msra.mxu0 0
    %2027 = vmatprep.subr.bf16.mxu0 0
    %2028 = vmatpush2.bf16.xpose.msra.mxu0 0
    %2029 = vmatprep.subr.bf16.mxu0 0
    %2030 = vmatpush2.bf16.xpose.msra.mxu0 0
    %2031 = vmatprep.mubr.bf16.mxu0 0
    %2032 = vmatmul.mubr.bf16.gmra.mxu0 %v1976
    %v2033 = vpop.f32.mrf.mxu0
    %v2034 = vadd.f32 0.0, %v2033
    %v2035 = vpop.f32.mrf.mxu0
    %v2036 = vpop.f32.mrf.mxu0
    %v2037 = vadd.f32 0.0, %v2036
    %v2038 = vpop.f32.mrf.mxu0
    %2039 = vmatprep.mubr.bf16.mxu0 0
    %2040 = vmatmul.mubr.bf16.gmra.mxu0 %v1979
    %v2041 = vpop.f32.mrf.mxu0
    %v2042 = vadd.f32 0.0, %v2041
    %v2043 = vpop.f32.mrf.mxu0
    %v2044 = vpop.f32.mrf.mxu0
    %v2045 = vadd.f32 0.0, %v2044
    %v2046 = vpop.f32.mrf.mxu0
    %2047 = vmatprep.mubr.bf16.mxu0 0
    %2048 = vmatmul.mubr.bf16.gmra.mxu0 %v1982
    %v2049 = vpop.f32.mrf.mxu0
    %v2050 = vadd.f32 0.0, %v2049
    %v2051 = vpop.f32.mrf.mxu0
    %v2052 = vpop.f32.mrf.mxu0
    %v2053 = vadd.f32 0.0, %v2052
    %v2054 = vpop.f32.mrf.mxu0
    %2055 = vmatprep.mubr.bf16.mxu0 0
    %2056 = vmatmul.mubr.bf16.gmra.mxu0 %v1985
    %v2057 = vpop.f32.mrf.mxu0
    %v2058 = vadd.f32 0.0, %v2057
    %v2059 = vpop.f32.mrf.mxu0
    %v2060 = vpop.f32.mrf.mxu0
    %v2061 = vadd.f32 0.0, %v2060
    %v2062 = vpop.f32.mrf.mxu0
    %2063 = vdwg.mxu0
    %v2064 = vmul.f32 %v1929, 0.35355338
    %v2065 = vmul.f32 %v1932, 0.35355338
    %v2066 = vmul.f32 %v1937, 0.35355338
    %v2067 = vmul.f32 %v1940, 0.35355338
    %v2068 = vmul.f32 %v1945, 0.35355338
    %v2069 = vmul.f32 %v1948, 0.35355338
    %v2070 = vmul.f32 %v1953, 0.35355338
    %v2071 = vmul.f32 %v1956, 0.35355338
    %v2072 = vmul.f32 %v2034, 0.35355338
    %v2073 = vmul.f32 %v2037, 0.35355338
    %v2074 = vmul.f32 %v2042, 0.35355338
    %v2075 = vmul.f32 %v2045, 0.35355338
    %v2076 = vmul.f32 %v2050, 0.35355338
    %v2077 = vmul.f32 %v2053, 0.35355338
    %v2078 = vmul.f32 %v2058, 0.35355338
    %v2079 = vmul.f32 %v2061, 0.35355338
    %v2080 = vsel %vm887, %v2064, -inf
    %2081 = vmax.xlane.f32.xlu0 %v2080
    %v2082 = vpop.xlane.xlu0 %2081
    %v2083 = vsel %vm887, %v2065, -inf
    %2084 = vmax.xlane.f32.xlu0 %v2083
    %v2085 = vpop.xlane.xlu0 %2084
    %v2086 = vsel %vm887, %v2066, -inf
    %2087 = vmax.xlane.f32.xlu0 %v2086
    %v2088 = vpop.xlane.xlu0 %2087
    %v2089 = vsel %vm887, %v2067, -inf
    %2090 = vmax.xlane.f32.xlu0 %v2089
    %v2091 = vpop.xlane.xlu0 %2090
    %v2092 = vsel %vm887, %v2068, -inf
    %2093 = vmax.xlane.f32.xlu0 %v2092
    %v2094 = vpop.xlane.xlu0 %2093
    %v2095 = vsel %vm887, %v2069, -inf
    %2096 = vmax.xlane.f32.xlu0 %v2095
    %v2097 = vpop.xlane.xlu0 %2096
    %v2098 = vsel %vm887, %v2070, -inf
    %2099 = vmax.xlane.f32.xlu0 %v2098
    %v2100 = vpop.xlane.xlu0 %2099
    %v2101 = vsel %vm887, %v2071, -inf
    %2102 = vmax.xlane.f32.xlu0 %v2101
    %v2103 = vpop.xlane.xlu0 %2102
    %v2104 = vsel %vm887, %v2072, -inf
    %2105 = vmax.xlane.f32.xlu0 %v2104
    %v2106 = vpop.xlane.xlu0 %2105
    %v2107 = vsel %vm887, %v2073, -inf
    %2108 = vmax.xlane.f32.xlu0 %v2107
    %v2109 = vpop.xlane.xlu0 %2108
    %v2110 = vsel %vm887, %v2074, -inf
    %2111 = vmax.xlane.f32.xlu0 %v2110
    %v2112 = vpop.xlane.xlu0 %2111
    %v2113 = vsel %vm887, %v2075, -inf
    %2114 = vmax.xlane.f32.xlu0 %v2113
    %v2115 = vpop.xlane.xlu0 %2114
    %v2116 = vsel %vm887, %v2076, -inf
    %2117 = vmax.xlane.f32.xlu0 %v2116
    %v2118 = vpop.xlane.xlu0 %2117
    %v2119 = vsel %vm887, %v2077, -inf
    %2120 = vmax.xlane.f32.xlu0 %v2119
    %v2121 = vpop.xlane.xlu0 %2120
    %v2122 = vsel %vm887, %v2078, -inf
    %2123 = vmax.xlane.f32.xlu0 %v2122
    %v2124 = vpop.xlane.xlu0 %2123
    %v2125 = vsel %vm887, %v2079, -inf
    %2126 = vmax.xlane.f32.xlu0 %v2125
    %v2127 = vpop.xlane.xlu0 %2126
    %v2128 = vsub.f32 %v2064, %v2082
    %v2129 = vsub.f32 %v2065, %v2085
    %v2130 = vsub.f32 %v2066, %v2088
    %v2131 = vsub.f32 %v2067, %v2091
    %v2132 = vsub.f32 %v2068, %v2094
    %v2133 = vsub.f32 %v2069, %v2097
    %v2134 = vsub.f32 %v2070, %v2100
    %v2135 = vsub.f32 %v2071, %v2103
    %v2136 = vsub.f32 %v2072, %v2106
    %v2137 = vsub.f32 %v2073, %v2109
    %v2138 = vsub.f32 %v2074, %v2112
    %v2139 = vsub.f32 %v2075, %v2115
    %v2140 = vsub.f32 %v2076, %v2118
    %v2141 = vsub.f32 %v2077, %v2121
    %v2142 = vsub.f32 %v2078, %v2124
    %v2143 = vsub.f32 %v2079, %v2127
    %v2144 = vmul.f32 %v2128, 1.442695
    %v2145 = vpow.pop %v2144
    %v2146 = vmul.f32 %v2129, 1.442695
    %v2147 = vpow.pop %v2146
    %v2148 = vmul.f32 %v2130, 1.442695
    %v2149 = vpow.pop %v2148
    %v2150 = vmul.f32 %v2131, 1.442695
    %v2151 = vpow.pop %v2150
    %v2152 = vmul.f32 %v2132, 1.442695
    %v2153 = vpow.pop %v2152
    %v2154 = vmul.f32 %v2133, 1.442695
    %v2155 = vpow.pop %v2154
    %v2156 = vmul.f32 %v2134, 1.442695
    %v2157 = vpow.pop %v2156
    %v2158 = vmul.f32 %v2135, 1.442695
    %v2159 = vpow.pop %v2158
    %v2160 = vmul.f32 %v2136, 1.442695
    %v2161 = vpow.pop %v2160
    %v2162 = vmul.f32 %v2137, 1.442695
    %v2163 = vpow.pop %v2162
    %v2164 = vmul.f32 %v2138, 1.442695
    %v2165 = vpow.pop %v2164
    %v2166 = vmul.f32 %v2139, 1.442695
    %v2167 = vpow.pop %v2166
    %v2168 = vmul.f32 %v2140, 1.442695
    %v2169 = vpow.pop %v2168
    %v2170 = vmul.f32 %v2141, 1.442695
    %v2171 = vpow.pop %v2170
    %v2172 = vmul.f32 %v2142, 1.442695
    %v2173 = vpow.pop %v2172
    %v2174 = vmul.f32 %v2143, 1.442695
    %v2175 = vpow.pop %v2174
    %v2176 = vsel %vm887, %v2145, 0.0
    %2177 = vadd.xlane.f32.xlu0 %v2176
    %v2178 = vpop.xlane.xlu0 %2177
    %v2179 = vsel %vm887, %v2147, 0.0
    %2180 = vadd.xlane.f32.xlu0 %v2179
    %v2181 = vpop.xlane.xlu0 %2180
    %v2182 = vsel %vm887, %v2149, 0.0
    %2183 = vadd.xlane.f32.xlu0 %v2182
    %v2184 = vpop.xlane.xlu0 %2183
    %v2185 = vsel %vm887, %v2151, 0.0
    %2186 = vadd.xlane.f32.xlu0 %v2185
    %v2187 = vpop.xlane.xlu0 %2186
    %v2188 = vsel %vm887, %v2153, 0.0
    %2189 = vadd.xlane.f32.xlu0 %v2188
    %v2190 = vpop.xlane.xlu0 %2189
    %v2191 = vsel %vm887, %v2155, 0.0
    %2192 = vadd.xlane.f32.xlu0 %v2191
    %v2193 = vpop.xlane.xlu0 %2192
    %v2194 = vsel %vm887, %v2157, 0.0
    %2195 = vadd.xlane.f32.xlu0 %v2194
    %v2196 = vpop.xlane.xlu0 %2195
    %v2197 = vsel %vm887, %v2159, 0.0
    %2198 = vadd.xlane.f32.xlu0 %v2197
    %v2199 = vpop.xlane.xlu0 %2198
    %v2200 = vsel %vm887, %v2161, 0.0
    %2201 = vadd.xlane.f32.xlu0 %v2200
    %v2202 = vpop.xlane.xlu0 %2201
    %v2203 = vsel %vm887, %v2163, 0.0
    %2204 = vadd.xlane.f32.xlu0 %v2203
    %v2205 = vpop.xlane.xlu0 %2204
    %v2206 = vsel %vm887, %v2165, 0.0
    %2207 = vadd.xlane.f32.xlu0 %v2206
    %v2208 = vpop.xlane.xlu0 %2207
    %v2209 = vsel %vm887, %v2167, 0.0
    %2210 = vadd.xlane.f32.xlu0 %v2209
    %v2211 = vpop.xlane.xlu0 %2210
    %v2212 = vsel %vm887, %v2169, 0.0
    %2213 = vadd.xlane.f32.xlu0 %v2212
    %v2214 = vpop.xlane.xlu0 %2213
    %v2215 = vsel %vm887, %v2171, 0.0
    %2216 = vadd.xlane.f32.xlu0 %v2215
    %v2217 = vpop.xlane.xlu0 %2216
    %v2218 = vsel %vm887, %v2173, 0.0
    %2219 = vadd.xlane.f32.xlu0 %v2218
    %v2220 = vpop.xlane.xlu0 %2219
    %v2221 = vsel %vm887, %v2175, 0.0
    %2222 = vadd.xlane.f32.xlu0 %v2221
    %v2223 = vpop.xlane.xlu0 %2222
    %v2224 = vpack.c.bf16 %v2147, %v2145
    %v2225 = vpack.c.bf16 %v2151, %v2149
    %v2226 = vpack.c.bf16 %v2155, %v2153
    %v2227 = vpack.c.bf16 %v2159, %v2157
    %v2228 = vpack.c.bf16 %v2163, %v2161
    %v2229 = vpack.c.bf16 %v2167, %v2165
    %v2230 = vpack.c.bf16 %v2171, %v2169
    %v2231 = vpack.c.bf16 %v2175, %v2173
    %2232 = vrot.lane.b32.xlu0 %v660, 48
    %v2233 = vpop.permute.xlu0 %2232
    %2234 = vrot.lane.b32.xlu0 %v661, 48
    %v2235 = vpop.permute.xlu0 %2234
    %2236 = vrot.lane.b32.xlu0 %v662, 48
    %v2237 = vpop.permute.xlu0 %2236
    %2238 = vrot.lane.b32.xlu0 %v663, 48
    %v2239 = vpop.permute.xlu0 %2238
    %v2245 = vsel %vm887, %v2224, 0
    %v2248 = vsel %vm887, %v2225, 0
    %v2251 = vsel %vm887, %v2226, 0
    %v2254 = vsel %vm887, %v2227, 0
    %2256 = vmatprep.subr.bf16.mxu0 0
    %2257 = vmatpush1.bf16.msra.mxu0 0
    %2258 = vmatprep.subr.bf16.mxu0 0
    %2259 = vmatpush1.bf16.msra.mxu0 0
    %2260 = vmatprep.subr.bf16.mxu0 0
    %2261 = vmatpush1.bf16.msra.mxu0 0
    %2262 = vmatprep.subr.bf16.mxu0 0
    %2263 = vmatpush1.bf16.msra.mxu0 0
    %2264 = vmatprep.subr.bf16.mxu0 0
    %2265 = vmatpush1.bf16.msra.mxu0 %v2239
    %2266 = vmatprep.subr.bf16.mxu0 0
    %2267 = vmatpush1.bf16.msra.mxu0 %v2237
    %2268 = vmatprep.subr.bf16.mxu0 0
    %2269 = vmatpush1.bf16.msra.mxu0 %v2235
    %2270 = vmatprep.subr.bf16.mxu0 0
    %2271 = vmatpush1.bf16.msra.mxu0 %v2233
    %2272 = vmatprep.subr.bf16.mxu0 0
    %2273 = vmatpush2.bf16.msra.mxu0 0
    %2274 = vmatprep.subr.bf16.mxu0 0
    %2275 = vmatpush2.bf16.msra.mxu0 0
    %2276 = vmatprep.subr.bf16.mxu0 0
    %2277 = vmatpush2.bf16.msra.mxu0 0
    %2278 = vmatprep.subr.bf16.mxu0 0
    %2279 = vmatpush2.bf16.msra.mxu0 0
    %2280 = vmatprep.subr.bf16.mxu0 0
    %2281 = vmatpush2.bf16.msra.mxu0 0
    %2282 = vmatprep.subr.bf16.mxu0 0
    %2283 = vmatpush2.bf16.msra.mxu0 0
    %2284 = vmatprep.subr.bf16.mxu0 0
    %2285 = vmatpush2.bf16.msra.mxu0 0
    %2286 = vmatprep.subr.bf16.mxu0 0
    %2287 = vmatpush2.bf16.msra.mxu0 0
    %2288 = vmatprep.mubr.bf16.mxu0 0
    %2289 = vmatmul.mubr.bf16.gmra.mxu0 %v2245
    %v2290 = vpop.f32.mrf.mxu0
    %v2291 = vadd.f32 0.0, %v2290
    %v2292 = vpop.f32.mrf.mxu0
    %v2293 = vpop.f32.mrf.mxu0
    %v2294 = vadd.f32 0.0, %v2293
    %v2295 = vpop.f32.mrf.mxu0
    %2296 = vmatprep.mubr.bf16.mxu0 0
    %2297 = vmatmul.mubr.bf16.gmra.mxu0 %v2248
    %v2298 = vpop.f32.mrf.mxu0
    %v2299 = vadd.f32 0.0, %v2298
    %v2300 = vpop.f32.mrf.mxu0
    %v2301 = vpop.f32.mrf.mxu0
    %v2302 = vadd.f32 0.0, %v2301
    %v2303 = vpop.f32.mrf.mxu0
    %2304 = vmatprep.mubr.bf16.mxu0 0
    %2305 = vmatmul.mubr.bf16.gmra.mxu0 %v2251
    %v2306 = vpop.f32.mrf.mxu0
    %v2307 = vadd.f32 0.0, %v2306
    %v2308 = vpop.f32.mrf.mxu0
    %v2309 = vpop.f32.mrf.mxu0
    %v2310 = vadd.f32 0.0, %v2309
    %v2311 = vpop.f32.mrf.mxu0
    %2312 = vmatprep.mubr.bf16.mxu0 0
    %2313 = vmatmul.mubr.bf16.gmra.mxu0 %v2254
    %v2314 = vpop.f32.mrf.mxu0
    %v2315 = vadd.f32 0.0, %v2314
    %v2316 = vpop.f32.mrf.mxu0
    %v2317 = vpop.f32.mrf.mxu0
    %v2318 = vadd.f32 0.0, %v2317
    %v2319 = vpop.f32.mrf.mxu0
    %2320 = vdwg.mxu0
    %2321 = vrot.lane.b32.xlu0 %v664, 48
    %v2322 = vpop.permute.xlu0 %2321
    %2323 = vrot.lane.b32.xlu0 %v665, 48
    %v2324 = vpop.permute.xlu0 %2323
    %2325 = vrot.lane.b32.xlu0 %v666, 48
    %v2326 = vpop.permute.xlu0 %2325
    %2327 = vrot.lane.b32.xlu0 %v667, 48
    %v2328 = vpop.permute.xlu0 %2327
    %v2334 = vsel %vm887, %v2228, 0
    %v2337 = vsel %vm887, %v2229, 0
    %v2340 = vsel %vm887, %v2230, 0
    %v2343 = vsel %vm887, %v2231, 0
    %2345 = vmatprep.subr.bf16.mxu0 0
    %2346 = vmatpush1.bf16.msra.mxu0 0
    %2347 = vmatprep.subr.bf16.mxu0 0
    %2348 = vmatpush1.bf16.msra.mxu0 0
    %2349 = vmatprep.subr.bf16.mxu0 0
    %2350 = vmatpush1.bf16.msra.mxu0 0
    %2351 = vmatprep.subr.bf16.mxu0 0
    %2352 = vmatpush1.bf16.msra.mxu0 0
    %2353 = vmatprep.subr.bf16.mxu0 0
    %2354 = vmatpush1.bf16.msra.mxu0 %v2328
    %2355 = vmatprep.subr.bf16.mxu0 0
    %2356 = vmatpush1.bf16.msra.mxu0 %v2326
    %2357 = vmatprep.subr.bf16.mxu0 0
    %2358 = vmatpush1.bf16.msra.mxu0 %v2324
    %2359 = vmatprep.subr.bf16.mxu0 0
    %2360 = vmatpush1.bf16.msra.mxu0 %v2322
    %2361 = vmatprep.subr.bf16.mxu0 0
    %2362 = vmatpush2.bf16.msra.mxu0 0
    %2363 = vmatprep.subr.bf16.mxu0 0
    %2364 = vmatpush2.bf16.msra.mxu0 0
    %2365 = vmatprep.subr.bf16.mxu0 0
    %2366 = vmatpush2.bf16.msra.mxu0 0
    %2367 = vmatprep.subr.bf16.mxu0 0
    %2368 = vmatpush2.bf16.msra.mxu0 0
    %2369 = vmatprep.subr.bf16.mxu0 0
    %2370 = vmatpush2.bf16.msra.mxu0 0
    %2371 = vmatprep.subr.bf16.mxu0 0
    %2372 = vmatpush2.bf16.msra.mxu0 0
    %2373 = vmatprep.subr.bf16.mxu0 0
    %2374 = vmatpush2.bf16.msra.mxu0 0
    %2375 = vmatprep.subr.bf16.mxu0 0
    %2376 = vmatpush2.bf16.msra.mxu0 0
    %2377 = vmatprep.mubr.bf16.mxu0 0
    %2378 = vmatmul.mubr.bf16.gmra.mxu0 %v2334
    %v2379 = vpop.f32.mrf.mxu0
    %v2380 = vadd.f32 0.0, %v2379
    %v2381 = vpop.f32.mrf.mxu0
    %v2382 = vpop.f32.mrf.mxu0
    %v2383 = vadd.f32 0.0, %v2382
    %v2384 = vpop.f32.mrf.mxu0
    %2385 = vmatprep.mubr.bf16.mxu0 0
    %2386 = vmatmul.mubr.bf16.gmra.mxu0 %v2337
    %v2387 = vpop.f32.mrf.mxu0
    %v2388 = vadd.f32 0.0, %v2387
    %v2389 = vpop.f32.mrf.mxu0
    %v2390 = vpop.f32.mrf.mxu0
    %v2391 = vadd.f32 0.0, %v2390
    %v2392 = vpop.f32.mrf.mxu0
    %2393 = vmatprep.mubr.bf16.mxu0 0
    %2394 = vmatmul.mubr.bf16.gmra.mxu0 %v2340
    %v2395 = vpop.f32.mrf.mxu0
    %v2396 = vadd.f32 0.0, %v2395
    %v2397 = vpop.f32.mrf.mxu0
    %v2398 = vpop.f32.mrf.mxu0
    %v2399 = vadd.f32 0.0, %v2398
    %v2400 = vpop.f32.mrf.mxu0
    %2401 = vmatprep.mubr.bf16.mxu0 0
    %2402 = vmatmul.mubr.bf16.gmra.mxu0 %v2343
    %v2403 = vpop.f32.mrf.mxu0
    %v2404 = vadd.f32 0.0, %v2403
    %v2405 = vpop.f32.mrf.mxu0
    %v2406 = vpop.f32.mrf.mxu0
    %v2407 = vadd.f32 0.0, %v2406
    %v2408 = vpop.f32.mrf.mxu0
    %2409 = vdwg.mxu0
    %v2410 = vrcp.pop %v2178
    %v2411 = vrcp.pop %v2181
    %v2412 = vrcp.pop %v2184
    %v2413 = vrcp.pop %v2187
    %v2414 = vrcp.pop %v2190
    %v2415 = vrcp.pop %v2193
    %v2416 = vrcp.pop %v2196
    %v2417 = vrcp.pop %v2199
    %v2418 = vrcp.pop %v2202
    %v2419 = vrcp.pop %v2205
    %v2420 = vrcp.pop %v2208
    %v2421 = vrcp.pop %v2211
    %v2422 = vrcp.pop %v2214
    %v2423 = vrcp.pop %v2217
    %v2424 = vrcp.pop %v2220
    %v2425 = vrcp.pop %v2223
    %v2426 = vmul.f32 %v2291, %v2410
    %v2427 = vmul.f32 %v2294, %v2411
    %v2428 = vmul.f32 %v2299, %v2412
    %v2429 = vmul.f32 %v2302, %v2413
    %v2430 = vmul.f32 %v2307, %v2414
    %v2431 = vmul.f32 %v2310, %v2415
    %v2432 = vmul.f32 %v2315, %v2416
    %v2433 = vmul.f32 %v2318, %v2417
    %v2434 = vmul.f32 %v2380, %v2418
    %v2435 = vmul.f32 %v2383, %v2419
    %v2436 = vmul.f32 %v2388, %v2420
    %v2437 = vmul.f32 %v2391, %v2421
    %v2438 = vmul.f32 %v2396, %v2422
    %v2439 = vmul.f32 %v2399, %v2423
    %v2440 = vmul.f32 %v2404, %v2424
    %v2441 = vmul.f32 %v2407, %v2425
    %2442 = vrot.lane.b32.xlu0 %v644, 104
    %v2443 = vpop.permute.xlu0 %2442
    %2444 = vrot.lane.b32.xlu0 %v645, 104
    %v2445 = vpop.permute.xlu0 %2444
    %2446 = vrot.lane.b32.xlu0 %v646, 104
    %v2447 = vpop.permute.xlu0 %2446
    %2448 = vrot.lane.b32.xlu0 %v647, 104
    %v2449 = vpop.permute.xlu0 %2448
    %2450 = vrot.lane.b32.xlu0 %v652, 72
    %v2451 = vpop.permute.xlu0 %2450
    %2452 = vrot.lane.b32.xlu0 %v653, 72
    %v2453 = vpop.permute.xlu0 %2452
    %2454 = vrot.lane.b32.xlu0 %v654, 72
    %v2455 = vpop.permute.xlu0 %2454
    %2456 = vrot.lane.b32.xlu0 %v655, 72
    %v2457 = vpop.permute.xlu0 %2456
    %v2459 = vsel %vm680, %v2443, 0
    %v2462 = vsel %vm680, %v2445, 0
    %v2465 = vsel %vm680, %v2447, 0
    %v2468 = vsel %vm680, %v2449, 0
    %v2471 = vsel %vm680, %v2451, 0
    %v2474 = vsel %vm680, %v2453, 0
    %v2477 = vsel %vm680, %v2455, 0
    %v2480 = vsel %vm680, %v2457, 0
    %2482 = vmatprep.subr.bf16.mxu0 0
    %2483 = vmatpush1.bf16.xpose.msra.mxu0 0
    %2484 = vmatprep.subr.bf16.mxu0 0
    %2485 = vmatpush1.bf16.xpose.msra.mxu0 0
    %2486 = vmatprep.subr.bf16.mxu0 0
    %2487 = vmatpush1.bf16.xpose.msra.mxu0 0
    %2488 = vmatprep.subr.bf16.mxu0 0
    %2489 = vmatpush1.bf16.xpose.msra.mxu0 0
    %2490 = vmatprep.subr.bf16.mxu0 0
    %2491 = vmatpush1.bf16.xpose.msra.mxu0 %v2480
    %2492 = vmatprep.subr.bf16.mxu0 0
    %2493 = vmatpush1.bf16.xpose.msra.mxu0 %v2477
    %2494 = vmatprep.subr.bf16.mxu0 0
    %2495 = vmatpush1.bf16.xpose.msra.mxu0 %v2474
    %2496 = vmatprep.subr.bf16.mxu0 0
    %2497 = vmatpush1.bf16.xpose.msra.mxu0 %v2471
    %2498 = vmatprep.subr.bf16.mxu0 0
    %2499 = vmatpush2.bf16.xpose.msra.mxu0 0
    %2500 = vmatprep.subr.bf16.mxu0 0
    %2501 = vmatpush2.bf16.xpose.msra.mxu0 0
    %2502 = vmatprep.subr.bf16.mxu0 0
    %2503 = vmatpush2.bf16.xpose.msra.mxu0 0
    %2504 = vmatprep.subr.bf16.mxu0 0
    %2505 = vmatpush2.bf16.xpose.msra.mxu0 0
    %2506 = vmatprep.subr.bf16.mxu0 0
    %2507 = vmatpush2.bf16.xpose.msra.mxu0 0
    %2508 = vmatprep.subr.bf16.mxu0 0
    %2509 = vmatpush2.bf16.xpose.msra.mxu0 0
    %2510 = vmatprep.subr.bf16.mxu0 0
    %2511 = vmatpush2.bf16.xpose.msra.mxu0 0
    %2512 = vmatprep.subr.bf16.mxu0 0
    %2513 = vmatpush2.bf16.xpose.msra.mxu0 0
    %2514 = vmatprep.mubr.bf16.mxu0 0
    %2515 = vmatmul.mubr.bf16.gmra.mxu0 %v2459
    %v2516 = vpop.f32.mrf.mxu0
    %v2517 = vadd.f32 0.0, %v2516
    %v2518 = vpop.f32.mrf.mxu0
    %v2519 = vpop.f32.mrf.mxu0
    %v2520 = vadd.f32 0.0, %v2519
    %v2521 = vpop.f32.mrf.mxu0
    %2522 = vmatprep.mubr.bf16.mxu0 0
    %2523 = vmatmul.mubr.bf16.gmra.mxu0 %v2462
    %v2524 = vpop.f32.mrf.mxu0
    %v2525 = vadd.f32 0.0, %v2524
    %v2526 = vpop.f32.mrf.mxu0
    %v2527 = vpop.f32.mrf.mxu0
    %v2528 = vadd.f32 0.0, %v2527
    %v2529 = vpop.f32.mrf.mxu0
    %2530 = vmatprep.mubr.bf16.mxu0 0
    %2531 = vmatmul.mubr.bf16.gmra.mxu0 %v2465
    %v2532 = vpop.f32.mrf.mxu0
    %v2533 = vadd.f32 0.0, %v2532
    %v2534 = vpop.f32.mrf.mxu0
    %v2535 = vpop.f32.mrf.mxu0
    %v2536 = vadd.f32 0.0, %v2535
    %v2537 = vpop.f32.mrf.mxu0
    %2538 = vmatprep.mubr.bf16.mxu0 0
    %2539 = vmatmul.mubr.bf16.gmra.mxu0 %v2468
    %v2540 = vpop.f32.mrf.mxu0
    %v2541 = vadd.f32 0.0, %v2540
    %v2542 = vpop.f32.mrf.mxu0
    %v2543 = vpop.f32.mrf.mxu0
    %v2544 = vadd.f32 0.0, %v2543
    %v2545 = vpop.f32.mrf.mxu0
    %2546 = vdwg.mxu0
    %2547 = vrot.lane.b32.xlu0 %v648, 104
    %v2548 = vpop.permute.xlu0 %2547
    %2549 = vrot.lane.b32.xlu0 %v649, 104
    %v2550 = vpop.permute.xlu0 %2549
    %2551 = vrot.lane.b32.xlu0 %v650, 104
    %v2552 = vpop.permute.xlu0 %2551
    %2553 = vrot.lane.b32.xlu0 %v651, 104
    %v2554 = vpop.permute.xlu0 %2553
    %2555 = vrot.lane.b32.xlu0 %v656, 72
    %v2556 = vpop.permute.xlu0 %2555
    %2557 = vrot.lane.b32.xlu0 %v657, 72
    %v2558 = vpop.permute.xlu0 %2557
    %2559 = vrot.lane.b32.xlu0 %v658, 72
    %v2560 = vpop.permute.xlu0 %2559
    %2561 = vrot.lane.b32.xlu0 %v659, 72
    %v2562 = vpop.permute.xlu0 %2561
    %v2564 = vsel %vm680, %v2548, 0
    %v2567 = vsel %vm680, %v2550, 0
    %v2570 = vsel %vm680, %v2552, 0
    %v2573 = vsel %vm680, %v2554, 0
    %v2576 = vsel %vm680, %v2556, 0
    %v2579 = vsel %vm680, %v2558, 0
    %v2582 = vsel %vm680, %v2560, 0
    %v2585 = vsel %vm680, %v2562, 0
    %2587 = vmatprep.subr.bf16.mxu0 0
    %2588 = vmatpush1.bf16.xpose.msra.mxu0 0
    %2589 = vmatprep.subr.bf16.mxu0 0
    %2590 = vmatpush1.bf16.xpose.msra.mxu0 0
    %2591 = vmatprep.subr.bf16.mxu0 0
    %2592 = vmatpush1.bf16.xpose.msra.mxu0 0
    %2593 = vmatprep.subr.bf16.mxu0 0
    %2594 = vmatpush1.bf16.xpose.msra.mxu0 0
    %2595 = vmatprep.subr.bf16.mxu0 0
    %2596 = vmatpush1.bf16.xpose.msra.mxu0 %v2585
    %2597 = vmatprep.subr.bf16.mxu0 0
    %2598 = vmatpush1.bf16.xpose.msra.mxu0 %v2582
    %2599 = vmatprep.subr.bf16.mxu0 0
    %2600 = vmatpush1.bf16.xpose.msra.mxu0 %v2579
    %2601 = vmatprep.subr.bf16.mxu0 0
    %2602 = vmatpush1.bf16.xpose.msra.mxu0 %v2576
    %2603 = vmatprep.subr.bf16.mxu0 0
    %2604 = vmatpush2.bf16.xpose.msra.mxu0 0
    %2605 = vmatprep.subr.bf16.mxu0 0
    %2606 = vmatpush2.bf16.xpose.msra.mxu0 0
    %2607 = vmatprep.subr.bf16.mxu0 0
    %2608 = vmatpush2.bf16.xpose.msra.mxu0 0
    %2609 = vmatprep.subr.bf16.mxu0 0
    %2610 = vmatpush2.bf16.xpose.msra.mxu0 0
    %2611 = vmatprep.subr.bf16.mxu0 0
    %2612 = vmatpush2.bf16.xpose.msra.mxu0 0
    %2613 = vmatprep.subr.bf16.mxu0 0
    %2614 = vmatpush2.bf16.xpose.msra.mxu0 0
    %2615 = vmatprep.subr.bf16.mxu0 0
    %2616 = vmatpush2.bf16.xpose.msra.mxu0 0
    %2617 = vmatprep.subr.bf16.mxu0 0
    %2618 = vmatpush2.bf16.xpose.msra.mxu0 0
    %2619 = vmatprep.mubr.bf16.mxu0 0
    %2620 = vmatmul.mubr.bf16.gmra.mxu0 %v2564
    %v2621 = vpop.f32.mrf.mxu0
    %v2622 = vadd.f32 0.0, %v2621
    %v2623 = vpop.f32.mrf.mxu0
    %v2624 = vpop.f32.mrf.mxu0
    %v2625 = vadd.f32 0.0, %v2624
    %v2626 = vpop.f32.mrf.mxu0
    %2627 = vmatprep.mubr.bf16.mxu0 0
    %2628 = vmatmul.mubr.bf16.gmra.mxu0 %v2567
    %v2629 = vpop.f32.mrf.mxu0
    %v2630 = vadd.f32 0.0, %v2629
    %v2631 = vpop.f32.mrf.mxu0
    %v2632 = vpop.f32.mrf.mxu0
    %v2633 = vadd.f32 0.0, %v2632
    %v2634 = vpop.f32.mrf.mxu0
    %2635 = vmatprep.mubr.bf16.mxu0 0
    %2636 = vmatmul.mubr.bf16.gmra.mxu0 %v2570
    %v2637 = vpop.f32.mrf.mxu0
    %v2638 = vadd.f32 0.0, %v2637
    %v2639 = vpop.f32.mrf.mxu0
    %v2640 = vpop.f32.mrf.mxu0
    %v2641 = vadd.f32 0.0, %v2640
    %v2642 = vpop.f32.mrf.mxu0
    %2643 = vmatprep.mubr.bf16.mxu0 0
    %2644 = vmatmul.mubr.bf16.gmra.mxu0 %v2573
    %v2645 = vpop.f32.mrf.mxu0
    %v2646 = vadd.f32 0.0, %v2645
    %v2647 = vpop.f32.mrf.mxu0
    %v2648 = vpop.f32.mrf.mxu0
    %v2649 = vadd.f32 0.0, %v2648
    %v2650 = vpop.f32.mrf.mxu0
    %2651 = vdwg.mxu0
    %v2652 = vmul.f32 %v2517, 0.35355338
    %v2653 = vmul.f32 %v2520, 0.35355338
    %v2654 = vmul.f32 %v2525, 0.35355338
    %v2655 = vmul.f32 %v2528, 0.35355338
    %v2656 = vmul.f32 %v2533, 0.35355338
    %v2657 = vmul.f32 %v2536, 0.35355338
    %v2658 = vmul.f32 %v2541, 0.35355338
    %v2659 = vmul.f32 %v2544, 0.35355338
    %v2660 = vmul.f32 %v2622, 0.35355338
    %v2661 = vmul.f32 %v2625, 0.35355338
    %v2662 = vmul.f32 %v2630, 0.35355338
    %v2663 = vmul.f32 %v2633, 0.35355338
    %v2664 = vmul.f32 %v2638, 0.35355338
    %v2665 = vmul.f32 %v2641, 0.35355338
    %v2666 = vmul.f32 %v2646, 0.35355338
    %v2667 = vmul.f32 %v2649, 0.35355338
    %v2668 = vsel %vm887, %v2652, -inf
    %2669 = vmax.xlane.f32.xlu0 %v2668
    %v2670 = vpop.xlane.xlu0 %2669
    %v2671 = vsel %vm887, %v2653, -inf
    %2672 = vmax.xlane.f32.xlu0 %v2671
    %v2673 = vpop.xlane.xlu0 %2672
    %v2674 = vsel %vm887, %v2654, -inf
    %2675 = vmax.xlane.f32.xlu0 %v2674
    %v2676 = vpop.xlane.xlu0 %2675
    %v2677 = vsel %vm887, %v2655, -inf
    %2678 = vmax.xlane.f32.xlu0 %v2677
    %v2679 = vpop.xlane.xlu0 %2678
    %v2680 = vsel %vm887, %v2656, -inf
    %2681 = vmax.xlane.f32.xlu0 %v2680
    %v2682 = vpop.xlane.xlu0 %2681
    %v2683 = vsel %vm887, %v2657, -inf
    %2684 = vmax.xlane.f32.xlu0 %v2683
    %v2685 = vpop.xlane.xlu0 %2684
    %v2686 = vsel %vm887, %v2658, -inf
    %2687 = vmax.xlane.f32.xlu0 %v2686
    %v2688 = vpop.xlane.xlu0 %2687
    %v2689 = vsel %vm887, %v2659, -inf
    %2690 = vmax.xlane.f32.xlu0 %v2689
    %v2691 = vpop.xlane.xlu0 %2690
    %v2692 = vsel %vm887, %v2660, -inf
    %2693 = vmax.xlane.f32.xlu0 %v2692
    %v2694 = vpop.xlane.xlu0 %2693
    %v2695 = vsel %vm887, %v2661, -inf
    %2696 = vmax.xlane.f32.xlu0 %v2695
    %v2697 = vpop.xlane.xlu0 %2696
    %v2698 = vsel %vm887, %v2662, -inf
    %2699 = vmax.xlane.f32.xlu0 %v2698
    %v2700 = vpop.xlane.xlu0 %2699
    %v2701 = vsel %vm887, %v2663, -inf
    %2702 = vmax.xlane.f32.xlu0 %v2701
    %v2703 = vpop.xlane.xlu0 %2702
    %v2704 = vsel %vm887, %v2664, -inf
    %2705 = vmax.xlane.f32.xlu0 %v2704
    %v2706 = vpop.xlane.xlu0 %2705
    %v2707 = vsel %vm887, %v2665, -inf
    %2708 = vmax.xlane.f32.xlu0 %v2707
    %v2709 = vpop.xlane.xlu0 %2708
    %v2710 = vsel %vm887, %v2666, -inf
    %2711 = vmax.xlane.f32.xlu0 %v2710
    %v2712 = vpop.xlane.xlu0 %2711
    %v2713 = vsel %vm887, %v2667, -inf
    %2714 = vmax.xlane.f32.xlu0 %v2713
    %v2715 = vpop.xlane.xlu0 %2714
    %v2716 = vsub.f32 %v2652, %v2670
    %v2717 = vsub.f32 %v2653, %v2673
    %v2718 = vsub.f32 %v2654, %v2676
    %v2719 = vsub.f32 %v2655, %v2679
    %v2720 = vsub.f32 %v2656, %v2682
    %v2721 = vsub.f32 %v2657, %v2685
    %v2722 = vsub.f32 %v2658, %v2688
    %v2723 = vsub.f32 %v2659, %v2691
    %v2724 = vsub.f32 %v2660, %v2694
    %v2725 = vsub.f32 %v2661, %v2697
    %v2726 = vsub.f32 %v2662, %v2700
    %v2727 = vsub.f32 %v2663, %v2703
    %v2728 = vsub.f32 %v2664, %v2706
    %v2729 = vsub.f32 %v2665, %v2709
    %v2730 = vsub.f32 %v2666, %v2712
    %v2731 = vsub.f32 %v2667, %v2715
    %v2732 = vmul.f32 %v2716, 1.442695
    %v2733 = vpow.pop %v2732
    %v2734 = vmul.f32 %v2717, 1.442695
    %v2735 = vpow.pop %v2734
    %v2736 = vmul.f32 %v2718, 1.442695
    %v2737 = vpow.pop %v2736
    %v2738 = vmul.f32 %v2719, 1.442695
    %v2739 = vpow.pop %v2738
    %v2740 = vmul.f32 %v2720, 1.442695
    %v2741 = vpow.pop %v2740
    %v2742 = vmul.f32 %v2721, 1.442695
    %v2743 = vpow.pop %v2742
    %v2744 = vmul.f32 %v2722, 1.442695
    %v2745 = vpow.pop %v2744
    %v2746 = vmul.f32 %v2723, 1.442695
    %v2747 = vpow.pop %v2746
    %v2748 = vmul.f32 %v2724, 1.442695
    %v2749 = vpow.pop %v2748
    %v2750 = vmul.f32 %v2725, 1.442695
    %v2751 = vpow.pop %v2750
    %v2752 = vmul.f32 %v2726, 1.442695
    %v2753 = vpow.pop %v2752
    %v2754 = vmul.f32 %v2727, 1.442695
    %v2755 = vpow.pop %v2754
    %v2756 = vmul.f32 %v2728, 1.442695
    %v2757 = vpow.pop %v2756
    %v2758 = vmul.f32 %v2729, 1.442695
    %v2759 = vpow.pop %v2758
    %v2760 = vmul.f32 %v2730, 1.442695
    %v2761 = vpow.pop %v2760
    %v2762 = vmul.f32 %v2731, 1.442695
    %v2763 = vpow.pop %v2762
    %v2764 = vsel %vm887, %v2733, 0.0
    %2765 = vadd.xlane.f32.xlu0 %v2764
    %v2766 = vpop.xlane.xlu0 %2765
    %v2767 = vsel %vm887, %v2735, 0.0
    %2768 = vadd.xlane.f32.xlu0 %v2767
    %v2769 = vpop.xlane.xlu0 %2768
    %v2770 = vsel %vm887, %v2737, 0.0
    %2771 = vadd.xlane.f32.xlu0 %v2770
    %v2772 = vpop.xlane.xlu0 %2771
    %v2773 = vsel %vm887, %v2739, 0.0
    %2774 = vadd.xlane.f32.xlu0 %v2773
    %v2775 = vpop.xlane.xlu0 %2774
    %v2776 = vsel %vm887, %v2741, 0.0
    %2777 = vadd.xlane.f32.xlu0 %v2776
    %v2778 = vpop.xlane.xlu0 %2777
    %v2779 = vsel %vm887, %v2743, 0.0
    %2780 = vadd.xlane.f32.xlu0 %v2779
    %v2781 = vpop.xlane.xlu0 %2780
    %v2782 = vsel %vm887, %v2745, 0.0
    %2783 = vadd.xlane.f32.xlu0 %v2782
    %v2784 = vpop.xlane.xlu0 %2783
    %v2785 = vsel %vm887, %v2747, 0.0
    %2786 = vadd.xlane.f32.xlu0 %v2785
    %v2787 = vpop.xlane.xlu0 %2786
    %v2788 = vsel %vm887, %v2749, 0.0
    %2789 = vadd.xlane.f32.xlu0 %v2788
    %v2790 = vpop.xlane.xlu0 %2789
    %v2791 = vsel %vm887, %v2751, 0.0
    %2792 = vadd.xlane.f32.xlu0 %v2791
    %v2793 = vpop.xlane.xlu0 %2792
    %v2794 = vsel %vm887, %v2753, 0.0
    %2795 = vadd.xlane.f32.xlu0 %v2794
    %v2796 = vpop.xlane.xlu0 %2795
    %v2797 = vsel %vm887, %v2755, 0.0
    %2798 = vadd.xlane.f32.xlu0 %v2797
    %v2799 = vpop.xlane.xlu0 %2798
    %v2800 = vsel %vm887, %v2757, 0.0
    %2801 = vadd.xlane.f32.xlu0 %v2800
    %v2802 = vpop.xlane.xlu0 %2801
    %v2803 = vsel %vm887, %v2759, 0.0
    %2804 = vadd.xlane.f32.xlu0 %v2803
    %v2805 = vpop.xlane.xlu0 %2804
    %v2806 = vsel %vm887, %v2761, 0.0
    %2807 = vadd.xlane.f32.xlu0 %v2806
    %v2808 = vpop.xlane.xlu0 %2807
    %v2809 = vsel %vm887, %v2763, 0.0
    %2810 = vadd.xlane.f32.xlu0 %v2809
    %v2811 = vpop.xlane.xlu0 %2810
    %v2812 = vpack.c.bf16 %v2735, %v2733
    %v2813 = vpack.c.bf16 %v2739, %v2737
    %v2814 = vpack.c.bf16 %v2743, %v2741
    %v2815 = vpack.c.bf16 %v2747, %v2745
    %v2816 = vpack.c.bf16 %v2751, %v2749
    %v2817 = vpack.c.bf16 %v2755, %v2753
    %v2818 = vpack.c.bf16 %v2759, %v2757
    %v2819 = vpack.c.bf16 %v2763, %v2761
    %2820 = vrot.lane.b32.xlu0 %v660, 40
    %v2821 = vpop.permute.xlu0 %2820
    %2822 = vrot.lane.b32.xlu0 %v661, 40
    %v2823 = vpop.permute.xlu0 %2822
    %2824 = vrot.lane.b32.xlu0 %v662, 40
    %v2825 = vpop.permute.xlu0 %2824
    %2826 = vrot.lane.b32.xlu0 %v663, 40
    %v2827 = vpop.permute.xlu0 %2826
    %v2833 = vsel %vm887, %v2812, 0
    %v2836 = vsel %vm887, %v2813, 0
    %v2839 = vsel %vm887, %v2814, 0
    %v2842 = vsel %vm887, %v2815, 0
    %2844 = vmatprep.subr.bf16.mxu0 0
    %2845 = vmatpush1.bf16.msra.mxu0 0
    %2846 = vmatprep.subr.bf16.mxu0 0
    %2847 = vmatpush1.bf16.msra.mxu0 0
    %2848 = vmatprep.subr.bf16.mxu0 0
    %2849 = vmatpush1.bf16.msra.mxu0 0
    %2850 = vmatprep.subr.bf16.mxu0 0
    %2851 = vmatpush1.bf16.msra.mxu0 0
    %2852 = vmatprep.subr.bf16.mxu0 0
    %2853 = vmatpush1.bf16.msra.mxu0 %v2827
    %2854 = vmatprep.subr.bf16.mxu0 0
    %2855 = vmatpush1.bf16.msra.mxu0 %v2825
    %2856 = vmatprep.subr.bf16.mxu0 0
    %2857 = vmatpush1.bf16.msra.mxu0 %v2823
    %2858 = vmatprep.subr.bf16.mxu0 0
    %2859 = vmatpush1.bf16.msra.mxu0 %v2821
    %2860 = vmatprep.subr.bf16.mxu0 0
    %2861 = vmatpush2.bf16.msra.mxu0 0
    %2862 = vmatprep.subr.bf16.mxu0 0
    %2863 = vmatpush2.bf16.msra.mxu0 0
    %2864 = vmatprep.subr.bf16.mxu0 0
    %2865 = vmatpush2.bf16.msra.mxu0 0
    %2866 = vmatprep.subr.bf16.mxu0 0
    %2867 = vmatpush2.bf16.msra.mxu0 0
    %2868 = vmatprep.subr.bf16.mxu0 0
    %2869 = vmatpush2.bf16.msra.mxu0 0
    %2870 = vmatprep.subr.bf16.mxu0 0
    %2871 = vmatpush2.bf16.msra.mxu0 0
    %2872 = vmatprep.subr.bf16.mxu0 0
    %2873 = vmatpush2.bf16.msra.mxu0 0
    %2874 = vmatprep.subr.bf16.mxu0 0
    %2875 = vmatpush2.bf16.msra.mxu0 0
    %2876 = vmatprep.mubr.bf16.mxu0 0
    %2877 = vmatmul.mubr.bf16.gmra.mxu0 %v2833
    %v2878 = vpop.f32.mrf.mxu0
    %v2879 = vadd.f32 0.0, %v2878
    %v2880 = vpop.f32.mrf.mxu0
    %v2881 = vpop.f32.mrf.mxu0
    %v2882 = vadd.f32 0.0, %v2881
    %v2883 = vpop.f32.mrf.mxu0
    %2884 = vmatprep.mubr.bf16.mxu0 0
    %2885 = vmatmul.mubr.bf16.gmra.mxu0 %v2836
    %v2886 = vpop.f32.mrf.mxu0
    %v2887 = vadd.f32 0.0, %v2886
    %v2888 = vpop.f32.mrf.mxu0
    %v2889 = vpop.f32.mrf.mxu0
    %v2890 = vadd.f32 0.0, %v2889
    %v2891 = vpop.f32.mrf.mxu0
    %2892 = vmatprep.mubr.bf16.mxu0 0
    %2893 = vmatmul.mubr.bf16.gmra.mxu0 %v2839
    %v2894 = vpop.f32.mrf.mxu0
    %v2895 = vadd.f32 0.0, %v2894
    %v2896 = vpop.f32.mrf.mxu0
    %v2897 = vpop.f32.mrf.mxu0
    %v2898 = vadd.f32 0.0, %v2897
    %v2899 = vpop.f32.mrf.mxu0
    %2900 = vmatprep.mubr.bf16.mxu0 0
    %2901 = vmatmul.mubr.bf16.gmra.mxu0 %v2842
    %v2902 = vpop.f32.mrf.mxu0
    %v2903 = vadd.f32 0.0, %v2902
    %v2904 = vpop.f32.mrf.mxu0
    %v2905 = vpop.f32.mrf.mxu0
    %v2906 = vadd.f32 0.0, %v2905
    %v2907 = vpop.f32.mrf.mxu0
    %2908 = vdwg.mxu0
    %2909 = vrot.lane.b32.xlu0 %v664, 40
    %v2910 = vpop.permute.xlu0 %2909
    %2911 = vrot.lane.b32.xlu0 %v665, 40
    %v2912 = vpop.permute.xlu0 %2911
    %2913 = vrot.lane.b32.xlu0 %v666, 40
    %v2914 = vpop.permute.xlu0 %2913
    %2915 = vrot.lane.b32.xlu0 %v667, 40
    %v2916 = vpop.permute.xlu0 %2915
    %v2922 = vsel %vm887, %v2816, 0
    %v2925 = vsel %vm887, %v2817, 0
    %v2928 = vsel %vm887, %v2818, 0
    %v2931 = vsel %vm887, %v2819, 0
    %2933 = vmatprep.subr.bf16.mxu0 0
    %2934 = vmatpush1.bf16.msra.mxu0 0
    %2935 = vmatprep.subr.bf16.mxu0 0
    %2936 = vmatpush1.bf16.msra.mxu0 0
    %2937 = vmatprep.subr.bf16.mxu0 0
    %2938 = vmatpush1.bf16.msra.mxu0 0
    %2939 = vmatprep.subr.bf16.mxu0 0
    %2940 = vmatpush1.bf16.msra.mxu0 0
    %2941 = vmatprep.subr.bf16.mxu0 0
    %2942 = vmatpush1.bf16.msra.mxu0 %v2916
    %2943 = vmatprep.subr.bf16.mxu0 0
    %2944 = vmatpush1.bf16.msra.mxu0 %v2914
    %2945 = vmatprep.subr.bf16.mxu0 0
    %2946 = vmatpush1.bf16.msra.mxu0 %v2912
    %2947 = vmatprep.subr.bf16.mxu0 0
    %2948 = vmatpush1.bf16.msra.mxu0 %v2910
    %2949 = vmatprep.subr.bf16.mxu0 0
    %2950 = vmatpush2.bf16.msra.mxu0 0
    %2951 = vmatprep.subr.bf16.mxu0 0
    %2952 = vmatpush2.bf16.msra.mxu0 0
    %2953 = vmatprep.subr.bf16.mxu0 0
    %2954 = vmatpush2.bf16.msra.mxu0 0
    %2955 = vmatprep.subr.bf16.mxu0 0
    %2956 = vmatpush2.bf16.msra.mxu0 0
    %2957 = vmatprep.subr.bf16.mxu0 0
    %2958 = vmatpush2.bf16.msra.mxu0 0
    %2959 = vmatprep.subr.bf16.mxu0 0
    %2960 = vmatpush2.bf16.msra.mxu0 0
    %2961 = vmatprep.subr.bf16.mxu0 0
    %2962 = vmatpush2.bf16.msra.mxu0 0
    %2963 = vmatprep.subr.bf16.mxu0 0
    %2964 = vmatpush2.bf16.msra.mxu0 0
    %2965 = vmatprep.mubr.bf16.mxu0 0
    %2966 = vmatmul.mubr.bf16.gmra.mxu0 %v2922
    %v2967 = vpop.f32.mrf.mxu0
    %v2968 = vadd.f32 0.0, %v2967
    %v2969 = vpop.f32.mrf.mxu0
    %v2970 = vpop.f32.mrf.mxu0
    %v2971 = vadd.f32 0.0, %v2970
    %v2972 = vpop.f32.mrf.mxu0
    %2973 = vmatprep.mubr.bf16.mxu0 0
    %2974 = vmatmul.mubr.bf16.gmra.mxu0 %v2925
    %v2975 = vpop.f32.mrf.mxu0
    %v2976 = vadd.f32 0.0, %v2975
    %v2977 = vpop.f32.mrf.mxu0
    %v2978 = vpop.f32.mrf.mxu0
    %v2979 = vadd.f32 0.0, %v2978
    %v2980 = vpop.f32.mrf.mxu0
    %2981 = vmatprep.mubr.bf16.mxu0 0
    %2982 = vmatmul.mubr.bf16.gmra.mxu0 %v2928
    %v2983 = vpop.f32.mrf.mxu0
    %v2984 = vadd.f32 0.0, %v2983
    %v2985 = vpop.f32.mrf.mxu0
    %v2986 = vpop.f32.mrf.mxu0
    %v2987 = vadd.f32 0.0, %v2986
    %v2988 = vpop.f32.mrf.mxu0
    %2989 = vmatprep.mubr.bf16.mxu0 0
    %2990 = vmatmul.mubr.bf16.gmra.mxu0 %v2931
    %v2991 = vpop.f32.mrf.mxu0
    %v2992 = vadd.f32 0.0, %v2991
    %v2993 = vpop.f32.mrf.mxu0
    %v2994 = vpop.f32.mrf.mxu0
    %v2995 = vadd.f32 0.0, %v2994
    %v2996 = vpop.f32.mrf.mxu0
    %2997 = vdwg.mxu0
    %v2998 = vrcp.pop %v2766
    %v2999 = vrcp.pop %v2769
    %v3000 = vrcp.pop %v2772
    %v3001 = vrcp.pop %v2775
    %v3002 = vrcp.pop %v2778
    %v3003 = vrcp.pop %v2781
    %v3004 = vrcp.pop %v2784
    %v3005 = vrcp.pop %v2787
    %v3006 = vrcp.pop %v2790
    %v3007 = vrcp.pop %v2793
    %v3008 = vrcp.pop %v2796
    %v3009 = vrcp.pop %v2799
    %v3010 = vrcp.pop %v2802
    %v3011 = vrcp.pop %v2805
    %v3012 = vrcp.pop %v2808
    %v3013 = vrcp.pop %v2811
    %v3014 = vmul.f32 %v2879, %v2998
    %v3015 = vmul.f32 %v2882, %v2999
    %v3016 = vmul.f32 %v2887, %v3000
    %v3017 = vmul.f32 %v2890, %v3001
    %v3018 = vmul.f32 %v2895, %v3002
    %v3019 = vmul.f32 %v2898, %v3003
    %v3020 = vmul.f32 %v2903, %v3004
    %v3021 = vmul.f32 %v2906, %v3005
    %v3022 = vmul.f32 %v2968, %v3006
    %v3023 = vmul.f32 %v2971, %v3007
    %v3024 = vmul.f32 %v2976, %v3008
    %v3025 = vmul.f32 %v2979, %v3009
    %v3026 = vmul.f32 %v2984, %v3010
    %v3027 = vmul.f32 %v2987, %v3011
    %v3028 = vmul.f32 %v2992, %v3012
    %v3029 = vmul.f32 %v2995, %v3013
    %3046 = vrot.lane.b32.xlu0 %v1838, 8
    %v3047 = vpop.permute.xlu0 %3046
    %3048 = vrot.lane.b32.xlu0 %v1839, 8
    %v3049 = vpop.permute.xlu0 %3048
    %3050 = vrot.lane.b32.xlu0 %v1840, 8
    %v3051 = vpop.permute.xlu0 %3050
    %3052 = vrot.lane.b32.xlu0 %v1841, 8
    %v3053 = vpop.permute.xlu0 %3052
    %3054 = vrot.lane.b32.xlu0 %v1842, 8
    %v3055 = vpop.permute.xlu0 %3054
    %3056 = vrot.lane.b32.xlu0 %v1843, 8
    %v3057 = vpop.permute.xlu0 %3056
    %3058 = vrot.lane.b32.xlu0 %v1844, 8
    %v3059 = vpop.permute.xlu0 %3058
    %3060 = vrot.lane.b32.xlu0 %v1845, 8
    %v3061 = vpop.permute.xlu0 %3060
    %3062 = vrot.lane.b32.xlu0 %v1846, 8
    %v3063 = vpop.permute.xlu0 %3062
    %3064 = vrot.lane.b32.xlu0 %v1847, 8
    %v3065 = vpop.permute.xlu0 %3064
    %3066 = vrot.lane.b32.xlu0 %v1848, 8
    %v3067 = vpop.permute.xlu0 %3066
    %3068 = vrot.lane.b32.xlu0 %v1849, 8
    %v3069 = vpop.permute.xlu0 %3068
    %3070 = vrot.lane.b32.xlu0 %v1850, 8
    %v3071 = vpop.permute.xlu0 %3070
    %3072 = vrot.lane.b32.xlu0 %v1851, 8
    %v3073 = vpop.permute.xlu0 %3072
    %3074 = vrot.lane.b32.xlu0 %v1852, 8
    %v3075 = vpop.permute.xlu0 %3074
    %3076 = vrot.lane.b32.xlu0 %v1853, 8
    %v3077 = vpop.permute.xlu0 %3076
    %3110 = vrot.lane.b32.xlu0 %v2426, 16
    %v3111 = vpop.permute.xlu0 %3110
    %3112 = vrot.lane.b32.xlu0 %v2427, 16
    %v3113 = vpop.permute.xlu0 %3112
    %3114 = vrot.lane.b32.xlu0 %v2428, 16
    %v3115 = vpop.permute.xlu0 %3114
    %3116 = vrot.lane.b32.xlu0 %v2429, 16
    %v3117 = vpop.permute.xlu0 %3116
    %3118 = vrot.lane.b32.xlu0 %v2430, 16
    %v3119 = vpop.permute.xlu0 %3118
    %3120 = vrot.lane.b32.xlu0 %v2431, 16
    %v3121 = vpop.permute.xlu0 %3120
    %3122 = vrot.lane.b32.xlu0 %v2432, 16
    %v3123 = vpop.permute.xlu0 %3122
    %3124 = vrot.lane.b32.xlu0 %v2433, 16
    %v3125 = vpop.permute.xlu0 %3124
    %3126 = vrot.lane.b32.xlu0 %v2434, 16
    %v3127 = vpop.permute.xlu0 %3126
    %3128 = vrot.lane.b32.xlu0 %v2435, 16
    %v3129 = vpop.permute.xlu0 %3128
    %3130 = vrot.lane.b32.xlu0 %v2436, 16
    %v3131 = vpop.permute.xlu0 %3130
    %3132 = vrot.lane.b32.xlu0 %v2437, 16
    %v3133 = vpop.permute.xlu0 %3132
    %3134 = vrot.lane.b32.xlu0 %v2438, 16
    %v3135 = vpop.permute.xlu0 %3134
    %3136 = vrot.lane.b32.xlu0 %v2439, 16
    %v3137 = vpop.permute.xlu0 %3136
    %3138 = vrot.lane.b32.xlu0 %v2440, 16
    %v3139 = vpop.permute.xlu0 %3138
    %3140 = vrot.lane.b32.xlu0 %v2441, 16
    %v3141 = vpop.permute.xlu0 %3140
    %3174 = vrot.lane.b32.xlu0 %v3014, 24
    %v3175 = vpop.permute.xlu0 %3174
    %3176 = vrot.lane.b32.xlu0 %v3015, 24
    %v3177 = vpop.permute.xlu0 %3176
    %3178 = vrot.lane.b32.xlu0 %v3016, 24
    %v3179 = vpop.permute.xlu0 %3178
    %3180 = vrot.lane.b32.xlu0 %v3017, 24
    %v3181 = vpop.permute.xlu0 %3180
    %3182 = vrot.lane.b32.xlu0 %v3018, 24
    %v3183 = vpop.permute.xlu0 %3182
    %3184 = vrot.lane.b32.xlu0 %v3019, 24
    %v3185 = vpop.permute.xlu0 %3184
    %3186 = vrot.lane.b32.xlu0 %v3020, 24
    %v3187 = vpop.permute.xlu0 %3186
    %3188 = vrot.lane.b32.xlu0 %v3021, 24
    %v3189 = vpop.permute.xlu0 %3188
    %3190 = vrot.lane.b32.xlu0 %v3022, 24
    %v3191 = vpop.permute.xlu0 %3190
    %3192 = vrot.lane.b32.xlu0 %v3023, 24
    %v3193 = vpop.permute.xlu0 %3192
    %3194 = vrot.lane.b32.xlu0 %v3024, 24
    %v3195 = vpop.permute.xlu0 %3194
    %3196 = vrot.lane.b32.xlu0 %v3025, 24
    %v3197 = vpop.permute.xlu0 %3196
    %3198 = vrot.lane.b32.xlu0 %v3026, 24
    %v3199 = vpop.permute.xlu0 %3198
    %3200 = vrot.lane.b32.xlu0 %v3027, 24
    %v3201 = vpop.permute.xlu0 %3200
    %3202 = vrot.lane.b32.xlu0 %v3028, 24
    %v3203 = vpop.permute.xlu0 %3202
    %3204 = vrot.lane.b32.xlu0 %v3029, 24
    %v3205 = vpop.permute.xlu0 %3204
    %v3222 = vsel %vm680, %v1242, %v3047
    %v3223 = vsel %vm680, %v1243, %v3049
    %v3224 = vsel %vm680, %v1244, %v3051
    %v3225 = vsel %vm680, %v1245, %v3053
    %v3226 = vsel %vm680, %v1246, %v3055
    %v3227 = vsel %vm680, %v1247, %v3057
    %v3228 = vsel %vm680, %v1248, %v3059
    %v3229 = vsel %vm680, %v1249, %v3061
    %v3230 = vsel %vm680, %v1250, %v3063
    %v3231 = vsel %vm680, %v1251, %v3065
    %v3232 = vsel %vm680, %v1252, %v3067
    %v3233 = vsel %vm680, %v1253, %v3069
    %v3234 = vsel %vm680, %v1254, %v3071
    %v3235 = vsel %vm680, %v1255, %v3073
    %v3236 = vsel %vm680, %v1256, %v3075
    %v3237 = vsel %vm680, %v1257, %v3077
    %vm3238 = vcmask 130048
    %v3239 = vsel %vm3238, %v3222, %v3111
    %v3240 = vsel %vm3238, %v3223, %v3113
    %v3241 = vsel %vm3238, %v3224, %v3115
    %v3242 = vsel %vm3238, %v3225, %v3117
    %v3243 = vsel %vm3238, %v3226, %v3119
    %v3244 = vsel %vm3238, %v3227, %v3121
    %v3245 = vsel %vm3238, %v3228, %v3123
    %v3246 = vsel %vm3238, %v3229, %v3125
    %v3247 = vsel %vm3238, %v3230, %v3127
    %v3248 = vsel %vm3238, %v3231, %v3129
    %v3249 = vsel %vm3238, %v3232, %v3131
    %v3250 = vsel %vm3238, %v3233, %v3133
    %v3251 = vsel %vm3238, %v3234, %v3135
    %v3252 = vsel %vm3238, %v3235, %v3137
    %v3253 = vsel %vm3238, %v3236, %v3139
    %v3254 = vsel %vm3238, %v3237, %v3141
    %vm3255 = vcmask 195584
    %v3256 = vsel %vm3255, %v3239, %v3175
    %v3257 = vsel %vm3255, %v3240, %v3177
    %v3258 = vsel %vm3255, %v3241, %v3179
    %v3259 = vsel %vm3255, %v3242, %v3181
    %v3260 = vsel %vm3255, %v3243, %v3183
    %v3261 = vsel %vm3255, %v3244, %v3185
    %v3262 = vsel %vm3255, %v3245, %v3187
    %v3263 = vsel %vm3255, %v3246, %v3189
    %v3264 = vsel %vm3255, %v3247, %v3191
    %v3265 = vsel %vm3255, %v3248, %v3193
    %v3266 = vsel %vm3255, %v3249, %v3195
    %v3267 = vsel %vm3255, %v3250, %v3197
    %v3268 = vsel %vm3255, %v3251, %v3199
    %v3269 = vsel %vm3255, %v3252, %v3201
    %v3270 = vsel %vm3255, %v3253, %v3203
    %v3271 = vsel %vm3255, %v3254, %v3205
    %v3272 = vpack.c.bf16 %v3257, %v3256
    %v3273 = vpack.c.bf16 %v3259, %v3258
    %v3274 = vpack.c.bf16 %v3261, %v3260
    %v3275 = vpack.c.bf16 %v3263, %v3262
    %v3276 = vpack.c.bf16 %v3265, %v3264
    %v3277 = vpack.c.bf16 %v3267, %v3266
    %v3278 = vpack.c.bf16 %v3269, %v3268
    %v3279 = vpack.c.bf16 %v3271, %v3270
    %v3280 = vld [vmem:[#allocation8] sm:$0xf]
    %v3281 = vld [vmem:[#allocation8 + $0x4] sm:$0xf]
    %v3282 = vld [vmem:[#allocation8 + $0x8] sm:$0xf]
    %v3283 = vld [vmem:[#allocation8 + $0xc] sm:$0xf]
    %v3284 = vlaneseq
    %v3285 = vshrl.u32 %v3284, 7
    %v3286 = vsub.s32 5, %v3285
    %v3287 = vrot.slane %v107, %v3286
    %v3292 = vunpack.c.l.b16 %v3280
    %v3293 = vunpack.c.l.b16 %v3281
    %v3294 = vunpack.c.l.b16 %v3282
    %v3295 = vunpack.c.l.b16 %v3283
    %v3296 = vpack.c.b16 %v3293, %v3292
    %v3297 = vpack.c.b16 %v3295, %v3294
    %v3301 = vsel %vm181, %v3272, 0
    %v3304 = vsel %vm181, %v3273, 0
    %v3307 = vsel %vm181, %v3274, 0
    %v3310 = vsel %vm181, %v3275, 0
    %v3313 = vsel %vm181, %v3276, 0
    %v3316 = vsel %vm181, %v3277, 0
    %v3319 = vsel %vm181, %v3278, 0
    %v3322 = vsel %vm181, %v3279, 0
    %3324 = vmatprep.subr.bf16.mxu0 0
    %3325 = vmatpush1.bf16.msra.mxu0 0
    %3326 = vmatprep.subr.bf16.mxu0 0
    %3327 = vmatpush1.bf16.msra.mxu0 0
    %3328 = vmatprep.subr.bf16.mxu0 0
    %3329 = vmatpush1.bf16.msra.mxu0 0
    %3330 = vmatprep.subr.bf16.mxu0 0
    %3331 = vmatpush1.bf16.msra.mxu0 0
    %3332 = vmatprep.subr.bf16.mxu0 0
    %3333 = vmatpush1.bf16.msra.mxu0 0
    %3334 = vmatprep.subr.bf16.mxu0 0
    %3335 = vmatpush1.bf16.msra.mxu0 0
    %3336 = vmatprep.subr.bf16.mxu0 0
    %3337 = vmatpush1.bf16.msra.mxu0 %v3297
    %3338 = vmatprep.subr.bf16.mxu0 0
    %3339 = vmatpush1.bf16.msra.mxu0 %v3296
    %3340 = vmatprep.subr.bf16.mxu0 0
    %3341 = vmatpush2.bf16.msra.mxu0 0
    %3342 = vmatprep.subr.bf16.mxu0 0
    %3343 = vmatpush2.bf16.msra.mxu0 0
    %3344 = vmatprep.subr.bf16.mxu0 0
    %3345 = vmatpush2.bf16.msra.mxu0 0
    %3346 = vmatprep.subr.bf16.mxu0 0
    %3347 = vmatpush2.bf16.msra.mxu0 0
    %3348 = vmatprep.subr.bf16.mxu0 0
    %3349 = vmatpush2.bf16.msra.mxu0 0
    %3350 = vmatprep.subr.bf16.mxu0 0
    %3351 = vmatpush2.bf16.msra.mxu0 0
    %3352 = vmatprep.subr.bf16.mxu0 0
    %3353 = vmatpush2.bf16.msra.mxu0 0
    %3354 = vmatprep.subr.bf16.mxu0 0
    %3355 = vmatpush2.bf16.msra.mxu0 0
    %3356 = vmatprep.mubr.bf16.mxu0 0
    %3357 = vmatmul.mubr.bf16.gmra.mxu0 %v3301
    %v3358 = vpop.f32.mrf.mxu0
    %v3359 = vadd.f32 %v3287, %v3358
    %v3360 = vpop.f32.mrf.mxu0
    %v3361 = vpop.f32.mrf.mxu0
    %v3362 = vadd.f32 %v3287, %v3361
    %v3363 = vpop.f32.mrf.mxu0
    %3364 = vmatprep.mubr.bf16.mxu0 0
    %3365 = vmatmul.mubr.bf16.gmra.mxu0 %v3304
    %v3366 = vpop.f32.mrf.mxu0
    %v3367 = vadd.f32 %v3287, %v3366
    %v3368 = vpop.f32.mrf.mxu0
    %v3369 = vpop.f32.mrf.mxu0
    %v3370 = vadd.f32 %v3287, %v3369
    %v3371 = vpop.f32.mrf.mxu0
    %3372 = vmatprep.mubr.bf16.mxu0 0
    %3373 = vmatmul.mubr.bf16.gmra.mxu0 %v3307
    %v3374 = vpop.f32.mrf.mxu0
    %v3375 = vadd.f32 %v3287, %v3374
    %v3376 = vpop.f32.mrf.mxu0
    %v3377 = vpop.f32.mrf.mxu0
    %v3378 = vadd.f32 %v3287, %v3377
    %v3379 = vpop.f32.mrf.mxu0
    %3380 = vmatprep.mubr.bf16.mxu0 0
    %3381 = vmatmul.mubr.bf16.gmra.mxu0 %v3310
    %v3382 = vpop.f32.mrf.mxu0
    %v3383 = vadd.f32 %v3287, %v3382
    %v3384 = vpop.f32.mrf.mxu0
    %v3385 = vpop.f32.mrf.mxu0
    %v3386 = vadd.f32 %v3287, %v3385
    %v3387 = vpop.f32.mrf.mxu0
    %3388 = vmatprep.mubr.bf16.mxu0 0
    %3389 = vmatmul.mubr.bf16.gmra.mxu0 %v3313
    %v3390 = vpop.f32.mrf.mxu0
    %v3391 = vadd.f32 %v3287, %v3390
    %v3392 = vpop.f32.mrf.mxu0
    %v3393 = vpop.f32.mrf.mxu0
    %v3394 = vadd.f32 %v3287, %v3393
    %v3395 = vpop.f32.mrf.mxu0
    %3396 = vmatprep.mubr.bf16.mxu0 0
    %3397 = vmatmul.mubr.bf16.gmra.mxu0 %v3316
    %v3398 = vpop.f32.mrf.mxu0
    %v3399 = vadd.f32 %v3287, %v3398
    %v3400 = vpop.f32.mrf.mxu0
    %v3401 = vpop.f32.mrf.mxu0
    %v3402 = vadd.f32 %v3287, %v3401
    %v3403 = vpop.f32.mrf.mxu0
    %3404 = vmatprep.mubr.bf16.mxu0 0
    %3405 = vmatmul.mubr.bf16.gmra.mxu0 %v3319
    %v3406 = vpop.f32.mrf.mxu0
    %v3407 = vadd.f32 %v3287, %v3406
    %v3408 = vpop.f32.mrf.mxu0
    %v3409 = vpop.f32.mrf.mxu0
    %v3410 = vadd.f32 %v3287, %v3409
    %v3411 = vpop.f32.mrf.mxu0
    %3412 = vmatprep.mubr.bf16.mxu0 0
    %3413 = vmatmul.mubr.bf16.gmra.mxu0 %v3322
    %v3414 = vpop.f32.mrf.mxu0
    %v3415 = vadd.f32 %v3287, %v3414
    %v3416 = vpop.f32.mrf.mxu0
    %v3417 = vpop.f32.mrf.mxu0
    %v3418 = vadd.f32 %v3287, %v3417
    %v3419 = vpop.f32.mrf.mxu0
    %3420 = vdwg.mxu0
    %v3421 = vadd.f32 %v3359, %v133
    %v3422 = vadd.f32 %v3362, %v134
    %v3423 = vadd.f32 %v3367, %v135
    %v3424 = vadd.f32 %v3370, %v136
    %v3425 = vadd.f32 %v3375, %v137
    %v3426 = vadd.f32 %v3378, %v138
    %v3427 = vadd.f32 %v3383, %v139
    %v3428 = vadd.f32 %v3386, %v140
    %v3429 = vadd.f32 %v3391, %v165
    %v3430 = vadd.f32 %v3394, %v166
    %v3431 = vadd.f32 %v3399, %v167
    %v3432 = vadd.f32 %v3402, %v168
    %v3433 = vadd.f32 %v3407, %v169
    %v3434 = vadd.f32 %v3410, %v170
    %v3435 = vadd.f32 %v3415, %v171
    %v3436 = vadd.f32 %v3418, %v172
    %v3437 = vsel %vm181, %v3421, 0.0
    %3438 = vadd.xlane.f32.xlu0 %v3437
    %v3439 = vpop.xlane.xlu0 %3438
    %v3440 = vsel %vm181, %v3422, 0.0
    %3441 = vadd.xlane.f32.xlu0 %v3440
    %v3442 = vpop.xlane.xlu0 %3441
    %v3443 = vsel %vm181, %v3423, 0.0
    %3444 = vadd.xlane.f32.xlu0 %v3443
    %v3445 = vpop.xlane.xlu0 %3444
    %v3446 = vsel %vm181, %v3424, 0.0
    %3447 = vadd.xlane.f32.xlu0 %v3446
    %v3448 = vpop.xlane.xlu0 %3447
    %v3449 = vsel %vm181, %v3425, 0.0
    %3450 = vadd.xlane.f32.xlu0 %v3449
    %v3451 = vpop.xlane.xlu0 %3450
    %v3452 = vsel %vm181, %v3426, 0.0
    %3453 = vadd.xlane.f32.xlu0 %v3452
    %v3454 = vpop.xlane.xlu0 %3453
    %v3455 = vsel %vm181, %v3427, 0.0
    %3456 = vadd.xlane.f32.xlu0 %v3455
    %v3457 = vpop.xlane.xlu0 %3456
    %v3458 = vsel %vm181, %v3428, 0.0
    %3459 = vadd.xlane.f32.xlu0 %v3458
    %v3460 = vpop.xlane.xlu0 %3459
    %v3461 = vsel %vm181, %v3429, 0.0
    %3462 = vadd.xlane.f32.xlu0 %v3461
    %v3463 = vpop.xlane.xlu0 %3462
    %v3464 = vsel %vm181, %v3430, 0.0
    %3465 = vadd.xlane.f32.xlu0 %v3464
    %v3466 = vpop.xlane.xlu0 %3465
    %v3467 = vsel %vm181, %v3431, 0.0
    %3468 = vadd.xlane.f32.xlu0 %v3467
    %v3469 = vpop.xlane.xlu0 %3468
    %v3470 = vsel %vm181, %v3432, 0.0
    %3471 = vadd.xlane.f32.xlu0 %v3470
    %v3472 = vpop.xlane.xlu0 %3471
    %v3473 = vsel %vm181, %v3433, 0.0
    %3474 = vadd.xlane.f32.xlu0 %v3473
    %v3475 = vpop.xlane.xlu0 %3474
    %v3476 = vsel %vm181, %v3434, 0.0
    %3477 = vadd.xlane.f32.xlu0 %v3476
    %v3478 = vpop.xlane.xlu0 %3477
    %v3479 = vsel %vm181, %v3435, 0.0
    %3480 = vadd.xlane.f32.xlu0 %v3479
    %v3481 = vpop.xlane.xlu0 %3480
    %v3482 = vsel %vm181, %v3436, 0.0
    %3483 = vadd.xlane.f32.xlu0 %v3482
    %v3484 = vpop.xlane.xlu0 %3483
    %v3485 = vmul.f32 %v3439, %v230
    %v3486 = vmul.f32 %v3442, %v230
    %v3487 = vmul.f32 %v3445, %v230
    %v3488 = vmul.f32 %v3448, %v230
    %v3489 = vmul.f32 %v3451, %v230
    %v3490 = vmul.f32 %v3454, %v230
    %v3491 = vmul.f32 %v3457, %v230
    %v3492 = vmul.f32 %v3460, %v230
    %v3493 = vmul.f32 %v3463, %v230
    %v3494 = vmul.f32 %v3466, %v230
    %v3495 = vmul.f32 %v3469, %v230
    %v3496 = vmul.f32 %v3472, %v230
    %v3497 = vmul.f32 %v3475, %v230
    %v3498 = vmul.f32 %v3478, %v230
    %v3499 = vmul.f32 %v3481, %v230
    %v3500 = vmul.f32 %v3484, %v230
    %v3501 = vsub.f32 %v3421, %v3485
    %v3502 = vsub.f32 %v3422, %v3486
    %v3503 = vsub.f32 %v3423, %v3487
    %v3504 = vsub.f32 %v3424, %v3488
    %v3505 = vsub.f32 %v3425, %v3489
    %v3506 = vsub.f32 %v3426, %v3490
    %v3507 = vsub.f32 %v3427, %v3491
    %v3508 = vsub.f32 %v3428, %v3492
    %v3509 = vsub.f32 %v3429, %v3493
    %v3510 = vsub.f32 %v3430, %v3494
    %v3511 = vsub.f32 %v3431, %v3495
    %v3512 = vsub.f32 %v3432, %v3496
    %v3513 = vsub.f32 %v3433, %v3497
    %v3514 = vsub.f32 %v3434, %v3498
    %v3515 = vsub.f32 %v3435, %v3499
    %v3516 = vsub.f32 %v3436, %v3500
    %v3517 = vmul.f32 %v3501, %v3501
    %v3518 = vmul.f32 %v3502, %v3502
    %v3519 = vmul.f32 %v3503, %v3503
    %v3520 = vmul.f32 %v3504, %v3504
    %v3521 = vmul.f32 %v3505, %v3505
    %v3522 = vmul.f32 %v3506, %v3506
    %v3523 = vmul.f32 %v3507, %v3507
    %v3524 = vmul.f32 %v3508, %v3508
    %v3525 = vmul.f32 %v3509, %v3509
    %v3526 = vmul.f32 %v3510, %v3510
    %v3527 = vmul.f32 %v3511, %v3511
    %v3528 = vmul.f32 %v3512, %v3512
    %v3529 = vmul.f32 %v3513, %v3513
    %v3530 = vmul.f32 %v3514, %v3514
    %v3531 = vmul.f32 %v3515, %v3515
    %v3532 = vmul.f32 %v3516, %v3516
    %v3533 = vsel %vm181, %v3517, 0.0
    %3534 = vadd.xlane.f32.xlu0 %v3533
    %v3535 = vpop.xlane.xlu0 %3534
    %v3536 = vsel %vm181, %v3518, 0.0
    %3537 = vadd.xlane.f32.xlu0 %v3536
    %v3538 = vpop.xlane.xlu0 %3537
    %v3539 = vsel %vm181, %v3519, 0.0
    %3540 = vadd.xlane.f32.xlu0 %v3539
    %v3541 = vpop.xlane.xlu0 %3540
    %v3542 = vsel %vm181, %v3520, 0.0
    %3543 = vadd.xlane.f32.xlu0 %v3542
    %v3544 = vpop.xlane.xlu0 %3543
    %v3545 = vsel %vm181, %v3521, 0.0
    %3546 = vadd.xlane.f32.xlu0 %v3545
    %v3547 = vpop.xlane.xlu0 %3546
    %v3548 = vsel %vm181, %v3522, 0.0
    %3549 = vadd.xlane.f32.xlu0 %v3548
    %v3550 = vpop.xlane.xlu0 %3549
    %v3551 = vsel %vm181, %v3523, 0.0
    %3552 = vadd.xlane.f32.xlu0 %v3551
    %v3553 = vpop.xlane.xlu0 %3552
    %v3554 = vsel %vm181, %v3524, 0.0
    %3555 = vadd.xlane.f32.xlu0 %v3554
    %v3556 = vpop.xlane.xlu0 %3555
    %v3557 = vsel %vm181, %v3525, 0.0
    %3558 = vadd.xlane.f32.xlu0 %v3557
    %v3559 = vpop.xlane.xlu0 %3558
    %v3560 = vsel %vm181, %v3526, 0.0
    %3561 = vadd.xlane.f32.xlu0 %v3560
    %v3562 = vpop.xlane.xlu0 %3561
    %v3563 = vsel %vm181, %v3527, 0.0
    %3564 = vadd.xlane.f32.xlu0 %v3563
    %v3565 = vpop.xlane.xlu0 %3564
    %v3566 = vsel %vm181, %v3528, 0.0
    %3567 = vadd.xlane.f32.xlu0 %v3566
    %v3568 = vpop.xlane.xlu0 %3567
    %v3569 = vsel %vm181, %v3529, 0.0
    %3570 = vadd.xlane.f32.xlu0 %v3569
    %v3571 = vpop.xlane.xlu0 %3570
    %v3572 = vsel %vm181, %v3530, 0.0
    %3573 = vadd.xlane.f32.xlu0 %v3572
    %v3574 = vpop.xlane.xlu0 %3573
    %v3575 = vsel %vm181, %v3531, 0.0
    %3576 = vadd.xlane.f32.xlu0 %v3575
    %v3577 = vpop.xlane.xlu0 %3576
    %v3578 = vsel %vm181, %v3532, 0.0
    %3579 = vadd.xlane.f32.xlu0 %v3578
    %v3580 = vpop.xlane.xlu0 %3579
    %v3581 = vmul.f32 %v3535, %v230
    %v3582 = vmul.f32 %v3538, %v230
    %v3583 = vmul.f32 %v3541, %v230
    %v3584 = vmul.f32 %v3544, %v230
    %v3585 = vmul.f32 %v3547, %v230
    %v3586 = vmul.f32 %v3550, %v230
    %v3587 = vmul.f32 %v3553, %v230
    %v3588 = vmul.f32 %v3556, %v230
    %v3589 = vmul.f32 %v3559, %v230
    %v3590 = vmul.f32 %v3562, %v230
    %v3591 = vmul.f32 %v3565, %v230
    %v3592 = vmul.f32 %v3568, %v230
    %v3593 = vmul.f32 %v3571, %v230
    %v3594 = vmul.f32 %v3574, %v230
    %v3595 = vmul.f32 %v3577, %v230
    %v3596 = vmul.f32 %v3580, %v230
    %v3597 = vadd.f32 %v3581, 1e-05
    %v3598 = vadd.f32 %v3582, 1e-05
    %v3599 = vadd.f32 %v3583, 1e-05
    %v3600 = vadd.f32 %v3584, 1e-05
    %v3601 = vadd.f32 %v3585, 1e-05
    %v3602 = vadd.f32 %v3586, 1e-05
    %v3603 = vadd.f32 %v3587, 1e-05
    %v3604 = vadd.f32 %v3588, 1e-05
    %v3605 = vadd.f32 %v3589, 1e-05
    %v3606 = vadd.f32 %v3590, 1e-05
    %v3607 = vadd.f32 %v3591, 1e-05
    %v3608 = vadd.f32 %v3592, 1e-05
    %v3609 = vadd.f32 %v3593, 1e-05
    %v3610 = vadd.f32 %v3594, 1e-05
    %v3611 = vadd.f32 %v3595, 1e-05
    %v3612 = vadd.f32 %v3596, 1e-05
    %v3613 = vrsqrt.pop %v3597
    %v3614 = vrsqrt.pop %v3598
    %v3615 = vrsqrt.pop %v3599
    %v3616 = vrsqrt.pop %v3600
    %v3617 = vrsqrt.pop %v3601
    %v3618 = vrsqrt.pop %v3602
    %v3619 = vrsqrt.pop %v3603
    %v3620 = vrsqrt.pop %v3604
    %v3621 = vrsqrt.pop %v3605
    %v3622 = vrsqrt.pop %v3606
    %v3623 = vrsqrt.pop %v3607
    %v3624 = vrsqrt.pop %v3608
    %v3625 = vrsqrt.pop %v3609
    %v3626 = vrsqrt.pop %v3610
    %v3627 = vrsqrt.pop %v3611
    %v3628 = vrsqrt.pop %v3612
    %v3629 = vmul.f32 %v3501, %v3613
    %v3630 = vmul.f32 %v3502, %v3614
    %v3631 = vmul.f32 %v3503, %v3615
    %v3632 = vmul.f32 %v3504, %v3616
    %v3633 = vmul.f32 %v3505, %v3617
    %v3634 = vmul.f32 %v3506, %v3618
    %v3635 = vmul.f32 %v3507, %v3619
    %v3636 = vmul.f32 %v3508, %v3620
    %v3637 = vmul.f32 %v3509, %v3621
    %v3638 = vmul.f32 %v3510, %v3622
    %v3639 = vmul.f32 %v3511, %v3623
    %v3640 = vmul.f32 %v3512, %v3624
    %v3641 = vmul.f32 %v3513, %v3625
    %v3642 = vmul.f32 %v3514, %v3626
    %v3643 = vmul.f32 %v3515, %v3627
    %v3644 = vmul.f32 %v3516, %v3628
    %v3645 = vlaneseq
    %v3646 = vshrl.u32 %v3645, 7
    %v3647 = vsub.s32 6, %v3646
    %v3648 = vrot.slane %v107, %v3647
    %v3649 = vmul.f32 %v3629, %v3648
    %v3650 = vmul.f32 %v3630, %v3648
    %v3651 = vmul.f32 %v3631, %v3648
    %v3652 = vmul.f32 %v3632, %v3648
    %v3653 = vmul.f32 %v3633, %v3648
    %v3654 = vmul.f32 %v3634, %v3648
    %v3655 = vmul.f32 %v3635, %v3648
    %v3656 = vmul.f32 %v3636, %v3648
    %v3657 = vmul.f32 %v3637, %v3648
    %v3658 = vmul.f32 %v3638, %v3648
    %v3659 = vmul.f32 %v3639, %v3648
    %v3660 = vmul.f32 %v3640, %v3648
    %v3661 = vmul.f32 %v3641, %v3648
    %v3662 = vmul.f32 %v3642, %v3648
    %v3663 = vmul.f32 %v3643, %v3648
    %v3664 = vmul.f32 %v3644, %v3648
    %v3665 = vlaneseq
    %v3666 = vshrl.u32 %v3665, 7
    %v3667 = vsub.s32 7, %v3666
    %v3668 = vrot.slane %v107, %v3667
    %v3669 = vadd.f32 %v3649, %v3668
    %v3670 = vadd.f32 %v3650, %v3668
    %v3671 = vadd.f32 %v3651, %v3668
    %v3672 = vadd.f32 %v3652, %v3668
    %v3673 = vadd.f32 %v3653, %v3668
    %v3674 = vadd.f32 %v3654, %v3668
    %v3675 = vadd.f32 %v3655, %v3668
    %v3676 = vadd.f32 %v3656, %v3668
    %v3677 = vadd.f32 %v3657, %v3668
    %v3678 = vadd.f32 %v3658, %v3668
    %v3679 = vadd.f32 %v3659, %v3668
    %v3680 = vadd.f32 %v3660, %v3668
    %v3681 = vadd.f32 %v3661, %v3668
    %v3682 = vadd.f32 %v3662, %v3668
    %v3683 = vadd.f32 %v3663, %v3668
    %v3684 = vadd.f32 %v3664, %v3668
    %v3685 = vpack.c.bf16 %v3670, %v3669
    %v3686 = vpack.c.bf16 %v3672, %v3671
    %v3687 = vpack.c.bf16 %v3674, %v3673
    %v3688 = vpack.c.bf16 %v3676, %v3675
    %v3689 = vpack.c.bf16 %v3678, %v3677
    %v3690 = vpack.c.bf16 %v3680, %v3679
    %v3691 = vpack.c.bf16 %v3682, %v3681
    %v3692 = vpack.c.bf16 %v3684, %v3683
    %v3693 = vld [vmem:[#allocation10] sm:$0xf]
    %v3694 = vld [vmem:[#allocation10 + $0x4] sm:$0xf]
    %v3695 = vld [vmem:[#allocation10 + $0x8] sm:$0xf]
    %v3696 = vld [vmem:[#allocation10 + $0xc] sm:$0xf]
    %v3697 = vlaneseq
    %v3698 = vshrl.u32 %v3697, 7
    %v3699 = vsub.s32 0, %v3698
    %v3700 = vrot.slane %v108, %v3699
    %v3705 = vunpack.c.l.b16 %v3693
    %v3706 = vunpack.c.l.b16 %v3694
    %v3707 = vunpack.c.l.b16 %v3695
    %v3708 = vunpack.c.l.b16 %v3696
    %v3709 = vpack.c.b16 %v3706, %v3705
    %v3710 = vpack.c.b16 %v3708, %v3707
    %v3714 = vsel %vm181, %v3685, 0
    %v3717 = vsel %vm181, %v3686, 0
    %v3720 = vsel %vm181, %v3687, 0
    %v3723 = vsel %vm181, %v3688, 0
    %v3726 = vsel %vm181, %v3689, 0
    %v3729 = vsel %vm181, %v3690, 0
    %v3732 = vsel %vm181, %v3691, 0
    %v3735 = vsel %vm181, %v3692, 0
    %3737 = vmatprep.subr.bf16.mxu0 0
    %3738 = vmatpush1.bf16.msra.mxu0 0
    %3739 = vmatprep.subr.bf16.mxu0 0
    %3740 = vmatpush1.bf16.msra.mxu0 0
    %3741 = vmatprep.subr.bf16.mxu0 0
    %3742 = vmatpush1.bf16.msra.mxu0 0
    %3743 = vmatprep.subr.bf16.mxu0 0
    %3744 = vmatpush1.bf16.msra.mxu0 0
    %3745 = vmatprep.subr.bf16.mxu0 0
    %3746 = vmatpush1.bf16.msra.mxu0 0
    %3747 = vmatprep.subr.bf16.mxu0 0
    %3748 = vmatpush1.bf16.msra.mxu0 0
    %3749 = vmatprep.subr.bf16.mxu0 0
    %3750 = vmatpush1.bf16.msra.mxu0 %v3710
    %3751 = vmatprep.subr.bf16.mxu0 0
    %3752 = vmatpush1.bf16.msra.mxu0 %v3709
    %3753 = vmatprep.subr.bf16.mxu0 0
    %3754 = vmatpush2.bf16.msra.mxu0 0
    %3755 = vmatprep.subr.bf16.mxu0 0
    %3756 = vmatpush2.bf16.msra.mxu0 0
    %3757 = vmatprep.subr.bf16.mxu0 0
    %3758 = vmatpush2.bf16.msra.mxu0 0
    %3759 = vmatprep.subr.bf16.mxu0 0
    %3760 = vmatpush2.bf16.msra.mxu0 0
    %3761 = vmatprep.subr.bf16.mxu0 0
    %3762 = vmatpush2.bf16.msra.mxu0 0
    %3763 = vmatprep.subr.bf16.mxu0 0
    %3764 = vmatpush2.bf16.msra.mxu0 0
    %3765 = vmatprep.subr.bf16.mxu0 0
    %3766 = vmatpush2.bf16.msra.mxu0 0
    %3767 = vmatprep.subr.bf16.mxu0 0
    %3768 = vmatpush2.bf16.msra.mxu0 0
    %3769 = vmatprep.mubr.bf16.mxu0 0
    %3770 = vmatmul.mubr.bf16.gmra.mxu0 %v3714
    %v3771 = vpop.f32.mrf.mxu0
    %v3772 = vadd.f32 %v3700, %v3771
    %v3773 = vpop.f32.mrf.mxu0
    %v3774 = vpop.f32.mrf.mxu0
    %v3775 = vadd.f32 %v3700, %v3774
    %v3776 = vpop.f32.mrf.mxu0
    %3777 = vmatprep.mubr.bf16.mxu0 0
    %3778 = vmatmul.mubr.bf16.gmra.mxu0 %v3717
    %v3779 = vpop.f32.mrf.mxu0
    %v3780 = vadd.f32 %v3700, %v3779
    %v3781 = vpop.f32.mrf.mxu0
    %v3782 = vpop.f32.mrf.mxu0
    %v3783 = vadd.f32 %v3700, %v3782
    %v3784 = vpop.f32.mrf.mxu0
    %3785 = vmatprep.mubr.bf16.mxu0 0
    %3786 = vmatmul.mubr.bf16.gmra.mxu0 %v3720
    %v3787 = vpop.f32.mrf.mxu0
    %v3788 = vadd.f32 %v3700, %v3787
    %v3789 = vpop.f32.mrf.mxu0
    %v3790 = vpop.f32.mrf.mxu0
    %v3791 = vadd.f32 %v3700, %v3790
    %v3792 = vpop.f32.mrf.mxu0
    %3793 = vmatprep.mubr.bf16.mxu0 0
    %3794 = vmatmul.mubr.bf16.gmra.mxu0 %v3723
    %v3795 = vpop.f32.mrf.mxu0
    %v3796 = vadd.f32 %v3700, %v3795
    %v3797 = vpop.f32.mrf.mxu0
    %v3798 = vpop.f32.mrf.mxu0
    %v3799 = vadd.f32 %v3700, %v3798
    %v3800 = vpop.f32.mrf.mxu0
    %3801 = vmatprep.mubr.bf16.mxu0 0
    %3802 = vmatmul.mubr.bf16.gmra.mxu0 %v3726
    %v3803 = vpop.f32.mrf.mxu0
    %v3804 = vadd.f32 %v3700, %v3803
    %v3805 = vpop.f32.mrf.mxu0
    %v3806 = vpop.f32.mrf.mxu0
    %v3807 = vadd.f32 %v3700, %v3806
    %v3808 = vpop.f32.mrf.mxu0
    %3809 = vmatprep.mubr.bf16.mxu0 0
    %3810 = vmatmul.mubr.bf16.gmra.mxu0 %v3729
    %v3811 = vpop.f32.mrf.mxu0
    %v3812 = vadd.f32 %v3700, %v3811
    %v3813 = vpop.f32.mrf.mxu0
    %v3814 = vpop.f32.mrf.mxu0
    %v3815 = vadd.f32 %v3700, %v3814
    %v3816 = vpop.f32.mrf.mxu0
    %3817 = vmatprep.mubr.bf16.mxu0 0
    %3818 = vmatmul.mubr.bf16.gmra.mxu0 %v3732
    %v3819 = vpop.f32.mrf.mxu0
    %v3820 = vadd.f32 %v3700, %v3819
    %v3821 = vpop.f32.mrf.mxu0
    %v3822 = vpop.f32.mrf.mxu0
    %v3823 = vadd.f32 %v3700, %v3822
    %v3824 = vpop.f32.mrf.mxu0
    %3825 = vmatprep.mubr.bf16.mxu0 0
    %3826 = vmatmul.mubr.bf16.gmra.mxu0 %v3735
    %v3827 = vpop.f32.mrf.mxu0
    %v3828 = vadd.f32 %v3700, %v3827
    %v3829 = vpop.f32.mrf.mxu0
    %v3830 = vpop.f32.mrf.mxu0
    %v3831 = vadd.f32 %v3700, %v3830
    %v3832 = vpop.f32.mrf.mxu0
    %3833 = vdwg.mxu0
    %v3834 = vmul.f32 %v3772, 0.5
    %v3835 = vmul.f32 %v3775, 0.5
    %v3836 = vmul.f32 %v3780, 0.5
    %v3837 = vmul.f32 %v3783, 0.5
    %v3838 = vmul.f32 %v3788, 0.5
    %v3839 = vmul.f32 %v3791, 0.5
    %v3840 = vmul.f32 %v3796, 0.5
    %v3841 = vmul.f32 %v3799, 0.5
    %v3842 = vmul.f32 %v3804, 0.5
    %v3843 = vmul.f32 %v3807, 0.5
    %v3844 = vmul.f32 %v3812, 0.5
    %v3845 = vmul.f32 %v3815, 0.5
    %v3846 = vmul.f32 %v3820, 0.5
    %v3847 = vmul.f32 %v3823, 0.5
    %v3848 = vmul.f32 %v3828, 0.5
    %v3849 = vmul.f32 %v3831, 0.5
    %v3850 = vmul.f32 %v3772, 0.70710677
    %v3851 = vmul.f32 %v3775, 0.70710677
    %v3852 = vmul.f32 %v3780, 0.70710677
    %v3853 = vmul.f32 %v3783, 0.70710677
    %v3854 = vmul.f32 %v3788, 0.70710677
    %v3855 = vmul.f32 %v3791, 0.70710677
    %v3856 = vmul.f32 %v3796, 0.70710677
    %v3857 = vmul.f32 %v3799, 0.70710677
    %v3858 = vmul.f32 %v3804, 0.70710677
    %v3859 = vmul.f32 %v3807, 0.70710677
    %v3860 = vmul.f32 %v3812, 0.70710677
    %v3861 = vmul.f32 %v3815, 0.70710677
    %v3862 = vmul.f32 %v3820, 0.70710677
    %v3863 = vmul.f32 %v3823, 0.70710677
    %v3864 = vmul.f32 %v3828, 0.70710677
    %v3865 = vmul.f32 %v3831, 0.70710677
    %v3866 = verf.f32.pop %v3850
    %v3867 = verf.f32.pop %v3851
    %v3868 = verf.f32.pop %v3852
    %v3869 = verf.f32.pop %v3853
    %v3870 = verf.f32.pop %v3854
    %v3871 = verf.f32.pop %v3855
    %v3872 = verf.f32.pop %v3856
    %v3873 = verf.f32.pop %v3857
    %v3874 = verf.f32.pop %v3858
    %v3875 = verf.f32.pop %v3859
    %v3876 = verf.f32.pop %v3860
    %v3877 = verf.f32.pop %v3861
    %v3878 = verf.f32.pop %v3862
    %v3879 = verf.f32.pop %v3863
    %v3880 = verf.f32.pop %v3864
    %v3881 = verf.f32.pop %v3865
    %v3882 = vadd.f32 %v3866, 1.0
    %v3883 = vadd.f32 %v3867, 1.0
    %v3884 = vadd.f32 %v3868, 1.0
    %v3885 = vadd.f32 %v3869, 1.0
    %v3886 = vadd.f32 %v3870, 1.0
    %v3887 = vadd.f32 %v3871, 1.0
    %v3888 = vadd.f32 %v3872, 1.0
    %v3889 = vadd.f32 %v3873, 1.0
    %v3890 = vadd.f32 %v3874, 1.0
    %v3891 = vadd.f32 %v3875, 1.0
    %v3892 = vadd.f32 %v3876, 1.0
    %v3893 = vadd.f32 %v3877, 1.0
    %v3894 = vadd.f32 %v3878, 1.0
    %v3895 = vadd.f32 %v3879, 1.0
    %v3896 = vadd.f32 %v3880, 1.0
    %v3897 = vadd.f32 %v3881, 1.0
    %v3898 = vmul.f32 %v3834, %v3882
    %v3899 = vmul.f32 %v3835, %v3883
    %v3900 = vmul.f32 %v3836, %v3884
    %v3901 = vmul.f32 %v3837, %v3885
    %v3902 = vmul.f32 %v3838, %v3886
    %v3903 = vmul.f32 %v3839, %v3887
    %v3904 = vmul.f32 %v3840, %v3888
    %v3905 = vmul.f32 %v3841, %v3889
    %v3906 = vmul.f32 %v3842, %v3890
    %v3907 = vmul.f32 %v3843, %v3891
    %v3908 = vmul.f32 %v3844, %v3892
    %v3909 = vmul.f32 %v3845, %v3893
    %v3910 = vmul.f32 %v3846, %v3894
    %v3911 = vmul.f32 %v3847, %v3895
    %v3912 = vmul.f32 %v3848, %v3896
    %v3913 = vmul.f32 %v3849, %v3897
    %v3914 = vpack.c.bf16 %v3899, %v3898
    %v3915 = vpack.c.bf16 %v3901, %v3900
    %v3916 = vpack.c.bf16 %v3903, %v3902
    %v3917 = vpack.c.bf16 %v3905, %v3904
    %v3918 = vpack.c.bf16 %v3907, %v3906
    %v3919 = vpack.c.bf16 %v3909, %v3908
    %v3920 = vpack.c.bf16 %v3911, %v3910
    %v3921 = vpack.c.bf16 %v3913, %v3912
    %v3922 = vld [vmem:[#allocation11] sm:$0xf]
    %v3923 = vld [vmem:[#allocation11 + $0x4] sm:$0xf]
    %v3924 = vld [vmem:[#allocation11 + $0x8] sm:$0xf]
    %v3925 = vld [vmem:[#allocation11 + $0xc] sm:$0xf]
    %v3926 = vlaneseq
    %v3927 = vshrl.u32 %v3926, 7
    %v3928 = vsub.s32 1, %v3927
    %v3929 = vrot.slane %v108, %v3928
    %v3934 = vunpack.c.l.b16 %v3922
    %v3935 = vunpack.c.l.b16 %v3923
    %v3936 = vunpack.c.l.b16 %v3924
    %v3937 = vunpack.c.l.b16 %v3925
    %v3938 = vpack.c.b16 %v3935, %v3934
    %v3939 = vpack.c.b16 %v3937, %v3936
    %v3943 = vsel %vm181, %v3914, 0
    %v3946 = vsel %vm181, %v3915, 0
    %v3949 = vsel %vm181, %v3916, 0
    %v3952 = vsel %vm181, %v3917, 0
    %v3955 = vsel %vm181, %v3918, 0
    %v3958 = vsel %vm181, %v3919, 0
    %v3961 = vsel %vm181, %v3920, 0
    %v3964 = vsel %vm181, %v3921, 0
    %3966 = vmatprep.subr.bf16.mxu0 0
    %3967 = vmatpush1.bf16.msra.mxu0 0
    %3968 = vmatprep.subr.bf16.mxu0 0
    %3969 = vmatpush1.bf16.msra.mxu0 0
    %3970 = vmatprep.subr.bf16.mxu0 0
    %3971 = vmatpush1.bf16.msra.mxu0 0
    %3972 = vmatprep.subr.bf16.mxu0 0
    %3973 = vmatpush1.bf16.msra.mxu0 0
    %3974 = vmatprep.subr.bf16.mxu0 0
    %3975 = vmatpush1.bf16.msra.mxu0 0
    %3976 = vmatprep.subr.bf16.mxu0 0
    %3977 = vmatpush1.bf16.msra.mxu0 0
    %3978 = vmatprep.subr.bf16.mxu0 0
    %3979 = vmatpush1.bf16.msra.mxu0 %v3939
    %3980 = vmatprep.subr.bf16.mxu0 0
    %3981 = vmatpush1.bf16.msra.mxu0 %v3938
    %3982 = vmatprep.subr.bf16.mxu0 0
    %3983 = vmatpush2.bf16.msra.mxu0 0
    %3984 = vmatprep.subr.bf16.mxu0 0
    %3985 = vmatpush2.bf16.msra.mxu0 0
    %3986 = vmatprep.subr.bf16.mxu0 0
    %3987 = vmatpush2.bf16.msra.mxu0 0
    %3988 = vmatprep.subr.bf16.mxu0 0
    %3989 = vmatpush2.bf16.msra.mxu0 0
    %3990 = vmatprep.subr.bf16.mxu0 0
    %3991 = vmatpush2.bf16.msra.mxu0 0
    %3992 = vmatprep.subr.bf16.mxu0 0
    %3993 = vmatpush2.bf16.msra.mxu0 0
    %3994 = vmatprep.subr.bf16.mxu0 0
    %3995 = vmatpush2.bf16.msra.mxu0 0
    %3996 = vmatprep.subr.bf16.mxu0 0
    %3997 = vmatpush2.bf16.msra.mxu0 0
    %3998 = vmatprep.mubr.bf16.mxu0 0
    %3999 = vmatmul.mubr.bf16.gmra.mxu0 %v3943
    %v4000 = vpop.f32.mrf.mxu0
    %v4001 = vadd.f32 %v3929, %v4000
    %v4002 = vpop.f32.mrf.mxu0
    %v4003 = vpop.f32.mrf.mxu0
    %v4004 = vadd.f32 %v3929, %v4003
    %v4005 = vpop.f32.mrf.mxu0
    %4006 = vmatprep.mubr.bf16.mxu0 0
    %4007 = vmatmul.mubr.bf16.gmra.mxu0 %v3946
    %v4008 = vpop.f32.mrf.mxu0
    %v4009 = vadd.f32 %v3929, %v4008
    %v4010 = vpop.f32.mrf.mxu0
    %v4011 = vpop.f32.mrf.mxu0
    %v4012 = vadd.f32 %v3929, %v4011
    %v4013 = vpop.f32.mrf.mxu0
    %4014 = vmatprep.mubr.bf16.mxu0 0
    %4015 = vmatmul.mubr.bf16.gmra.mxu0 %v3949
    %v4016 = vpop.f32.mrf.mxu0
    %v4017 = vadd.f32 %v3929, %v4016
    %v4018 = vpop.f32.mrf.mxu0
    %v4019 = vpop.f32.mrf.mxu0
    %v4020 = vadd.f32 %v3929, %v4019
    %v4021 = vpop.f32.mrf.mxu0
    %4022 = vmatprep.mubr.bf16.mxu0 0
    %4023 = vmatmul.mubr.bf16.gmra.mxu0 %v3952
    %v4024 = vpop.f32.mrf.mxu0
    %v4025 = vadd.f32 %v3929, %v4024
    %v4026 = vpop.f32.mrf.mxu0
    %v4027 = vpop.f32.mrf.mxu0
    %v4028 = vadd.f32 %v3929, %v4027
    %v4029 = vpop.f32.mrf.mxu0
    %4030 = vmatprep.mubr.bf16.mxu0 0
    %4031 = vmatmul.mubr.bf16.gmra.mxu0 %v3955
    %v4032 = vpop.f32.mrf.mxu0
    %v4033 = vadd.f32 %v3929, %v4032
    %v4034 = vpop.f32.mrf.mxu0
    %v4035 = vpop.f32.mrf.mxu0
    %v4036 = vadd.f32 %v3929, %v4035
    %v4037 = vpop.f32.mrf.mxu0
    %4038 = vmatprep.mubr.bf16.mxu0 0
    %4039 = vmatmul.mubr.bf16.gmra.mxu0 %v3958
    %v4040 = vpop.f32.mrf.mxu0
    %v4041 = vadd.f32 %v3929, %v4040
    %v4042 = vpop.f32.mrf.mxu0
    %v4043 = vpop.f32.mrf.mxu0
    %v4044 = vadd.f32 %v3929, %v4043
    %v4045 = vpop.f32.mrf.mxu0
    %4046 = vmatprep.mubr.bf16.mxu0 0
    %4047 = vmatmul.mubr.bf16.gmra.mxu0 %v3961
    %v4048 = vpop.f32.mrf.mxu0
    %v4049 = vadd.f32 %v3929, %v4048
    %v4050 = vpop.f32.mrf.mxu0
    %v4051 = vpop.f32.mrf.mxu0
    %v4052 = vadd.f32 %v3929, %v4051
    %v4053 = vpop.f32.mrf.mxu0
    %4054 = vmatprep.mubr.bf16.mxu0 0
    %4055 = vmatmul.mubr.bf16.gmra.mxu0 %v3964
    %v4056 = vpop.f32.mrf.mxu0
    %v4057 = vadd.f32 %v3929, %v4056
    %v4058 = vpop.f32.mrf.mxu0
    %v4059 = vpop.f32.mrf.mxu0
    %v4060 = vadd.f32 %v3929, %v4059
    %v4061 = vpop.f32.mrf.mxu0
    %4062 = vdwg.mxu0
    %v4063 = vadd.f32 %v4001, %v3421
    %v4064 = vadd.f32 %v4004, %v3422
    %v4065 = vadd.f32 %v4009, %v3423
    %v4066 = vadd.f32 %v4012, %v3424
    %v4067 = vadd.f32 %v4017, %v3425
    %v4068 = vadd.f32 %v4020, %v3426
    %v4069 = vadd.f32 %v4025, %v3427
    %v4070 = vadd.f32 %v4028, %v3428
    %v4071 = vadd.f32 %v4033, %v3429
    %v4072 = vadd.f32 %v4036, %v3430
    %v4073 = vadd.f32 %v4041, %v3431
    %v4074 = vadd.f32 %v4044, %v3432
    %v4075 = vadd.f32 %v4049, %v3433
    %v4076 = vadd.f32 %v4052, %v3434
    %v4077 = vadd.f32 %v4057, %v3435
    %v4078 = vadd.f32 %v4060, %v3436
    %4079 = vxpose.xlu0.b32.start [1/16] %v4063, 128
    %4080 = vxpose.xlu0.b32.cont [2/16] %v4064, 128
    %4081 = vxpose.xlu0.b32.cont [3/16] %v4065, 128
    %4082 = vxpose.xlu0.b32.cont [4/16] %v4066, 128
    %4083 = vxpose.xlu0.b32.cont [5/16] %v4067, 128
    %4084 = vxpose.xlu0.b32.cont [6/16] %v4068, 128
    %4085 = vxpose.xlu0.b32.cont [7/16] %v4069, 128
    %4086 = vxpose.xlu0.b32.cont [8/16] %v4070, 128
    %4087 = vxpose.xlu0.b32.cont [9/16] 0.0, 128
    %4088 = vxpose.xlu0.b32.cont [10/16] 0.0, 128
    %4089 = vxpose.xlu0.b32.cont [11/16] 0.0, 128
    %4090 = vxpose.xlu0.b32.cont [12/16] 0.0, 128
    %4091 = vxpose.xlu0.b32.cont [13/16] 0.0, 128
    %4092 = vxpose.xlu0.b32.cont [14/16] 0.0, 128
    %4093 = vxpose.xlu0.b32.cont [15/16] 0.0, 128
    %4094 = vxpose.xlu0.b32.end [16/16] 0.0, 128
    %v4095 = vpop.trf.xlu0
    %v4096 = vpop.trf.xlu0
    %v4097 = vpop.trf.xlu0
    %v4098 = vpop.trf.xlu0
    %v4099 = vpop.trf.xlu0
    %v4100 = vpop.trf.xlu0
    %v4101 = vpop.trf.xlu0
    %v4102 = vpop.trf.xlu0
    %v4103 = vpop.trf.xlu0
    %v4104 = vpop.trf.xlu0
    %v4105 = vpop.trf.xlu0
    %v4106 = vpop.trf.xlu0
    %v4107 = vpop.trf.xlu0
    %v4108 = vpop.trf.xlu0
    %v4109 = vpop.trf.xlu0
    %v4110 = vpop.trf.xlu0
    %4111 = vxpose.xlu0.b32.start [1/16] %v4071, 128
    %4112 = vxpose.xlu0.b32.cont [2/16] %v4072, 128
    %4113 = vxpose.xlu0.b32.cont [3/16] %v4073, 128
    %4114 = vxpose.xlu0.b32.cont [4/16] %v4074, 128
    %4115 = vxpose.xlu0.b32.cont [5/16] %v4075, 128
    %4116 = vxpose.xlu0.b32.cont [6/16] %v4076, 128
    %4117 = vxpose.xlu0.b32.cont [7/16] %v4077, 128
    %4118 = vxpose.xlu0.b32.cont [8/16] %v4078, 128
    %4119 = vxpose.xlu0.b32.cont [9/16] 0.0, 128
    %4120 = vxpose.xlu0.b32.cont [10/16] 0.0, 128
    %4121 = vxpose.xlu0.b32.cont [11/16] 0.0, 128
    %4122 = vxpose.xlu0.b32.cont [12/16] 0.0, 128
    %4123 = vxpose.xlu0.b32.cont [13/16] 0.0, 128
    %4124 = vxpose.xlu0.b32.cont [14/16] 0.0, 128
    %4125 = vxpose.xlu0.b32.cont [15/16] 0.0, 128
    %4126 = vxpose.xlu0.b32.end [16/16] 0.0, 128
    %v4127 = vpop.trf.xlu0
    %v4128 = vpop.trf.xlu0
    %v4129 = vpop.trf.xlu0
    %v4130 = vpop.trf.xlu0
    %v4131 = vpop.trf.xlu0
    %v4132 = vpop.trf.xlu0
    %v4133 = vpop.trf.xlu0
    %v4134 = vpop.trf.xlu0
    %v4135 = vpop.trf.xlu0
    %v4136 = vpop.trf.xlu0
    %v4137 = vpop.trf.xlu0
    %v4138 = vpop.trf.xlu0
    %v4139 = vpop.trf.xlu0
    %v4140 = vpop.trf.xlu0
    %v4141 = vpop.trf.xlu0
    %v4142 = vpop.trf.xlu0
    %4143 = vst.msk [vmem:[#allocation13] sm:$0xff] %vm887, %v4095
    %4144 = vst.msk [vmem:[#allocation13 + $0x8] sm:$0xff] %vm887, %v4096
    %4145 = vst.msk [vmem:[#allocation13 + $0x10] sm:$0xff] %vm887, %v4097
    %4146 = vst.msk [vmem:[#allocation13 + $0x18] sm:$0xff] %vm887, %v4098
    %4147 = vst.msk [vmem:[#allocation13 + $0x20] sm:$0xff] %vm887, %v4127
    %4148 = vst.msk [vmem:[#allocation13 + $0x28] sm:$0xff] %vm887, %v4128
    %4149 = vst.msk [vmem:[#allocation13 + $0x30] sm:$0xff] %vm887, %v4129
    %4150 = vst.msk [vmem:[#allocation13 + $0x38] sm:$0xff] %vm887, %v4130
    // Predicated region
    $region50: #{tpu_custom_call.1} parent=1 // pred_check
      _
    $region51: #{tpu_custom_call.1} parent=1 // pred_check_branch
      %4152 = sbr.rel (0) target = $region53
    $region52: #{tpu_custom_call.1} parent=1 // pred_region
      %s4154 = ssub.s32 1024, 1024
      %4155 = vsyncadd [#allocation4], %s4154
      %s4156 = sshll.u32 [#allocation13], 4
      %s4157 = int_to_ptr.vmem [resolvable:$true] %s4156
      %4162 = dma.vmem_to_hbm [thread:$0]  %s4157, 1024, %s6, [#allocation4], 128, 128, 8
    $region53: #{tpu_custom_call.1} parent=1 // pred_fallthru
      _
    // Predicated region
    $region54: #{tpu_custom_call.1} parent=1 // pred_check
      _
    $region55: #{tpu_custom_call.1} parent=1 // pred_check_branch
      %4164 = sbr.rel (0) target = $region57
    $region56: #{tpu_custom_call.1} parent=1 // pred_region
      %4165 = dma.done [#allocation4], 1024
    $region57: #{tpu_custom_call.1} parent=1 // pred_fallthru
      _
    %4166 = vsyncpa [#allocation3], 1
    %4167 = vsyncpa [#allocation6], 1
    %4168 = vsyncpa [#allocation9], 1
    %4169 = vsyncpa [#allocation12], 1
    %4170 = vsyncpa [#allocation4], 1

</llo_original>
